<compile_context>
chip_gen: v5e
topology: v5e:2x2
jax: 0.10.0
libtpu: 0.0.40
codegen_flags: <defaults>
</compile_context>

<pallas_src>
import functools

import jax
import jax.numpy as jnp
import numpy as np
from jax import lax
from jax.experimental import pallas as pl
from jax.experimental.pallas import tpu as pltpu

EPS = 1e-5  # PyTorch LayerNorm default eps


# ---------------------------------------------------------------------------
# helpers
# ---------------------------------------------------------------------------
def _layernorm(x, w_row, b_row):
    # x: (M, C), w_row/b_row: (1, C). PyTorch LayerNorm (biased variance).
    mu = jnp.mean(x, axis=-1, keepdims=True)
    xc = x - mu
    var = jnp.mean(xc * xc, axis=-1, keepdims=True)
    return xc * lax.rsqrt(var + EPS) * w_row + b_row


def _gelu_exact(x):
    # nn.GELU default (approximate='none'): 0.5 * x * (1 + erf(x / sqrt(2)))
    return 0.5 * x * (1.0 + lax.erf(x * jnp.float32(0.7071067811865476)))


# ---------------------------------------------------------------------------
# Kernel: grid = (batch_blocks, depth); one step = one Block layer on Bb graphs.
# Activations live in an f32 VMEM scratch across the depth axis.
# ---------------------------------------------------------------------------
def stack_kernel(
    x_ref, bias_ref, mask_ref, wqkvg_ref, w1_ref, w2_ref, vec_ref,   # inputs
    o_ref,                                                           # output
    act_ref,                                                         # VMEM scratch
    *, num_heads, head_dim, hidden, matmul_dtype, approx_softmax,
):
    H, C = num_heads, head_dim
    inner = H * C
    f32 = jnp.float32
    layer = pl.program_id(1)

    def mm(a, b):          # row-major matmul, f32 accumulation on the MXU
        return jnp.dot(a.astype(matmul_dtype), b.astype(matmul_dtype),
                       preferred_element_type=f32)

    def mm_nt(a, b):       # a @ b.T (contract last dims) without materializing b.T
        return lax.dot_general(a.astype(matmul_dtype), b.astype(matmul_dtype),
                               (((1,), (1,)), ((), ())),
                               preferred_element_type=f32)

    # packed per-layer 1-D params: rows = n1w, n1b, n2w, n2b, bp, b2, b1, bg
    vec = vec_ref[...]
    n1w, n1b = vec[0:1, :C], vec[1:2, :C]
    n2w, n2b = vec[2:3, :C], vec[3:4, :C]
    bp, b2 = vec[4:5, :C], vec[5:6, :C]
    b1 = vec[6:7, :hidden]
    bg0, bg1 = vec[7:8, 0:1], vec[7:8, 1:2]

    # layer 0 of each batch block: load the fresh activations into the resident buffer
    @pl.when(layer == 0)
    def _():
        act_ref[...] = x_ref[...].astype(f32)

    x = act_ref[...]                                              # (M, C) f32

    # ---- norm1 (f32, VPU) ----
    xn = _layernorm(x, n1w, n1b)

    # ---- fused [Wq | Wk | Wv@Wp | Wgamma]: one (M, C) x (C, 3*inner+2) matmul ----
    qkvg = mm(xn, wqkvg_ref[...])                                 # (M, 3*inner+2) f32
    scale = jnp.float32(C ** -0.5)
    g0 = (qkvg[:, 3 * inner:3 * inner + 1] + bg0) * scale         # gates QK^T logits
    g1 = qkvg[:, 3 * inner + 1:3 * inner + 2] + bg1               # gates graph bias
    qkv = qkvg[:, :3 * inner].astype(matmul_dtype)                # single cast pass

    # gated graph bias + precomputed block-diagonal -1e30 mask (f32, reused by all heads)
    gbias = g1 * bias_ref[...].astype(f32) + mask_ref[...]        # (M, M)

    # ---- attention: per-head static loop, batches folded into the row dim ----
    attn_out = jnp.zeros(x.shape, f32)
    for h in range(H):
        q = qkv[:, h * C:(h + 1) * C]
        k = qkv[:, inner + h * C:inner + (h + 1) * C]
        v = qkv[:, 2 * inner + h * C:2 * inner + (h + 1) * C]     # carries the Wp fold

        s = mm_nt(q, k)                                           # (M, M) f32
        logits = g0 * s + gbias
        logits = logits - jnp.max(logits, axis=-1, keepdims=True)
        p = jnp.exp(logits)                                       # masked entries -> 0
        p = p * pl.reciprocal(jnp.sum(p, axis=-1, keepdims=True),
                              approx=approx_softmax)
        attn_out = attn_out + mm(p, v)                            # proj already folded

    x1 = attn_out + bp + xn        # residual adds the *normalized* x (module spec)

    # ---- norm2 + MLP ----
    x2 = _layernorm(x1, n2w, n2b)
    h1 = _gelu_exact(mm(x2, w1_ref[...]) + b1)
    y = mm(h1, w2_ref[...]) + b2 + x2

    act_ref[...] = y                                              # feed next layer

    @pl.when(layer == pl.num_programs(1) - 1)
    def _():
        o_ref[...] = y.astype(o_ref.dtype)


# ---------------------------------------------------------------------------
# Wrapper: all depth layers in one pallas_call
# ---------------------------------------------------------------------------
def graphdino_blocks_forward(x, adj, layer_params, num_heads, *, batch_block=8,
                             matmul_dtype=jnp.bfloat16, approx_softmax=True):
    B, N, C = x.shape
    H = num_heads
    inner = C * H
    D = len(layer_params)
    hidden = layer_params[0]["w1"].shape[1]
    f32 = jnp.float32

    Bb = max(1, min(batch_block, B))
    G = pl.cdiv(B, Bb)
    Bpad = G * Bb
    if Bpad != B:   # pad batch to a multiple of Bb; padded graphs are sliced off below
        x = jnp.concatenate([x, jnp.zeros((Bpad - B, N, C), x.dtype)], axis=0)
        adj = jnp.concatenate(
            [adj, jnp.zeros((Bpad - B, N - 1, N - 1), adj.dtype)], axis=0)
    M = Bb * N

    # graph bias = eye(N) with adj in [1:, 1:]; tiled along the key axis per batch block.
    # Shipped in bf16 (0/1 exactly representable); its BlockSpec ignores the depth axis,
    # so it is DMA'd once per batch block.
    bias = jnp.broadcast_to(jnp.eye(N, dtype=f32)[None], (Bpad, N, N))
    bias = bias.at[:, 1:, 1:].set(adj.astype(f32))
    bias_wide = jnp.broadcast_to(bias.reshape(G, Bb, N, 1, N), (G, Bb, N, Bb, N))
    bias_wide = bias_wide.reshape(G * M, M).astype(jnp.bfloat16)

    # block-diagonal additive mask (cross-batch -> -1e30), built once, constant index_map
    blk = jnp.arange(M, dtype=jnp.int32) // N
    neg_mask = jnp.where(blk[:, None] == blk[None, :],
                         jnp.float32(0.0), jnp.float32(-1e30))

    # per-layer fused weights: [Wq | Wk | concat_h(Wv_h @ Wp_h) | Wgamma]  (f32 fold)
    def fuse(p):
        wqkv = jnp.asarray(p["wqkv"], f32)
        wq, wk, wv = wqkv[:, :inner], wqkv[:, inner:2 * inner], wqkv[:, 2 * inner:]
        wp = jnp.asarray(p["wp"], f32)
        wvp = jnp.einsum("ahd,hdo->aho", wv.reshape(C, H, C),
                         wp.reshape(H, C, C)).reshape(C, inner)
        return jnp.concatenate([wq, wk, wvp, jnp.asarray(p["wg"], f32)], axis=1)

    wqkvg = jnp.stack([fuse(p) for p in layer_params]).astype(matmul_dtype)
    w1 = jnp.stack([jnp.asarray(p["w1"], f32) for p in layer_params]).astype(matmul_dtype)
    w2 = jnp.stack([jnp.asarray(p["w2"], f32) for p in layer_params]).astype(matmul_dtype)

    # pack the small 1-D params into one (8, L) f32 tile per layer
    L = 128 * pl.cdiv(max(C, hidden, 2), 128)

    def _row(v):
        v = jnp.asarray(v, f32).reshape(-1)
        return jnp.pad(v, (0, L - v.shape[0]))[None, :]

    def _pack(p):
        return jnp.concatenate(
            [_row(p[k]) for k in ("n1w", "n1b", "n2w", "n2b", "bp", "b2", "b1", "bg")],
            axis=0)

    vecs = jnp.stack([_pack(p) for p in layer_params])            # (D, 8, L)

    x2d = x.reshape(Bpad * N, C)

    kern = functools.partial(
        stack_kernel, num_heads=H, head_dim=C, hidden=hidden,
        matmul_dtype=matmul_dtype, approx_softmax=approx_softmax)

    out2d = pl.pallas_call(
        kern,
        out_shape=jax.ShapeDtypeStruct((Bpad * N, C), x.dtype),
        grid_spec=pltpu.PrefetchScalarGridSpec(
            num_scalar_prefetch=0,
            grid=(G, D),
            in_specs=[
                pl.BlockSpec((M, C), lambda g, d: (g, 0)),        # x rows (per g)
                pl.BlockSpec((M, M), lambda g, d: (g, 0)),        # graph bias (per g)
                pl.BlockSpec((M, M), lambda g, d: (0, 0)),        # -1e30 mask (const)
                pl.BlockSpec((None, C, 3 * inner + 2), lambda g, d: (d, 0, 0)),
                pl.BlockSpec((None, C, hidden), lambda g, d: (d, 0, 0)),
                pl.BlockSpec((None, hidden, C), lambda g, d: (d, 0, 0)),
                pl.BlockSpec((None, 8, L), lambda g, d: (d, 0, 0)),
            ],
            out_specs=pl.BlockSpec((M, C), lambda g, d: (g, 0)),
            scratch_shapes=[pltpu.VMEM((M, C), jnp.float32)],     # resident activations
        ),
        compiler_params=pltpu.CompilerParams(
            dimension_semantics=("parallel", "arbitrary")),
    )(x2d, bias_wide, neg_mask, wqkvg, w1, w2, vecs)

    return out2d.reshape(Bpad, N, C)[:B]


# ---------------------------------------------------------------------------
# Pure-JAX reference (mirrors the PyTorch modules, un-fused weights)
# ---------------------------------------------------------------------------
def ref_forward(x, adj, layer_params, num_heads, matmul_dtype=jnp.float32):
    B, N, C = x.shape
    H = num_heads
    inner = C * H
    md = matmul_dtype
    f32 = jnp.float32

    def dot(a, b):
        return jnp.dot(a.astype(md), b.astype(md), preferred_element_type=f32)

    def ln(z, w, b):
        mu = z.mean(-1, keepdims=True)
        var = ((z - mu) ** 2).mean(-1, keepdims=True)
        return (z - mu) / jnp.sqrt(var + EPS) * w + b

    bias = jnp.broadcast_to(jnp.eye(N, dtype=f32), (B, N, N))
    bias = bias.at[:, 1:, 1:].set(adj.astype(f32))[:, None]       # (B,1,N,N)

    hcur = x.astype(f32)
    for p in layer_params:
        xn = ln(hcur, p["n1w"], p["n1b"])
        qkv = dot(xn.reshape(B * N, C), p["wqkv"]).reshape(B, N, 3, H, C)
        qkv = qkv.transpose(2, 0, 3, 1, 4)                        # (3,B,H,N,C)
        q, k, v = qkv[0], qkv[1], qkv[2]
        attn = jnp.einsum("bhnc,bhmc->bhnm", q.astype(md), k.astype(md),
                          preferred_element_type=f32) * (C ** -0.5)
        gamma = (dot(xn.reshape(B * N, C), p["wg"]) + p["bg"]).reshape(B, N, 2)
        gamma = gamma[:, None]                                    # (B,1,N,2)
        attn = gamma[..., 0:1] * attn + gamma[..., 1:2] * bias
        attn = jax.nn.softmax(attn, axis=-1)
        out = jnp.einsum("bhnm,bhmc->bhnc", attn.astype(md), v.astype(md),
                         preferred_element_type=f32)
        out = out.transpose(0, 2, 1, 3).reshape(B * N, inner)
        out = dot(out, p["wp"]).reshape(B, N, C) + p["bp"]
        x1 = out + xn
        x2 = ln(x1, p["n2w"], p["n2b"])
        hh = jax.nn.gelu(dot(x2.reshape(B * N, C), p["w1"]).reshape(B, N, -1)
                         + p["b1"], approximate=False)
        mlp = dot(hh.reshape(B * N, -1), p["w2"]).reshape(B, N, C) + p["b2"]
        hcur = mlp + x2
    return hcur


# ---------------------------------------------------------------------------
# Deterministic synthetic parameters (shapes from Block.__init__, (in, out) layout)
# ---------------------------------------------------------------------------
def init_params(key, dim, num_heads, mlp_ratio=2.0):
    inner = dim * num_heads
    hidden = int(dim * mlp_ratio)
    ks = jax.random.split(key, 12)

    def lin(k, fan_in, shape):
        return jax.random.normal(k, shape, jnp.float32) / jnp.sqrt(fan_in)

    def small(k, shape):
        return 0.1 * jax.random.normal(k, shape, jnp.float32)

    return dict(
        n1w=1.0 + small(ks[5], (dim,)), n1b=small(ks[6], (dim,)),
        wqkv=lin(ks[0], dim, (dim, 3 * inner)),                   # qkv_bias=False
        wp=lin(ks[1], inner, (inner, dim)), bp=small(ks[7], (dim,)),
        wg=lin(ks[2], dim, (dim, 2)), bg=small(ks[8], (2,)),
        n2w=1.0 + small(ks[9], (dim,)), n2b=small(ks[10], (dim,)),
        w1=lin(ks[3], dim, (dim, hidden)), b1=small(ks[11], (hidden,)),
        w2=lin(ks[4], hidden, (hidden, dim)), b2=jnp.zeros((dim,), jnp.float32),
    )


if __name__ == "__main__":
    # GraphTransformer defaults: dim=32, heads=8, mlp_ratio=2.0, depth=5; small node count
    B, N, DIM, HEADS, DEPTH = 32, 8, 32, 8, 5

    key = jax.random.PRNGKey(0)
    kx, ka, kp = jax.random.split(key, 3)
    x = jax.random.normal(kx, (B, N, DIM), jnp.float32)
    adj = jax.random.bernoulli(ka, 0.3, (B, N - 1, N - 1)).astype(jnp.float32)
    params = [init_params(k, DIM, HEADS, mlp_ratio=2.0)
              for k in jax.random.split(kp, DEPTH)]

    ref_f32 = jax.block_until_ready(ref_forward(x, adj, params, HEADS, jnp.float32))

    # exact mode (f32 matmuls, exact reciprocal): tight check of the module semantics
    out_exact = jax.block_until_ready(
        graphdino_blocks_forward(x, adj, params, HEADS, batch_block=8,
                                 matmul_dtype=jnp.float32, approx_softmax=False))
    np.testing.assert_allclose(np.asarray(out_exact), np.asarray(ref_f32),
                               rtol=1e-3, atol=1e-3)

    # fast mode (bf16 MXU operands + approx softmax reciprocal): the perf path;
    # loose sanity check against the f32 reference across all 5 fused layers
    out_fast = jax.block_until_ready(
        graphdino_blocks_forward(x, adj, params, HEADS, batch_block=8,
                                 matmul_dtype=jnp.bfloat16, approx_softmax=True))
    np.testing.assert_allclose(np.asarray(out_fast), np.asarray(ref_f32),
                               rtol=1e-1, atol=1e-1)

    print("KERNEL_OK")
</pallas_src>

<mosaic_0001>
module attributes {stable_mosaic.version = 11 : i64} {
  func.func @stack_kernel(%arg0: i32, %arg1: i32, %arg2: memref<64x32xf32, #tpu.memory_space<vmem>>, %arg3: memref<64x64xbf16, #tpu.memory_space<vmem>>, %arg4: memref<64x64xf32, #tpu.memory_space<vmem>>, %arg5: memref<1x32x770xf32, #tpu.memory_space<vmem>>, %arg6: memref<1x32x64xf32, #tpu.memory_space<vmem>>, %arg7: memref<1x64x32xf32, #tpu.memory_space<vmem>>, %arg8: memref<1x8x128xf32, #tpu.memory_space<vmem>>, %arg9: memref<64x32xf32, #tpu.memory_space<vmem>>, %arg10: memref<64x32xf32, #tpu.memory_space<vmem>>) attributes {dimension_semantics = [#tpu.dimension_semantics<parallel>, #tpu.dimension_semantics<arbitrary>], iteration_bounds = array<i64: 4, 5>, scalar_prefetch = 0 : i64, scratch_operands = 1 : i64, tpu.core_type = #tpu.core_type<tc>, window_params = [{transform_indices = @transform_0, window_bounds = array<i64: 64, 32>}, {transform_indices = @transform_1, window_bounds = array<i64: 64, 64>}, {pipeline_mode = #tpu.pipeline_mode<synchronous>, transform_indices = @transform_2, window_bounds = array<i64: 64, 64>}, {transform_indices = @transform_3, window_bounds = array<i64: 1, 32, 770>}, {transform_indices = @transform_4, window_bounds = array<i64: 1, 32, 64>}, {transform_indices = @transform_5, window_bounds = array<i64: 1, 64, 32>}, {transform_indices = @transform_6, window_bounds = array<i64: 1, 8, 128>}, {transform_indices = @transform_7, window_bounds = array<i64: 64, 32>}]} {
    %c0 = arith.constant 0 : index
    %c0_0 = arith.constant 0 : index
    %c0_1 = arith.constant 0 : index
    %0 = vector.load %arg8[%c0, %c0_0, %c0_1] : memref<1x8x128xf32, #tpu.memory_space<vmem>>, vector<1x8x128xf32>
    %1 = vector.shape_cast %0 : vector<1x8x128xf32> to vector<8x128xf32>
    %2 = vector.extract_strided_slice %1 {offsets = [0, 0], sizes = [1, 32], strides = [1, 1]} : vector<8x128xf32> to vector<1x32xf32>
    %3 = vector.extract_strided_slice %1 {offsets = [1, 0], sizes = [1, 32], strides = [1, 1]} : vector<8x128xf32> to vector<1x32xf32>
    %4 = vector.extract_strided_slice %1 {offsets = [2, 0], sizes = [1, 32], strides = [1, 1]} : vector<8x128xf32> to vector<1x32xf32>
    %5 = vector.extract_strided_slice %1 {offsets = [3, 0], sizes = [1, 32], strides = [1, 1]} : vector<8x128xf32> to vector<1x32xf32>
    %6 = vector.extract_strided_slice %1 {offsets = [4, 0], sizes = [1, 32], strides = [1, 1]} : vector<8x128xf32> to vector<1x32xf32>
    %7 = vector.extract_strided_slice %1 {offsets = [5, 0], sizes = [1, 32], strides = [1, 1]} : vector<8x128xf32> to vector<1x32xf32>
    %8 = vector.extract_strided_slice %1 {offsets = [6, 0], sizes = [1, 64], strides = [1, 1]} : vector<8x128xf32> to vector<1x64xf32>
    %9 = vector.extract_strided_slice %1 {offsets = [7, 0], sizes = [1, 1], strides = [1, 1]} : vector<8x128xf32> to vector<1x1xf32>
    %10 = vector.extract_strided_slice %1 {offsets = [7, 1], sizes = [1, 1], strides = [1, 1]} : vector<8x128xf32> to vector<1x1xf32>
    %c0_i32 = arith.constant 0 : i32
    %11 = arith.cmpi eq, %arg1, %c0_i32 : i32
    %12 = arith.extui %11 : i1 to i32
    %c0_i32_2 = arith.constant 0 : i32
    %13 = arith.cmpi ne, %12, %c0_i32_2 : i32
    scf.if %13 {
      %c0_70 = arith.constant 0 : index
      %c0_71 = arith.constant 0 : index
      %252 = vector.load %arg2[%c0_70, %c0_71] : memref<64x32xf32, #tpu.memory_space<vmem>>, vector<64x32xf32>
      %c0_72 = arith.constant 0 : index
      %c0_73 = arith.constant 0 : index
      %253 = vector.load %arg10[%c0_72, %c0_73] : memref<64x32xf32, #tpu.memory_space<vmem>>, vector<64x32xf32>
      tpu.vector_store %arg10[%c0_72, %c0_73], %252 {strides = array<i32>} : memref<64x32xf32, #tpu.memory_space<vmem>>, vector<64x32xf32>,
    } else {
    }
    %c0_3 = arith.constant 0 : index
    %c0_4 = arith.constant 0 : index
    %14 = vector.load %arg10[%c0_3, %c0_4] : memref<64x32xf32, #tpu.memory_space<vmem>>, vector<64x32xf32>
    %cst = arith.constant dense<0.000000e+00> : vector<64xf32>
    %15 = vector.multi_reduction <add>, %14, %cst [1] : vector<64x32xf32> to vector<64xf32>
    %16 = vector.shape_cast %15 : vector<64xf32> to vector<64x1xf32>
    %cst_5 = arith.constant 3.200000e+01 : f32
    %17 = vector.broadcast %cst_5 : f32 to vector<64x1xf32>
    %18 = arith.divf %16, %17 : vector<64x1xf32>
    %19 = vector.broadcast %18 : vector<64x1xf32> to vector<64x32xf32>
    %20 = arith.subf %14, %19 : vector<64x32xf32>
    %21 = arith.mulf %20, %20 : vector<64x32xf32>
    %cst_6 = arith.constant dense<0.000000e+00> : vector<64xf32>
    %22 = vector.multi_reduction <add>, %21, %cst_6 [1] : vector<64x32xf32> to vector<64xf32>
    %23 = vector.shape_cast %22 : vector<64xf32> to vector<64x1xf32>
    %cst_7 = arith.constant 3.200000e+01 : f32
    %24 = vector.broadcast %cst_7 : f32 to vector<64x1xf32>
    %25 = arith.divf %23, %24 : vector<64x1xf32>
    %cst_8 = arith.constant 9.99999974E-6 : f32
    %26 = vector.broadcast %cst_8 : f32 to vector<64x1xf32>
    %27 = arith.addf %25, %26 : vector<64x1xf32>
    %28 = math.rsqrt %27 : vector<64x1xf32>
    %29 = vector.broadcast %28 : vector<64x1xf32> to vector<64x32xf32>
    %30 = arith.mulf %20, %29 : vector<64x32xf32>
    %31 = vector.broadcast %2 : vector<1x32xf32> to vector<64x32xf32>
    %32 = arith.mulf %30, %31 : vector<64x32xf32>
    %33 = vector.broadcast %3 : vector<1x32xf32> to vector<64x32xf32>
    %34 = arith.addf %32, %33 : vector<64x32xf32>
    %c0_9 = arith.constant 0 : index
    %c0_10 = arith.constant 0 : index
    %c0_11 = arith.constant 0 : index
    %35 = vector.load %arg5[%c0_9, %c0_10, %c0_11] : memref<1x32x770xf32, #tpu.memory_space<vmem>>, vector<1x32x770xf32>
    %36 = vector.shape_cast %35 : vector<1x32x770xf32> to vector<32x770xf32>
    %cst_12 = arith.constant dense<0.000000e+00> : vector<64x770xf32>
    %37 = tpu.matmul %34, %36, %cst_12 {dimension_numbers = #tpu.dot_dimension_numbers<[1], [0], [0], [1], [0, 0, 1, 1], [], []>} : vector<64x32xf32>, vector<32x770xf32>, vector<64x770xf32> -> vector<64x770xf32>
    %38 = vector.extract_strided_slice %37 {offsets = [0, 768], sizes = [64, 1], strides = [1, 1]} : vector<64x770xf32> to vector<64x1xf32>
    %39 = vector.broadcast %9 : vector<1x1xf32> to vector<64x1xf32>
    %40 = arith.addf %38, %39 : vector<64x1xf32>
    %cst_13 = arith.constant 0.176776692 : f32
    %41 = vector.broadcast %cst_13 : f32 to vector<64x1xf32>
    %42 = arith.mulf %40, %41 : vector<64x1xf32>
    %43 = vector.extract_strided_slice %37 {offsets = [0, 769], sizes = [64, 1], strides = [1, 1]} : vector<64x770xf32> to vector<64x1xf32>
    %44 = vector.broadcast %10 : vector<1x1xf32> to vector<64x1xf32>
    %45 = arith.addf %43, %44 : vector<64x1xf32>
    %46 = vector.extract_strided_slice %37 {offsets = [0, 0], sizes = [64, 768], strides = [1, 1]} : vector<64x770xf32> to vector<64x768xf32>
    %c0_14 = arith.constant 0 : index
    %c0_15 = arith.constant 0 : index
    %47 = vector.load %arg3[%c0_14, %c0_15] : memref<64x64xbf16, #tpu.memory_space<vmem>>, vector<64x64xbf16>
    %48 = arith.extf %47 : vector<64x64xbf16> to vector<64x64xf32>
    %49 = vector.broadcast %45 : vector<64x1xf32> to vector<64x64xf32>
    %50 = arith.mulf %49, %48 : vector<64x64xf32>
    %c0_16 = arith.constant 0 : index
    %c0_17 = arith.constant 0 : index
    %51 = vector.load %arg4[%c0_16, %c0_17] : memref<64x64xf32, #tpu.memory_space<vmem>>, vector<64x64xf32>
    %52 = arith.addf %50, %51 : vector<64x64xf32>
    %cst_18 = arith.constant 0.000000e+00 : f32
    %53 = vector.broadcast %cst_18 : f32 to vector<64x32xf32>
    %54 = vector.extract_strided_slice %46 {offsets = [0, 0], sizes = [64, 32], strides = [1, 1]} : vector<64x768xf32> to vector<64x32xf32>
    %55 = vector.extract_strided_slice %46 {offsets = [0, 256], sizes = [64, 32], strides = [1, 1]} : vector<64x768xf32> to vector<64x32xf32>
    %56 = vector.extract_strided_slice %46 {offsets = [0, 512], sizes = [64, 32], strides = [1, 1]} : vector<64x768xf32> to vector<64x32xf32>
    %cst_19 = arith.constant dense<0.000000e+00> : vector<64x64xf32>
    %57 = tpu.matmul %54, %55, %cst_19 {dimension_numbers = #tpu.dot_dimension_numbers<[1], [1], [0], [0], [0, 0, 1, 0], [], []>} : vector<64x32xf32>, vector<64x32xf32>, vector<64x64xf32> -> vector<64x64xf32>
    %58 = vector.broadcast %42 : vector<64x1xf32> to vector<64x64xf32>
    %59 = arith.mulf %58, %57 : vector<64x64xf32>
    %60 = arith.addf %59, %52 : vector<64x64xf32>
    %cst_20 = arith.constant dense<0xFF800000> : vector<64xf32>
    %61 = vector.multi_reduction <maximumf>, %60, %cst_20 [1] : vector<64x64xf32> to vector<64xf32>
    %62 = vector.shape_cast %61 : vector<64xf32> to vector<64x1xf32>
    %63 = vector.broadcast %62 : vector<64x1xf32> to vector<64x64xf32>
    %64 = arith.subf %60, %63 : vector<64x64xf32>
    %65 = math.exp %64 : vector<64x64xf32>
    %cst_21 = arith.constant dense<0.000000e+00> : vector<64xf32>
    %66 = vector.multi_reduction <add>, %65, %cst_21 [1] : vector<64x64xf32> to vector<64xf32>
    %67 = vector.shape_cast %66 : vector<64xf32> to vector<64x1xf32>
    %68 = tpu.reciprocal %67 : vector<64x1xf32> -> vector<64x1xf32>
    %69 = vector.broadcast %68 : vector<64x1xf32> to vector<64x64xf32>
    %70 = arith.mulf %65, %69 : vector<64x64xf32>
    %cst_22 = arith.constant dense<0.000000e+00> : vector<64x32xf32>
    %71 = tpu.matmul %70, %56, %cst_22 {dimension_numbers = #tpu.dot_dimension_numbers<[1], [0], [0], [1], [0, 0, 1, 1], [], []>} : vector<64x64xf32>, vector<64x32xf32>, vector<64x32xf32> -> vector<64x32xf32>
    %72 = arith.addf %53, %71 : vector<64x32xf32>
    %73 = vector.extract_strided_slice %46 {offsets = [0, 32], sizes = [64, 32], strides = [1, 1]} : vector<64x768xf32> to vector<64x32xf32>
    %74 = vector.extract_strided_slice %46 {offsets = [0, 288], sizes = [64, 32], strides = [1, 1]} : vector<64x768xf32> to vector<64x32xf32>
    %75 = vector.extract_strided_slice %46 {offsets = [0, 544], sizes = [64, 32], strides = [1, 1]} : vector<64x768xf32> to vector<64x32xf32>
    %cst_23 = arith.constant dense<0.000000e+00> : vector<64x64xf32>
    %76 = tpu.matmul %73, %74, %cst_23 {dimension_numbers = #tpu.dot_dimension_numbers<[1], [1], [0], [0], [0, 0, 1, 0], [], []>} : vector<64x32xf32>, vector<64x32xf32>, vector<64x64xf32> -> vector<64x64xf32>
    %77 = vector.broadcast %42 : vector<64x1xf32> to vector<64x64xf32>
    %78 = arith.mulf %77, %76 : vector<64x64xf32>
    %79 = arith.addf %78, %52 : vector<64x64xf32>
    %cst_24 = arith.constant dense<0xFF800000> : vector<64xf32>
    %80 = vector.multi_reduction <maximumf>, %79, %cst_24 [1] : vector<64x64xf32> to vector<64xf32>
    %81 = vector.shape_cast %80 : vector<64xf32> to vector<64x1xf32>
    %82 = vector.broadcast %81 : vector<64x1xf32> to vector<64x64xf32>
    %83 = arith.subf %79, %82 : vector<64x64xf32>
    %84 = math.exp %83 : vector<64x64xf32>
    %cst_25 = arith.constant dense<0.000000e+00> : vector<64xf32>
    %85 = vector.multi_reduction <add>, %84, %cst_25 [1] : vector<64x64xf32> to vector<64xf32>
    %86 = vector.shape_cast %85 : vector<64xf32> to vector<64x1xf32>
    %87 = tpu.reciprocal %86 : vector<64x1xf32> -> vector<64x1xf32>
    %88 = vector.broadcast %87 : vector<64x1xf32> to vector<64x64xf32>
    %89 = arith.mulf %84, %88 : vector<64x64xf32>
    %cst_26 = arith.constant dense<0.000000e+00> : vector<64x32xf32>
    %90 = tpu.matmul %89, %75, %cst_26 {dimension_numbers = #tpu.dot_dimension_numbers<[1], [0], [0], [1], [0, 0, 1, 1], [], []>} : vector<64x64xf32>, vector<64x32xf32>, vector<64x32xf32> -> vector<64x32xf32>
    %91 = arith.addf %72, %90 : vector<64x32xf32>
    %92 = vector.extract_strided_slice %46 {offsets = [0, 64], sizes = [64, 32], strides = [1, 1]} : vector<64x768xf32> to vector<64x32xf32>
    %93 = vector.extract_strided_slice %46 {offsets = [0, 320], sizes = [64, 32], strides = [1, 1]} : vector<64x768xf32> to vector<64x32xf32>
    %94 = vector.extract_strided_slice %46 {offsets = [0, 576], sizes = [64, 32], strides = [1, 1]} : vector<64x768xf32> to vector<64x32xf32>
    %cst_27 = arith.constant dense<0.000000e+00> : vector<64x64xf32>
    %95 = tpu.matmul %92, %93, %cst_27 {dimension_numbers = #tpu.dot_dimension_numbers<[1], [1], [0], [0], [0, 0, 1, 0], [], []>} : vector<64x32xf32>, vector<64x32xf32>, vector<64x64xf32> -> vector<64x64xf32>
    %96 = vector.broadcast %42 : vector<64x1xf32> to vector<64x64xf32>
    %97 = arith.mulf %96, %95 : vector<64x64xf32>
    %98 = arith.addf %97, %52 : vector<64x64xf32>
    %cst_28 = arith.constant dense<0xFF800000> : vector<64xf32>
    %99 = vector.multi_reduction <maximumf>, %98, %cst_28 [1] : vector<64x64xf32> to vector<64xf32>
    %100 = vector.shape_cast %99 : vector<64xf32> to vector<64x1xf32>
    %101 = vector.broadcast %100 : vector<64x1xf32> to vector<64x64xf32>
    %102 = arith.subf %98, %101 : vector<64x64xf32>
    %103 = math.exp %102 : vector<64x64xf32>
    %cst_29 = arith.constant dense<0.000000e+00> : vector<64xf32>
    %104 = vector.multi_reduction <add>, %103, %cst_29 [1] : vector<64x64xf32> to vector<64xf32>
    %105 = vector.shape_cast %104 : vector<64xf32> to vector<64x1xf32>
    %106 = tpu.reciprocal %105 : vector<64x1xf32> -> vector<64x1xf32>
    %107 = vector.broadcast %106 : vector<64x1xf32> to vector<64x64xf32>
    %108 = arith.mulf %103, %107 : vector<64x64xf32>
    %cst_30 = arith.constant dense<0.000000e+00> : vector<64x32xf32>
    %109 = tpu.matmul %108, %94, %cst_30 {dimension_numbers = #tpu.dot_dimension_numbers<[1], [0], [0], [1], [0, 0, 1, 1], [], []>} : vector<64x64xf32>, vector<64x32xf32>, vector<64x32xf32> -> vector<64x32xf32>
    %110 = arith.addf %91, %109 : vector<64x32xf32>
    %111 = vector.extract_strided_slice %46 {offsets = [0, 96], sizes = [64, 32], strides = [1, 1]} : vector<64x768xf32> to vector<64x32xf32>
    %112 = vector.extract_strided_slice %46 {offsets = [0, 352], sizes = [64, 32], strides = [1, 1]} : vector<64x768xf32> to vector<64x32xf32>
    %113 = vector.extract_strided_slice %46 {offsets = [0, 608], sizes = [64, 32], strides = [1, 1]} : vector<64x768xf32> to vector<64x32xf32>
    %cst_31 = arith.constant dense<0.000000e+00> : vector<64x64xf32>
    %114 = tpu.matmul %111, %112, %cst_31 {dimension_numbers = #tpu.dot_dimension_numbers<[1], [1], [0], [0], [0, 0, 1, 0], [], []>} : vector<64x32xf32>, vector<64x32xf32>, vector<64x64xf32> -> vector<64x64xf32>
    %115 = vector.broadcast %42 : vector<64x1xf32> to vector<64x64xf32>
    %116 = arith.mulf %115, %114 : vector<64x64xf32>
    %117 = arith.addf %116, %52 : vector<64x64xf32>
    %cst_32 = arith.constant dense<0xFF800000> : vector<64xf32>
    %118 = vector.multi_reduction <maximumf>, %117, %cst_32 [1] : vector<64x64xf32> to vector<64xf32>
    %119 = vector.shape_cast %118 : vector<64xf32> to vector<64x1xf32>
    %120 = vector.broadcast %119 : vector<64x1xf32> to vector<64x64xf32>
    %121 = arith.subf %117, %120 : vector<64x64xf32>
    %122 = math.exp %121 : vector<64x64xf32>
    %cst_33 = arith.constant dense<0.000000e+00> : vector<64xf32>
    %123 = vector.multi_reduction <add>, %122, %cst_33 [1] : vector<64x64xf32> to vector<64xf32>
    %124 = vector.shape_cast %123 : vector<64xf32> to vector<64x1xf32>
    %125 = tpu.reciprocal %124 : vector<64x1xf32> -> vector<64x1xf32>
    %126 = vector.broadcast %125 : vector<64x1xf32> to vector<64x64xf32>
    %127 = arith.mulf %122, %126 : vector<64x64xf32>
    %cst_34 = arith.constant dense<0.000000e+00> : vector<64x32xf32>
    %128 = tpu.matmul %127, %113, %cst_34 {dimension_numbers = #tpu.dot_dimension_numbers<[1], [0], [0], [1], [0, 0, 1, 1], [], []>} : vector<64x64xf32>, vector<64x32xf32>, vector<64x32xf32> -> vector<64x32xf32>
    %129 = arith.addf %110, %128 : vector<64x32xf32>
    %130 = vector.extract_strided_slice %46 {offsets = [0, 128], sizes = [64, 32], strides = [1, 1]} : vector<64x768xf32> to vector<64x32xf32>
    %131 = vector.extract_strided_slice %46 {offsets = [0, 384], sizes = [64, 32], strides = [1, 1]} : vector<64x768xf32> to vector<64x32xf32>
    %132 = vector.extract_strided_slice %46 {offsets = [0, 640], sizes = [64, 32], strides = [1, 1]} : vector<64x768xf32> to vector<64x32xf32>
    %cst_35 = arith.constant dense<0.000000e+00> : vector<64x64xf32>
    %133 = tpu.matmul %130, %131, %cst_35 {dimension_numbers = #tpu.dot_dimension_numbers<[1], [1], [0], [0], [0, 0, 1, 0], [], []>} : vector<64x32xf32>, vector<64x32xf32>, vector<64x64xf32> -> vector<64x64xf32>
    %134 = vector.broadcast %42 : vector<64x1xf32> to vector<64x64xf32>
    %135 = arith.mulf %134, %133 : vector<64x64xf32>
    %136 = arith.addf %135, %52 : vector<64x64xf32>
    %cst_36 = arith.constant dense<0xFF800000> : vector<64xf32>
    %137 = vector.multi_reduction <maximumf>, %136, %cst_36 [1] : vector<64x64xf32> to vector<64xf32>
    %138 = vector.shape_cast %137 : vector<64xf32> to vector<64x1xf32>
    %139 = vector.broadcast %138 : vector<64x1xf32> to vector<64x64xf32>
    %140 = arith.subf %136, %139 : vector<64x64xf32>
    %141 = math.exp %140 : vector<64x64xf32>
    %cst_37 = arith.constant dense<0.000000e+00> : vector<64xf32>
    %142 = vector.multi_reduction <add>, %141, %cst_37 [1] : vector<64x64xf32> to vector<64xf32>
    %143 = vector.shape_cast %142 : vector<64xf32> to vector<64x1xf32>
    %144 = tpu.reciprocal %143 : vector<64x1xf32> -> vector<64x1xf32>
    %145 = vector.broadcast %144 : vector<64x1xf32> to vector<64x64xf32>
    %146 = arith.mulf %141, %145 : vector<64x64xf32>
    %cst_38 = arith.constant dense<0.000000e+00> : vector<64x32xf32>
    %147 = tpu.matmul %146, %132, %cst_38 {dimension_numbers = #tpu.dot_dimension_numbers<[1], [0], [0], [1], [0, 0, 1, 1], [], []>} : vector<64x64xf32>, vector<64x32xf32>, vector<64x32xf32> -> vector<64x32xf32>
    %148 = arith.addf %129, %147 : vector<64x32xf32>
    %149 = vector.extract_strided_slice %46 {offsets = [0, 160], sizes = [64, 32], strides = [1, 1]} : vector<64x768xf32> to vector<64x32xf32>
    %150 = vector.extract_strided_slice %46 {offsets = [0, 416], sizes = [64, 32], strides = [1, 1]} : vector<64x768xf32> to vector<64x32xf32>
    %151 = vector.extract_strided_slice %46 {offsets = [0, 672], sizes = [64, 32], strides = [1, 1]} : vector<64x768xf32> to vector<64x32xf32>
    %cst_39 = arith.constant dense<0.000000e+00> : vector<64x64xf32>
    %152 = tpu.matmul %149, %150, %cst_39 {dimension_numbers = #tpu.dot_dimension_numbers<[1], [1], [0], [0], [0, 0, 1, 0], [], []>} : vector<64x32xf32>, vector<64x32xf32>, vector<64x64xf32> -> vector<64x64xf32>
    %153 = vector.broadcast %42 : vector<64x1xf32> to vector<64x64xf32>
    %154 = arith.mulf %153, %152 : vector<64x64xf32>
    %155 = arith.addf %154, %52 : vector<64x64xf32>
    %cst_40 = arith.constant dense<0xFF800000> : vector<64xf32>
    %156 = vector.multi_reduction <maximumf>, %155, %cst_40 [1] : vector<64x64xf32> to vector<64xf32>
    %157 = vector.shape_cast %156 : vector<64xf32> to vector<64x1xf32>
    %158 = vector.broadcast %157 : vector<64x1xf32> to vector<64x64xf32>
    %159 = arith.subf %155, %158 : vector<64x64xf32>
    %160 = math.exp %159 : vector<64x64xf32>
    %cst_41 = arith.constant dense<0.000000e+00> : vector<64xf32>
    %161 = vector.multi_reduction <add>, %160, %cst_41 [1] : vector<64x64xf32> to vector<64xf32>
    %162 = vector.shape_cast %161 : vector<64xf32> to vector<64x1xf32>
    %163 = tpu.reciprocal %162 : vector<64x1xf32> -> vector<64x1xf32>
    %164 = vector.broadcast %163 : vector<64x1xf32> to vector<64x64xf32>
    %165 = arith.mulf %160, %164 : vector<64x64xf32>
    %cst_42 = arith.constant dense<0.000000e+00> : vector<64x32xf32>
    %166 = tpu.matmul %165, %151, %cst_42 {dimension_numbers = #tpu.dot_dimension_numbers<[1], [0], [0], [1], [0, 0, 1, 1], [], []>} : vector<64x64xf32>, vector<64x32xf32>, vector<64x32xf32> -> vector<64x32xf32>
    %167 = arith.addf %148, %166 : vector<64x32xf32>
    %168 = vector.extract_strided_slice %46 {offsets = [0, 192], sizes = [64, 32], strides = [1, 1]} : vector<64x768xf32> to vector<64x32xf32>
    %169 = vector.extract_strided_slice %46 {offsets = [0, 448], sizes = [64, 32], strides = [1, 1]} : vector<64x768xf32> to vector<64x32xf32>
    %170 = vector.extract_strided_slice %46 {offsets = [0, 704], sizes = [64, 32], strides = [1, 1]} : vector<64x768xf32> to vector<64x32xf32>
    %cst_43 = arith.constant dense<0.000000e+00> : vector<64x64xf32>
    %171 = tpu.matmul %168, %169, %cst_43 {dimension_numbers = #tpu.dot_dimension_numbers<[1], [1], [0], [0], [0, 0, 1, 0], [], []>} : vector<64x32xf32>, vector<64x32xf32>, vector<64x64xf32> -> vector<64x64xf32>
    %172 = vector.broadcast %42 : vector<64x1xf32> to vector<64x64xf32>
    %173 = arith.mulf %172, %171 : vector<64x64xf32>
    %174 = arith.addf %173, %52 : vector<64x64xf32>
    %cst_44 = arith.constant dense<0xFF800000> : vector<64xf32>
    %175 = vector.multi_reduction <maximumf>, %174, %cst_44 [1] : vector<64x64xf32> to vector<64xf32>
    %176 = vector.shape_cast %175 : vector<64xf32> to vector<64x1xf32>
    %177 = vector.broadcast %176 : vector<64x1xf32> to vector<64x64xf32>
    %178 = arith.subf %174, %177 : vector<64x64xf32>
    %179 = math.exp %178 : vector<64x64xf32>
    %cst_45 = arith.constant dense<0.000000e+00> : vector<64xf32>
    %180 = vector.multi_reduction <add>, %179, %cst_45 [1] : vector<64x64xf32> to vector<64xf32>
    %181 = vector.shape_cast %180 : vector<64xf32> to vector<64x1xf32>
    %182 = tpu.reciprocal %181 : vector<64x1xf32> -> vector<64x1xf32>
    %183 = vector.broadcast %182 : vector<64x1xf32> to vector<64x64xf32>
    %184 = arith.mulf %179, %183 : vector<64x64xf32>
    %cst_46 = arith.constant dense<0.000000e+00> : vector<64x32xf32>
    %185 = tpu.matmul %184, %170, %cst_46 {dimension_numbers = #tpu.dot_dimension_numbers<[1], [0], [0], [1], [0, 0, 1, 1], [], []>} : vector<64x64xf32>, vector<64x32xf32>, vector<64x32xf32> -> vector<64x32xf32>
    %186 = arith.addf %167, %185 : vector<64x32xf32>
    %187 = vector.extract_strided_slice %46 {offsets = [0, 224], sizes = [64, 32], strides = [1, 1]} : vector<64x768xf32> to vector<64x32xf32>
    %188 = vector.extract_strided_slice %46 {offsets = [0, 480], sizes = [64, 32], strides = [1, 1]} : vector<64x768xf32> to vector<64x32xf32>
    %189 = vector.extract_strided_slice %46 {offsets = [0, 736], sizes = [64, 32], strides = [1, 1]} : vector<64x768xf32> to vector<64x32xf32>
    %cst_47 = arith.constant dense<0.000000e+00> : vector<64x64xf32>
    %190 = tpu.matmul %187, %188, %cst_47 {dimension_numbers = #tpu.dot_dimension_numbers<[1], [1], [0], [0], [0, 0, 1, 0], [], []>} : vector<64x32xf32>, vector<64x32xf32>, vector<64x64xf32> -> vector<64x64xf32>
    %191 = vector.broadcast %42 : vector<64x1xf32> to vector<64x64xf32>
    %192 = arith.mulf %191, %190 : vector<64x64xf32>
    %193 = arith.addf %192, %52 : vector<64x64xf32>
    %cst_48 = arith.constant dense<0xFF800000> : vector<64xf32>
    %194 = vector.multi_reduction <maximumf>, %193, %cst_48 [1] : vector<64x64xf32> to vector<64xf32>
    %195 = vector.shape_cast %194 : vector<64xf32> to vector<64x1xf32>
    %196 = vector.broadcast %195 : vector<64x1xf32> to vector<64x64xf32>
    %197 = arith.subf %193, %196 : vector<64x64xf32>
    %198 = math.exp %197 : vector<64x64xf32>
    %cst_49 = arith.constant dense<0.000000e+00> : vector<64xf32>
    %199 = vector.multi_reduction <add>, %198, %cst_49 [1] : vector<64x64xf32> to vector<64xf32>
    %200 = vector.shape_cast %199 : vector<64xf32> to vector<64x1xf32>
    %201 = tpu.reciprocal %200 : vector<64x1xf32> -> vector<64x1xf32>
    %202 = vector.broadcast %201 : vector<64x1xf32> to vector<64x64xf32>
    %203 = arith.mulf %198, %202 : vector<64x64xf32>
    %cst_50 = arith.constant dense<0.000000e+00> : vector<64x32xf32>
    %204 = tpu.matmul %203, %189, %cst_50 {dimension_numbers = #tpu.dot_dimension_numbers<[1], [0], [0], [1], [0, 0, 1, 1], [], []>} : vector<64x64xf32>, vector<64x32xf32>, vector<64x32xf32> -> vector<64x32xf32>
    %205 = arith.addf %186, %204 : vector<64x32xf32>
    %206 = vector.broadcast %6 : vector<1x32xf32> to vector<64x32xf32>
    %207 = arith.addf %205, %206 : vector<64x32xf32>
    %208 = arith.addf %207, %34 : vector<64x32xf32>
    %cst_51 = arith.constant dense<0.000000e+00> : vector<64xf32>
    %209 = vector.multi_reduction <add>, %208, %cst_51 [1] : vector<64x32xf32> to vector<64xf32>
    %210 = vector.shape_cast %209 : vector<64xf32> to vector<64x1xf32>
    %cst_52 = arith.constant 3.200000e+01 : f32
    %211 = vector.broadcast %cst_52 : f32 to vector<64x1xf32>
    %212 = arith.divf %210, %211 : vector<64x1xf32>
    %213 = vector.broadcast %212 : vector<64x1xf32> to vector<64x32xf32>
    %214 = arith.subf %208, %213 : vector<64x32xf32>
    %215 = arith.mulf %214, %214 : vector<64x32xf32>
    %cst_53 = arith.constant dense<0.000000e+00> : vector<64xf32>
    %216 = vector.multi_reduction <add>, %215, %cst_53 [1] : vector<64x32xf32> to vector<64xf32>
    %217 = vector.shape_cast %216 : vector<64xf32> to vector<64x1xf32>
    %cst_54 = arith.constant 3.200000e+01 : f32
    %218 = vector.broadcast %cst_54 : f32 to vector<64x1xf32>
    %219 = arith.divf %217, %218 : vector<64x1xf32>
    %cst_55 = arith.constant 9.99999974E-6 : f32
    %220 = vector.broadcast %cst_55 : f32 to vector<64x1xf32>
    %221 = arith.addf %219, %220 : vector<64x1xf32>
    %222 = math.rsqrt %221 : vector<64x1xf32>
    %223 = vector.broadcast %222 : vector<64x1xf32> to vector<64x32xf32>
    %224 = arith.mulf %214, %223 : vector<64x32xf32>
    %225 = vector.broadcast %4 : vector<1x32xf32> to vector<64x32xf32>
    %226 = arith.mulf %224, %225 : vector<64x32xf32>
    %227 = vector.broadcast %5 : vector<1x32xf32> to vector<64x32xf32>
    %228 = arith.addf %226, %227 : vector<64x32xf32>
    %c0_56 = arith.constant 0 : index
    %c0_57 = arith.constant 0 : index
    %c0_58 = arith.constant 0 : index
    %229 = vector.load %arg6[%c0_56, %c0_57, %c0_58] : memref<1x32x64xf32, #tpu.memory_space<vmem>>, vector<1x32x64xf32>
    %230 = vector.shape_cast %229 : vector<1x32x64xf32> to vector<32x64xf32>
    %cst_59 = arith.constant dense<0.000000e+00> : vector<64x64xf32>
    %231 = tpu.matmul %228, %230, %cst_59 {dimension_numbers = #tpu.dot_dimension_numbers<[1], [0], [0], [1], [0, 0, 1, 1], [], []>} : vector<64x32xf32>, vector<32x64xf32>, vector<64x64xf32> -> vector<64x64xf32>
    %232 = vector.broadcast %8 : vector<1x64xf32> to vector<64x64xf32>
    %233 = arith.addf %231, %232 : vector<64x64xf32>
    %cst_60 = arith.constant 5.000000e-01 : f32
    %234 = vector.broadcast %cst_60 : f32 to vector<64x64xf32>
    %235 = arith.mulf %234, %233 : vector<64x64xf32>
    %cst_61 = arith.constant 0.707106769 : f32
    %236 = vector.broadcast %cst_61 : f32 to vector<64x64xf32>
    %237 = arith.mulf %233, %236 : vector<64x64xf32>
    %238 = math.erf %237 : vector<64x64xf32>
    %cst_62 = arith.constant 1.000000e+00 : f32
    %239 = vector.broadcast %cst_62 : f32 to vector<64x64xf32>
    %240 = arith.addf %239, %238 : vector<64x64xf32>
    %241 = arith.mulf %235, %240 : vector<64x64xf32>
    %c0_63 = arith.constant 0 : index
    %c0_64 = arith.constant 0 : index
    %c0_65 = arith.constant 0 : index
    %242 = vector.load %arg7[%c0_63, %c0_64, %c0_65] : memref<1x64x32xf32, #tpu.memory_space<vmem>>, vector<1x64x32xf32>
    %243 = vector.shape_cast %242 : vector<1x64x32xf32> to vector<64x32xf32>
    %cst_66 = arith.constant dense<0.000000e+00> : vector<64x32xf32>
    %244 = tpu.matmul %241, %243, %cst_66 {dimension_numbers = #tpu.dot_dimension_numbers<[1], [0], [0], [1], [0, 0, 1, 1], [], []>} : vector<64x64xf32>, vector<64x32xf32>, vector<64x32xf32> -> vector<64x32xf32>
    %245 = vector.broadcast %7 : vector<1x32xf32> to vector<64x32xf32>
    %246 = arith.addf %244, %245 : vector<64x32xf32>
    %247 = arith.addf %246, %228 : vector<64x32xf32>
    %c0_67 = arith.constant 0 : index
    %c0_68 = arith.constant 0 : index
    %248 = vector.load %arg10[%c0_67, %c0_68] : memref<64x32xf32, #tpu.memory_space<vmem>>, vector<64x32xf32>
    tpu.vector_store %arg10[%c0_67, %c0_68], %247 {strides = array<i32>} : memref<64x32xf32, #tpu.memory_space<vmem>>, vector<64x32xf32>,
    %c4_i32 = arith.constant 4 : i32
    %249 = arith.cmpi eq, %arg1, %c4_i32 : i32
    %250 = arith.extui %249 : i1 to i32
    %c0_i32_69 = arith.constant 0 : i32
    %251 = arith.cmpi ne, %250, %c0_i32_69 : i32
    scf.if %251 {
      %c0_70 = arith.constant 0 : index
      %c0_71 = arith.constant 0 : index
      %252 = vector.load %arg9[%c0_70, %c0_71] : memref<64x32xf32, #tpu.memory_space<vmem>>, vector<64x32xf32>
      tpu.vector_store %arg9[%c0_70, %c0_71], %247 {strides = array<i32>} : memref<64x32xf32, #tpu.memory_space<vmem>>, vector<64x32xf32>,
    } else {
    }
    return
  }
  func.func @transform_0(%arg0: i32, %arg1: i32) -> (i32, i32) {
    %c0_i32 = arith.constant 0 : i32
    %c0_i32_0 = arith.constant 0 : i32
    return %arg0, %c0_i32 : i32, i32
  }
  func.func @transform_1(%arg0: i32, %arg1: i32) -> (i32, i32) {
    %c0_i32 = arith.constant 0 : i32
    %c0_i32_0 = arith.constant 0 : i32
    return %arg0, %c0_i32 : i32, i32
  }
  func.func @transform_2(%arg0: i32, %arg1: i32) -> (i32, i32) {
    %c0_i32 = arith.constant 0 : i32
    %c0_i32_0 = arith.constant 0 : i32
    %c0_i32_1 = arith.constant 0 : i32
    return %c0_i32, %c0_i32_0 : i32, i32
  }
  func.func @transform_3(%arg0: i32, %arg1: i32) -> (i32, i32, i32) {
    %c0_i32 = arith.constant 0 : i32
    %c0_i32_0 = arith.constant 0 : i32
    %c0_i32_1 = arith.constant 0 : i32
    return %arg1, %c0_i32, %c0_i32_0 : i32, i32, i32
  }
  func.func @transform_4(%arg0: i32, %arg1: i32) -> (i32, i32, i32) {
    %c0_i32 = arith.constant 0 : i32
    %c0_i32_0 = arith.constant 0 : i32
    %c0_i32_1 = arith.constant 0 : i32
    return %arg1, %c0_i32, %c0_i32_0 : i32, i32, i32
  }
  func.func @transform_5(%arg0: i32, %arg1: i32) -> (i32, i32, i32) {
    %c0_i32 = arith.constant 0 : i32
    %c0_i32_0 = arith.constant 0 : i32
    %c0_i32_1 = arith.constant 0 : i32
    return %arg1, %c0_i32, %c0_i32_0 : i32, i32, i32
  }
  func.func @transform_6(%arg0: i32, %arg1: i32) -> (i32, i32, i32) {
    %c0_i32 = arith.constant 0 : i32
    %c0_i32_0 = arith.constant 0 : i32
    %c0_i32_1 = arith.constant 0 : i32
    return %arg1, %c0_i32, %c0_i32_0 : i32, i32, i32
  }
  func.func @transform_7(%arg0: i32, %arg1: i32) -> (i32, i32) {
    %c0_i32 = arith.constant 0 : i32
    %c0_i32_0 = arith.constant 0 : i32
    return %arg0, %c0_i32 : i32, i32
  }
}

</mosaic_0001>

<llo_original>
// kernel: tpu_custom_call.1
$region0: #{tpu_custom_call.1}
  #allocation0 [shape = 'u32[]', space=smem, size = 0x4, offset = 0x4, fixed_abs, tag = 'smem constant byte address 0x4 - core index']
  #allocation1 [shape = 'u32[72,128]{1,0:T(1,128)}', space=vmem, size = 0x9000, scoped, tag = 'internal scratch']
  #allocation2 [shape = 'f32[64,32]{1,0:T(8,128)}', space=vmem, size = 0x8000, scoped, tag = 'scratch operand']
  %s0 = inlined_call_operand.vmem [shape: f32[256,32], index: 0, kind: input, shape index: {}]
  %s1 = inlined_call_operand.vmem [shape: bf16[256,64], index: 1, kind: input, shape index: {}]
  %s2 = inlined_call_operand.vmem [shape: f32[64,64], index: 2, kind: input, shape index: {}]
  %s3 = inlined_call_operand.hbm [shape: f32[5,32,770], index: 3, kind: input, shape index: {}]
  %s4 = inlined_call_operand.vmem [shape: f32[5,32,64], index: 4, kind: input, shape index: {}]
  %s5 = inlined_call_operand.vmem [shape: f32[5,64,32], index: 5, kind: input, shape index: {}]
  %s6 = inlined_call_operand.vmem [shape: f32[5,8,128], index: 6, kind: input, shape index: {}]
  %s7 = inlined_call_operand.vmem [shape: f32[256,32], index: 7, kind: output, shape index: {}]
  %s8 = sld [smem:[#allocation0]]
  $region73: #{tpu_custom_call.1} parent=0
    _
  %s10 = ssub.s32 1, %s8
  %s11 = scalar_select 0, %s10, %s8
  $region1: #{tpu_custom_call.1} parent=0
    #allocation3 [shape = 'u8[229376]{0}', space=vmem, size = 0x38000, scoped, tag = 'input window, operand 3']
    #allocation4 [shape = 's32[2]{0}', space=sflag, size = 0x8, scoped, tag = 'scoped memory for tpu_custom_call.1']
    %12 = vsyncpa [#allocation4], 0
    %s13 = scalar_lea.sflag [#allocation4], 1
    %14 = vsyncpa %s13, 0
    loop: start=0, step=1, limit=22
    $region2: #{tpu_custom_call.1} parent=1 // loop_pre_header
      _
    $region3: #{tpu_custom_call.1} parent=1 // loop_header
      %s16 = sphi 0, %s20
      %p17 = scmp.ge.s32.totalorder %s16, 22
      %s23 = sphi 0, %s35
      %s24 = sphi 0, %s31
      %s25 = sphi 0, %s23
      %s26 = sphi 0, %s24
      %s27 = sphi 0, %s25
      %s28 = sphi 0, %s26
      %s38 = sphi 0, %s40
      %s41 = sphi 0, %s38
      %s42 = sphi 0, %s41
      %s58 = sphi 0, %s42
      %s64 = sphi 0, %s66
      %s67 = sphi 0, %s64
      %s68 = sphi 0, %s67
      %s84 = sphi 0, %s68
      %s88 = sphi 0, %s88
      %s90 = sphi 0, %s88
      %s91 = sphi 0, %s90
      %s105 = sphi 0, %s91
      %s111 = sphi 0, %s113
      %s114 = sphi 0, %s111
      %s115 = sphi 0, %s114
      %s131 = sphi 0, %s115
      %s137 = sphi 0, %s139
      %s140 = sphi 0, %s137
      %s141 = sphi 0, %s140
      %s157 = sphi 0, %s141
      %s163 = sphi 0, %s165
      %s166 = sphi 0, %s163
      %s167 = sphi 0, %s166
      %s183 = sphi 0, %s167
      %s189 = sphi 0, %s191
      %s192 = sphi 0, %s189
      %s193 = sphi 0, %s192
      %s209 = sphi 0, %s193
      %s215 = sphi 0, %s217
      %s218 = sphi 0, %s215
      %s219 = sphi 0, %s218
      %s235 = sphi 0, %s219
    $region4: #{tpu_custom_call.1} parent=1 // loop_header_branch
      %19 = sbr.rel (%p17) target = $region8
    $region5: #{tpu_custom_call.1} parent=1 // loop_body
      %s21 = ssub.s32 %s16, 1
      %s22 = ssub.s32 %s16, 2
      %s29 = sadd.s32 1, %s24
      %p30 = scmp.ge.s32.totalorder %s29, 5
      %s31 = scalar_select %p30, 0, %s29
      %s32 = sadd.s32 1, %s23
      %s33 = scalar_select %p30, %s32, %s23
      %p34 = scmp.ge.s32.totalorder %s33, 4
      %s35 = scalar_select %p34, 0, %s33
      %s36 = ssub.s32 %s23, %s35
      %p37 = scmp.eq.s32.totalorder %s36, 0
      %s39 = sadd.s32 %s38, 1
      %s40 = scalar_select %p37, %s38, %s39
      %p43 = pneg %p37
      %p44 = scmp.eq.s32.totalorder %s16, 19
      %p45 = por %p43, %p44
      %p46 = scmp.ne.s32.totalorder %s38, %s41
      %p47 = scmp.eq.s32.totalorder %s16, 0
      %p48 = por %p46, %p47
      %p49 = scmp.ne.s32.totalorder %s38, %s41
      %p50 = scmp.eq.s32.totalorder %s21, 19
      %p51 = por %p49, %p50
      %p52 = scmp.ne.s32.totalorder %s41, %s42
      %p53 = scmp.eq.s32.totalorder %s21, 0
      %p54 = por %p52, %p53
      %p55 = scmp.ne.s32.totalorder %s41, %s42
      %p56 = scmp.eq.s32.totalorder %s22, 19
      %p57 = por %p55, %p56
      %p59 = scmp.ne.s32.totalorder %s42, %s58
      %p60 = scmp.eq.s32.totalorder %s22, 0
      %p61 = por %p59, %p60
      %s62 = ssub.s32 %s23, %s35
      %p63 = scmp.eq.s32.totalorder %s62, 0
      %s65 = sadd.s32 %s64, 1
      %s66 = scalar_select %p63, %s64, %s65
      %p69 = pneg %p63
      %p70 = scmp.eq.s32.totalorder %s16, 19
      %p71 = por %p69, %p70
      %p72 = scmp.ne.s32.totalorder %s64, %s67
      %p73 = scmp.eq.s32.totalorder %s16, 0
      %p74 = por %p72, %p73
      %p75 = scmp.ne.s32.totalorder %s64, %s67
      %p76 = scmp.eq.s32.totalorder %s21, 19
      %p77 = por %p75, %p76
      %p78 = scmp.ne.s32.totalorder %s67, %s68
      %p79 = scmp.eq.s32.totalorder %s21, 0
      %p80 = por %p78, %p79
      %p81 = scmp.ne.s32.totalorder %s67, %s68
      %p82 = scmp.eq.s32.totalorder %s22, 19
      %p83 = por %p81, %p82
      %p85 = scmp.ne.s32.totalorder %s68, %s84
      %p86 = scmp.eq.s32.totalorder %s22, 0
      %p87 = por %p85, %p86
      %s89 = sadd.s32 %s88, 1
      %p92 = scmp.eq.s32.totalorder %s16, 19
      %p93 = scmp.ne.s32.totalorder %s88, %s90
      %p94 = scmp.eq.s32.totalorder %s16, 0
      %p95 = por %p93, %p94
      %p96 = scmp.ne.s32.totalorder %s88, %s90
      %p97 = scmp.eq.s32.totalorder %s21, 19
      %p98 = por %p96, %p97
      %p99 = scmp.ne.s32.totalorder %s90, %s91
      %p100 = scmp.eq.s32.totalorder %s21, 0
      %p101 = por %p99, %p100
      %p102 = scmp.ne.s32.totalorder %s90, %s91
      %p103 = scmp.eq.s32.totalorder %s22, 19
      %p104 = por %p102, %p103
      %p106 = scmp.ne.s32.totalorder %s91, %s105
      %p107 = scmp.eq.s32.totalorder %s22, 0
      %p108 = por %p106, %p107
      %s109 = ssub.s32 %s24, %s31
      %p110 = scmp.eq.s32.totalorder %s109, 0
      %s112 = sadd.s32 %s111, 1
      %s113 = scalar_select %p110, %s111, %s112
      %p116 = pneg %p110
      %p117 = scmp.eq.s32.totalorder %s16, 19
      %p118 = por %p116, %p117
      %p119 = scmp.ne.s32.totalorder %s111, %s114
      %p120 = scmp.eq.s32.totalorder %s16, 0
      %p121 = por %p119, %p120
      %p122 = scmp.ne.s32.totalorder %s111, %s114
      %p123 = scmp.eq.s32.totalorder %s21, 19
      %p124 = por %p122, %p123
      %p125 = scmp.ne.s32.totalorder %s114, %s115
      %p126 = scmp.eq.s32.totalorder %s21, 0
      %p127 = por %p125, %p126
      %p128 = scmp.ne.s32.totalorder %s114, %s115
      %p129 = scmp.eq.s32.totalorder %s22, 19
      %p130 = por %p128, %p129
      %p132 = scmp.ne.s32.totalorder %s115, %s131
      %p133 = scmp.eq.s32.totalorder %s22, 0
      %p134 = por %p132, %p133
      %s135 = ssub.s32 %s24, %s31
      %p136 = scmp.eq.s32.totalorder %s135, 0
      %s138 = sadd.s32 %s137, 1
      %s139 = scalar_select %p136, %s137, %s138
      %p142 = pneg %p136
      %p143 = scmp.eq.s32.totalorder %s16, 19
      %p144 = por %p142, %p143
      %p145 = scmp.ne.s32.totalorder %s137, %s140
      %p146 = scmp.eq.s32.totalorder %s16, 0
      %p147 = por %p145, %p146
      %p148 = scmp.ne.s32.totalorder %s137, %s140
      %p149 = scmp.eq.s32.totalorder %s21, 19
      %p150 = por %p148, %p149
      %p151 = scmp.ne.s32.totalorder %s140, %s141
      %p152 = scmp.eq.s32.totalorder %s21, 0
      %p153 = por %p151, %p152
      %p154 = scmp.ne.s32.totalorder %s140, %s141
      %p155 = scmp.eq.s32.totalorder %s22, 19
      %p156 = por %p154, %p155
      %p158 = scmp.ne.s32.totalorder %s141, %s157
      %p159 = scmp.eq.s32.totalorder %s22, 0
      %p160 = por %p158, %p159
      %s161 = ssub.s32 %s24, %s31
      %p162 = scmp.eq.s32.totalorder %s161, 0
      %s164 = sadd.s32 %s163, 1
      %s165 = scalar_select %p162, %s163, %s164
      %p168 = pneg %p162
      %p169 = scmp.eq.s32.totalorder %s16, 19
      %p170 = por %p168, %p169
      %p171 = scmp.ne.s32.totalorder %s163, %s166
      %p172 = scmp.eq.s32.totalorder %s16, 0
      %p173 = por %p171, %p172
      %p174 = scmp.ne.s32.totalorder %s163, %s166
      %p175 = scmp.eq.s32.totalorder %s21, 19
      %p176 = por %p174, %p175
      %p177 = scmp.ne.s32.totalorder %s166, %s167
      %p178 = scmp.eq.s32.totalorder %s21, 0
      %p179 = por %p177, %p178
      %p180 = scmp.ne.s32.totalorder %s166, %s167
      %p181 = scmp.eq.s32.totalorder %s22, 19
      %p182 = por %p180, %p181
      %p184 = scmp.ne.s32.totalorder %s167, %s183
      %p185 = scmp.eq.s32.totalorder %s22, 0
      %p186 = por %p184, %p185
      %s187 = ssub.s32 %s24, %s31
      %p188 = scmp.eq.s32.totalorder %s187, 0
      %s190 = sadd.s32 %s189, 1
      %s191 = scalar_select %p188, %s189, %s190
      %p194 = pneg %p188
      %p195 = scmp.eq.s32.totalorder %s16, 19
      %p196 = por %p194, %p195
      %p197 = scmp.ne.s32.totalorder %s189, %s192
      %p198 = scmp.eq.s32.totalorder %s16, 0
      %p199 = por %p197, %p198
      %p200 = scmp.ne.s32.totalorder %s189, %s192
      %p201 = scmp.eq.s32.totalorder %s21, 19
      %p202 = por %p200, %p201
      %p203 = scmp.ne.s32.totalorder %s192, %s193
      %p204 = scmp.eq.s32.totalorder %s21, 0
      %p205 = por %p203, %p204
      %p206 = scmp.ne.s32.totalorder %s192, %s193
      %p207 = scmp.eq.s32.totalorder %s22, 19
      %p208 = por %p206, %p207
      %p210 = scmp.ne.s32.totalorder %s193, %s209
      %p211 = scmp.eq.s32.totalorder %s22, 0
      %p212 = por %p210, %p211
      %s213 = ssub.s32 %s23, %s35
      %p214 = scmp.eq.s32.totalorder %s213, 0
      %s216 = sadd.s32 %s215, 1
      %s217 = scalar_select %p214, %s215, %s216
      %p220 = pneg %p214
      %p221 = scmp.eq.s32.totalorder %s16, 19
      %p222 = por %p220, %p221
      %p223 = scmp.ne.s32.totalorder %s215, %s218
      %p224 = scmp.eq.s32.totalorder %s16, 0
      %p225 = por %p223, %p224
      %p226 = scmp.ne.s32.totalorder %s215, %s218
      %p227 = scmp.eq.s32.totalorder %s21, 19
      %p228 = por %p226, %p227
      %p229 = scmp.ne.s32.totalorder %s218, %s219
      %p230 = scmp.eq.s32.totalorder %s21, 0
      %p231 = por %p229, %p230
      %p232 = scmp.ne.s32.totalorder %s218, %s219
      %p233 = scmp.eq.s32.totalorder %s22, 19
      %p234 = por %p232, %p233
      %p236 = scmp.ne.s32.totalorder %s219, %s235
      %p237 = scmp.eq.s32.totalorder %s22, 0
      %p238 = por %p236, %p237
      %p239 = scmp.le.s32.totalorder 1, %s16
      %p240 = scmp.lt.s32.totalorder %s16, 21
      %p241 = pnand %p239, %p240
      %p242 = pneg %p241
      // Predicated region
      $region9: #{tpu_custom_call.1} parent=5 // pred_check
        _
      $region10: #{tpu_custom_call.1} parent=5 // pred_check_branch
        %244 = sbr.rel (%p241) target = $region12
      $region11: #{tpu_custom_call.1} parent=5 // pred_region
        %s245 = ssub.s32 %s16, 1
        // Predicated region
        $region13: #{tpu_custom_call.1} parent=11 // pred_check
          %p246 = pneg %p101
        $region14: #{tpu_custom_call.1} parent=11 // pred_check_branch
          %248 = sbr.rel (%p246) target = $region16
        $region15: #{tpu_custom_call.1} parent=11 // pred_region
          _
        $region16: #{tpu_custom_call.1} parent=11 // pred_fallthru
          _
      $region12: #{tpu_custom_call.1} parent=5 // pred_fallthru
        _
      %p249 = scmp.lt.s32.totalorder %s16, 20
      // Predicated region
      $region17: #{tpu_custom_call.1} parent=5 // pred_check
        %p250 = pneg %p249
      $region18: #{tpu_custom_call.1} parent=5 // pred_check_branch
        %252 = sbr.rel (%p250) target = $region20
      $region19: #{tpu_custom_call.1} parent=5 // pred_region
        // Predicated region
        $region21: #{tpu_custom_call.1} parent=19 // pred_check
          %p253 = pneg %p48
        $region22: #{tpu_custom_call.1} parent=19 // pred_check_branch
          %255 = sbr.rel (%p253) target = $region24
        $region23: #{tpu_custom_call.1} parent=19 // pred_region
          %s256 = smul.u32 8, %s23
          %p257 = scmp.lt.s32.totalorder %s256, 31
          %s258 = scalar_select %p257, %s256, 31
          %s259 = smul.addr %s258, 8
          %s260 = scalar_lea.vmem %s0, %s259
          %s261 = smul.u32 8, %s23
        $region24: #{tpu_custom_call.1} parent=19 // pred_fallthru
          _
        // Predicated region
        $region25: #{tpu_custom_call.1} parent=19 // pred_check
          %p262 = pneg %p74
        $region26: #{tpu_custom_call.1} parent=19 // pred_check_branch
          %264 = sbr.rel (%p262) target = $region28
        $region27: #{tpu_custom_call.1} parent=19 // pred_region
          %s265 = smul.u32 8, %s23
          %p266 = scmp.lt.s32.totalorder %s265, 31
          %s267 = scalar_select %p266, %s265, 31
          %s268 = smul.addr %s267, 4
          %s269 = scalar_lea.vmem %s1, %s268
          %s270 = smul.u32 8, %s23
        $region28: #{tpu_custom_call.1} parent=19 // pred_fallthru
          _
        // Predicated region
        $region29: #{tpu_custom_call.1} parent=19 // pred_check
          %p271 = pneg %p121
        $region30: #{tpu_custom_call.1} parent=19 // pred_check_branch
          %273 = sbr.rel (%p271) target = $region32
        $region31: #{tpu_custom_call.1} parent=19 // pred_region
          %s274 = sand.u32 %s111, 1
          %s275 = scalar_lea.sflag [#allocation4], %s274
          %s276 = sand.u32 %s111, 1
          %s277 = smul.addr %s276, 224
          %s278 = scalar_lea.vmem [#allocation3], %s277
          %280 = vsyncadd %s275, 0
          %s281 = smul.addr %s24, 28
          %s282 = smul.addr %s281, 8
          %s283 = scalar_lea.hbm %s3, %s282
          %s284 = sshll.u32 %s283, 4
          %s285 = int_to_ptr.hbm [resolvable:$true] %s284
          %s286 = sshll.u32 %s278, 4
          %s287 = int_to_ptr.vmem [resolvable:$true] %s286
          %292 = dma.hbm_to_vmem [thread:$0]  %s285, 3584, %s287, %s275, 896, 896, 56
        $region32: #{tpu_custom_call.1} parent=19 // pred_fallthru
          _
        // Predicated region
        $region33: #{tpu_custom_call.1} parent=19 // pred_check
          %p293 = pneg %p147
        $region34: #{tpu_custom_call.1} parent=19 // pred_check_branch
          %295 = sbr.rel (%p293) target = $region36
        $region35: #{tpu_custom_call.1} parent=19 // pred_region
          %p296 = scmp.lt.s32.totalorder %s24, 4
          %s297 = scalar_select %p296, %s24, 4
          %s298 = smul.addr %s297, 4
          %s299 = smul.addr %s298, 8
          %s300 = scalar_lea.vmem %s4, %s299
        $region36: #{tpu_custom_call.1} parent=19 // pred_fallthru
          _
        // Predicated region
        $region37: #{tpu_custom_call.1} parent=19 // pred_check
          %p301 = pneg %p173
        $region38: #{tpu_custom_call.1} parent=19 // pred_check_branch
          %303 = sbr.rel (%p301) target = $region40
        $region39: #{tpu_custom_call.1} parent=19 // pred_region
          %p304 = scmp.lt.s32.totalorder %s24, 4
          %s305 = scalar_select %p304, %s24, 4
          %s306 = smul.addr %s305, 8
          %s307 = smul.addr %s306, 8
          %s308 = scalar_lea.vmem %s5, %s307
        $region40: #{tpu_custom_call.1} parent=19 // pred_fallthru
          _
        // Predicated region
        $region41: #{tpu_custom_call.1} parent=19 // pred_check
          %p309 = pneg %p199
        $region42: #{tpu_custom_call.1} parent=19 // pred_check_branch
          %311 = sbr.rel (%p309) target = $region44
        $region43: #{tpu_custom_call.1} parent=19 // pred_region
          %p312 = scmp.lt.s32.totalorder %s24, 4
          %s313 = scalar_select %p312, %s24, 4
          %s314 = smul.addr %s313, 8
          %s315 = scalar_lea.vmem %s6, %s314
        $region44: #{tpu_custom_call.1} parent=19 // pred_fallthru
          _
      $region20: #{tpu_custom_call.1} parent=5 // pred_fallthru
        _
      %p316 = scmp.le.s32.totalorder 1, %s16
      %p317 = scmp.lt.s32.totalorder %s16, 21
      %p318 = pnand %p316, %p317
      %p319 = pneg %p318
      // Predicated region
      $region45: #{tpu_custom_call.1} parent=5 // pred_check
        _
      $region46: #{tpu_custom_call.1} parent=5 // pred_check_branch
        %321 = sbr.rel (%p318) target = $region48
      $region47: #{tpu_custom_call.1} parent=5 // pred_region
        %s322 = ssub.s32 %s16, 1
        %s323 = sand.u32 %s114, 1
        %s324 = scalar_lea.sflag [#allocation4], %s323
        %s325 = sand.u32 %s114, 1
        %s326 = smul.addr %s325, 224
        %s327 = scalar_lea.vmem [#allocation3], %s326
        // Predicated region
        $region49: #{tpu_custom_call.1} parent=47 // pred_check
          %p328 = pneg %p127
        $region50: #{tpu_custom_call.1} parent=47 // pred_check_branch
          %330 = sbr.rel (%p328) target = $region52
        $region51: #{tpu_custom_call.1} parent=47 // pred_region
          %332 = dma.done %s324, 3584
        $region52: #{tpu_custom_call.1} parent=47 // pred_fallthru
          _
        %s333 = smul.u32 8, %s25
        %p334 = scmp.lt.s32.totalorder %s333, 31
        %s335 = scalar_select %p334, %s333, 31
        %s336 = smul.addr %s335, 8
        %s337 = scalar_lea.vmem %s0, %s336
        %p338 = pneg %p54
        %p339 = pneg %p51
        %s340 = smul.u32 8, %s25
        %p341 = scmp.lt.s32.totalorder %s340, 31
        %s342 = scalar_select %p341, %s340, 31
        %s343 = smul.addr %s342, 4
        %s344 = scalar_lea.vmem %s1, %s343
        %p345 = pneg %p80
        %p346 = pneg %p77
        %p347 = pneg %p101
        %p348 = pneg %p98
        %s349 = sand.u32 %s114, 1
        %s350 = scalar_lea.sflag [#allocation4], %s349
        %s351 = sand.u32 %s114, 1
        %s352 = smul.addr %s351, 224
        %s353 = scalar_lea.vmem [#allocation3], %s352
        %p354 = pneg %p127
        %p355 = pneg %p124
        %p356 = scmp.lt.s32.totalorder %s26, 4
        %s357 = scalar_select %p356, %s26, 4
        %s358 = smul.addr %s357, 4
        %s359 = smul.addr %s358, 8
        %s360 = scalar_lea.vmem %s4, %s359
        %p361 = pneg %p153
        %p362 = pneg %p150
        %p363 = scmp.lt.s32.totalorder %s26, 4
        %s364 = scalar_select %p363, %s26, 4
        %s365 = smul.addr %s364, 8
        %s366 = smul.addr %s365, 8
        %s367 = scalar_lea.vmem %s5, %s366
        %p368 = pneg %p179
        %p369 = pneg %p176
        %p370 = scmp.lt.s32.totalorder %s26, 4
        %s371 = scalar_select %p370, %s26, 4
        %s372 = smul.addr %s371, 8
        %s373 = scalar_lea.vmem %s6, %s372
        %p374 = pneg %p205
        %p375 = pneg %p202
        %p376 = pneg %p231
        %p377 = pneg %p228
        %s378 = smul.u32 8, %s25
        %p379 = scmp.lt.s32.totalorder %s378, 31
        %s380 = scalar_select %p379, %s378, 31
        %s381 = smul.addr %s380, 8
        %s382 = scalar_lea.vmem %s7, %s381
        %s383 = smul.u32 8, %s25
        %p384 = scmp.lt.s32.totalorder %s383, 31
        %s385 = scalar_select %p384, %s383, 31
        %s386 = smul.addr %s385, 8
        %s387 = scalar_lea.vmem %s0, %s386
        %s388 = smul.u32 8, %s25
        %s389 = smul.u32 8, %s25
        %p390 = scmp.lt.s32.totalorder %s389, 31
        %s391 = scalar_select %p390, %s389, 31
        %s392 = smul.addr %s391, 4
        %s393 = scalar_lea.vmem %s1, %s392
        %s394 = smul.u32 8, %s25
        %p395 = scmp.lt.s32.totalorder %s26, 4
        %s396 = scalar_select %p395, %s26, 4
        %s397 = smul.addr %s396, 4
        %s398 = smul.addr %s397, 8
        %s399 = scalar_lea.vmem %s4, %s398
        %p400 = scmp.lt.s32.totalorder %s26, 4
        %s401 = scalar_select %p400, %s26, 4
        %s402 = smul.addr %s401, 8
        %s403 = smul.addr %s402, 8
        %s404 = scalar_lea.vmem %s5, %s403
        %p405 = scmp.lt.s32.totalorder %s26, 4
        %s406 = scalar_select %p405, %s26, 4
        %s407 = smul.addr %s406, 8
        %s408 = scalar_lea.vmem %s6, %s407
        %s409 = smul.u32 8, %s25
        %p410 = scmp.lt.s32.totalorder %s409, 31
        %s411 = scalar_select %p410, %s409, 31
        %s412 = smul.addr %s411, 8
        %s413 = scalar_lea.vmem %s7, %s412
        %s414 = smul.u32 8, %s25
        %v415 = vld [vmem:[%s408] sm:$0xff]
        %p416 = scmp.eq.s32.totalorder %s26, 0
        // Predicated region
        $region53: #{tpu_custom_call.1} parent=47 // pred_check
          %p417 = pneg %p416
        $region54: #{tpu_custom_call.1} parent=47 // pred_check_branch
          %419 = sbr.rel (%p417) target = $region56
        $region55: #{tpu_custom_call.1} parent=47 // pred_region
          %v420 = vld [vmem:[%s387] sm:$0xff]
          %v421 = vld [vmem:[%s387 + $0x8] sm:$0xff]
          %v422 = vld [vmem:[%s387 + $0x10] sm:$0xff]
          %v423 = vld [vmem:[%s387 + $0x18] sm:$0xff]
          %v424 = vld [vmem:[%s387 + $0x20] sm:$0xff]
          %v425 = vld [vmem:[%s387 + $0x28] sm:$0xff]
          %v426 = vld [vmem:[%s387 + $0x30] sm:$0xff]
          %v427 = vld [vmem:[%s387 + $0x38] sm:$0xff]
          %vm428 = vcmask 261120
          %429 = vst.msk [vmem:[#allocation2] sm:$0xff] %vm428, %v420
          %430 = vst.msk [vmem:[#allocation2 + $0x8] sm:$0xff] %vm428, %v421
          %431 = vst.msk [vmem:[#allocation2 + $0x10] sm:$0xff] %vm428, %v422
          %432 = vst.msk [vmem:[#allocation2 + $0x18] sm:$0xff] %vm428, %v423
          %433 = vst.msk [vmem:[#allocation2 + $0x20] sm:$0xff] %vm428, %v424
          %434 = vst.msk [vmem:[#allocation2 + $0x28] sm:$0xff] %vm428, %v425
          %435 = vst.msk [vmem:[#allocation2 + $0x30] sm:$0xff] %vm428, %v426
          %436 = vst.msk [vmem:[#allocation2 + $0x38] sm:$0xff] %vm428, %v427
        $region56: #{tpu_custom_call.1} parent=47 // pred_fallthru
          _
        %v437 = vld [vmem:[#allocation2] sm:$0xff]
        %v438 = vld [vmem:[#allocation2 + $0x8] sm:$0xff]
        %v439 = vld [vmem:[#allocation2 + $0x10] sm:$0xff]
        %v440 = vld [vmem:[#allocation2 + $0x18] sm:$0xff]
        %v441 = vld [vmem:[#allocation2 + $0x20] sm:$0xff]
        %v442 = vld [vmem:[#allocation2 + $0x28] sm:$0xff]
        %v443 = vld [vmem:[#allocation2 + $0x30] sm:$0xff]
        %v444 = vld [vmem:[#allocation2 + $0x38] sm:$0xff]
        %vm445 = vcmask 261120
        %v446 = vsel %vm445, %v437, 0.0
        %447 = vadd.xlane.f32.xlu0 %v446
        %v448 = vpop.xlane.xlu0 %447
        %v449 = vsel %vm445, %v438, 0.0
        %450 = vadd.xlane.f32.xlu0 %v449
        %v451 = vpop.xlane.xlu0 %450
        %v452 = vsel %vm445, %v439, 0.0
        %453 = vadd.xlane.f32.xlu0 %v452
        %v454 = vpop.xlane.xlu0 %453
        %v455 = vsel %vm445, %v440, 0.0
        %456 = vadd.xlane.f32.xlu0 %v455
        %v457 = vpop.xlane.xlu0 %456
        %v458 = vsel %vm445, %v441, 0.0
        %459 = vadd.xlane.f32.xlu0 %v458
        %v460 = vpop.xlane.xlu0 %459
        %v461 = vsel %vm445, %v442, 0.0
        %462 = vadd.xlane.f32.xlu0 %v461
        %v463 = vpop.xlane.xlu0 %462
        %v464 = vsel %vm445, %v443, 0.0
        %465 = vadd.xlane.f32.xlu0 %v464
        %v466 = vpop.xlane.xlu0 %465
        %v467 = vsel %vm445, %v444, 0.0
        %468 = vadd.xlane.f32.xlu0 %v467
        %v469 = vpop.xlane.xlu0 %468
        %v470 = vrcp.pop 32.0
        %v471 = vmul.f32 32.0, %v470
        %v472 = vsub.f32 1.0, %v471
        %v473 = vmul.f32 %v470, %v472
        %v474 = vadd.f32 %v470, %v473
        %vm475 = vweird.f32 %v470
        %v476 = vsel %vm475, %v470, %v474
        %v477 = vmul.f32 %v448, %v476
        %v478 = vmul.f32 %v451, %v476
        %v479 = vmul.f32 %v454, %v476
        %v480 = vmul.f32 %v457, %v476
        %v481 = vmul.f32 %v460, %v476
        %v482 = vmul.f32 %v463, %v476
        %v483 = vmul.f32 %v466, %v476
        %v484 = vmul.f32 %v469, %v476
        %v485 = vsub.f32 %v437, %v477
        %v486 = vsub.f32 %v438, %v478
        %v487 = vsub.f32 %v439, %v479
        %v488 = vsub.f32 %v440, %v480
        %v489 = vsub.f32 %v441, %v481
        %v490 = vsub.f32 %v442, %v482
        %v491 = vsub.f32 %v443, %v483
        %v492 = vsub.f32 %v444, %v484
        %v493 = vmul.f32 %v485, %v485
        %v494 = vmul.f32 %v486, %v486
        %v495 = vmul.f32 %v487, %v487
        %v496 = vmul.f32 %v488, %v488
        %v497 = vmul.f32 %v489, %v489
        %v498 = vmul.f32 %v490, %v490
        %v499 = vmul.f32 %v491, %v491
        %v500 = vmul.f32 %v492, %v492
        %v501 = vsel %vm445, %v493, 0.0
        %502 = vadd.xlane.f32.xlu0 %v501
        %v503 = vpop.xlane.xlu0 %502
        %v504 = vsel %vm445, %v494, 0.0
        %505 = vadd.xlane.f32.xlu0 %v504
        %v506 = vpop.xlane.xlu0 %505
        %v507 = vsel %vm445, %v495, 0.0
        %508 = vadd.xlane.f32.xlu0 %v507
        %v509 = vpop.xlane.xlu0 %508
        %v510 = vsel %vm445, %v496, 0.0
        %511 = vadd.xlane.f32.xlu0 %v510
        %v512 = vpop.xlane.xlu0 %511
        %v513 = vsel %vm445, %v497, 0.0
        %514 = vadd.xlane.f32.xlu0 %v513
        %v515 = vpop.xlane.xlu0 %514
        %v516 = vsel %vm445, %v498, 0.0
        %517 = vadd.xlane.f32.xlu0 %v516
        %v518 = vpop.xlane.xlu0 %517
        %v519 = vsel %vm445, %v499, 0.0
        %520 = vadd.xlane.f32.xlu0 %v519
        %v521 = vpop.xlane.xlu0 %520
        %v522 = vsel %vm445, %v500, 0.0
        %523 = vadd.xlane.f32.xlu0 %v522
        %v524 = vpop.xlane.xlu0 %523
        %v525 = vmul.f32 %v503, %v476
        %v526 = vmul.f32 %v506, %v476
        %v527 = vmul.f32 %v509, %v476
        %v528 = vmul.f32 %v512, %v476
        %v529 = vmul.f32 %v515, %v476
        %v530 = vmul.f32 %v518, %v476
        %v531 = vmul.f32 %v521, %v476
        %v532 = vmul.f32 %v524, %v476
        %v533 = vadd.f32 %v525, 1e-05
        %v534 = vadd.f32 %v526, 1e-05
        %v535 = vadd.f32 %v527, 1e-05
        %v536 = vadd.f32 %v528, 1e-05
        %v537 = vadd.f32 %v529, 1e-05
        %v538 = vadd.f32 %v530, 1e-05
        %v539 = vadd.f32 %v531, 1e-05
        %v540 = vadd.f32 %v532, 1e-05
        %v541 = vrsqrt.pop %v533
        %v542 = vmul.f32 %v541, %v533
        %v543 = vmul.f32 %v542, %v541
        %v544 = vmul.f32 0.5, %v543
        %v545 = vsub.f32 1.5, %v544
        %v546 = vmul.f32 %v541, %v545
        %vm547 = vweird.f32 %v533
        %vm548 = vweird.f32 %v541
        %vm549 = vmor %vm547, %vm548
        %v550 = vsel %vm549, %v541, %v546
        %v551 = vrsqrt.pop %v534
        %v552 = vmul.f32 %v551, %v534
        %v553 = vmul.f32 %v552, %v551
        %v554 = vmul.f32 0.5, %v553
        %v555 = vsub.f32 1.5, %v554
        %v556 = vmul.f32 %v551, %v555
        %vm557 = vweird.f32 %v534
        %vm558 = vweird.f32 %v551
        %vm559 = vmor %vm557, %vm558
        %v560 = vsel %vm559, %v551, %v556
        %v561 = vrsqrt.pop %v535
        %v562 = vmul.f32 %v561, %v535
        %v563 = vmul.f32 %v562, %v561
        %v564 = vmul.f32 0.5, %v563
        %v565 = vsub.f32 1.5, %v564
        %v566 = vmul.f32 %v561, %v565
        %vm567 = vweird.f32 %v535
        %vm568 = vweird.f32 %v561
        %vm569 = vmor %vm567, %vm568
        %v570 = vsel %vm569, %v561, %v566
        %v571 = vrsqrt.pop %v536
        %v572 = vmul.f32 %v571, %v536
        %v573 = vmul.f32 %v572, %v571
        %v574 = vmul.f32 0.5, %v573
        %v575 = vsub.f32 1.5, %v574
        %v576 = vmul.f32 %v571, %v575
        %vm577 = vweird.f32 %v536
        %vm578 = vweird.f32 %v571
        %vm579 = vmor %vm577, %vm578
        %v580 = vsel %vm579, %v571, %v576
        %v581 = vrsqrt.pop %v537
        %v582 = vmul.f32 %v581, %v537
        %v583 = vmul.f32 %v582, %v581
        %v584 = vmul.f32 0.5, %v583
        %v585 = vsub.f32 1.5, %v584
        %v586 = vmul.f32 %v581, %v585
        %vm587 = vweird.f32 %v537
        %vm588 = vweird.f32 %v581
        %vm589 = vmor %vm587, %vm588
        %v590 = vsel %vm589, %v581, %v586
        %v591 = vrsqrt.pop %v538
        %v592 = vmul.f32 %v591, %v538
        %v593 = vmul.f32 %v592, %v591
        %v594 = vmul.f32 0.5, %v593
        %v595 = vsub.f32 1.5, %v594
        %v596 = vmul.f32 %v591, %v595
        %vm597 = vweird.f32 %v538
        %vm598 = vweird.f32 %v591
        %vm599 = vmor %vm597, %vm598
        %v600 = vsel %vm599, %v591, %v596
        %v601 = vrsqrt.pop %v539
        %v602 = vmul.f32 %v601, %v539
        %v603 = vmul.f32 %v602, %v601
        %v604 = vmul.f32 0.5, %v603
        %v605 = vsub.f32 1.5, %v604
        %v606 = vmul.f32 %v601, %v605
        %vm607 = vweird.f32 %v539
        %vm608 = vweird.f32 %v601
        %vm609 = vmor %vm607, %vm608
        %v610 = vsel %vm609, %v601, %v606
        %v611 = vrsqrt.pop %v540
        %v612 = vmul.f32 %v611, %v540
        %v613 = vmul.f32 %v612, %v611
        %v614 = vmul.f32 0.5, %v613
        %v615 = vsub.f32 1.5, %v614
        %v616 = vmul.f32 %v611, %v615
        %vm617 = vweird.f32 %v540
        %vm618 = vweird.f32 %v611
        %vm619 = vmor %vm617, %vm618
        %v620 = vsel %vm619, %v611, %v616
        %v621 = vmul.f32 %v485, %v550
        %v622 = vmul.f32 %v486, %v560
        %v623 = vmul.f32 %v487, %v570
        %v624 = vmul.f32 %v488, %v580
        %v625 = vmul.f32 %v489, %v590
        %v626 = vmul.f32 %v490, %v600
        %v627 = vmul.f32 %v491, %v610
        %v628 = vmul.f32 %v492, %v620
        %v629 = vperm.slane %v415, 0
        %v630 = vmul.f32 %v621, %v629
        %v631 = vmul.f32 %v622, %v629
        %v632 = vmul.f32 %v623, %v629
        %v633 = vmul.f32 %v624, %v629
        %v634 = vmul.f32 %v625, %v629
        %v635 = vmul.f32 %v626, %v629
        %v636 = vmul.f32 %v627, %v629
        %v637 = vmul.f32 %v628, %v629
        %v638 = vperm.slane %v415, 1
        %v639 = vadd.f32 %v630, %v638
        %v640 = vadd.f32 %v631, %v638
        %v641 = vadd.f32 %v632, %v638
        %v642 = vadd.f32 %v633, %v638
        %v643 = vadd.f32 %v634, %v638
        %v644 = vadd.f32 %v635, %v638
        %v645 = vadd.f32 %v636, %v638
        %v646 = vadd.f32 %v637, %v638
        %v647 = vld [vmem:[%s327] sm:$0xff]
        %v648 = vld [vmem:[%s327 + $0x8] sm:$0xff]
        %v649 = vld [vmem:[%s327 + $0x10] sm:$0xff]
        %v650 = vld [vmem:[%s327 + $0x18] sm:$0xff]
        %v651 = vld [vmem:[%s327 + $0x20] sm:$0xff]
        %v652 = vld [vmem:[%s327 + $0x28] sm:$0xff]
        %v653 = vld [vmem:[%s327 + $0x30] sm:$0xff]
        %v654 = vld [vmem:[%s327 + $0x38] sm:$0xff]
        %v655 = vld [vmem:[%s327 + $0x40] sm:$0xff]
        %v656 = vld [vmem:[%s327 + $0x48] sm:$0xff]
        %v657 = vld [vmem:[%s327 + $0x50] sm:$0xff]
        %v658 = vld [vmem:[%s327 + $0x58] sm:$0xff]
        %v659 = vld [vmem:[%s327 + $0x60] sm:$0xff]
        %v660 = vld [vmem:[%s327 + $0x68] sm:$0xff]
        %v661 = vld [vmem:[%s327 + $0x70] sm:$0xff]
        %v662 = vld [vmem:[%s327 + $0x78] sm:$0xff]
        %v663 = vld [vmem:[%s327 + $0x80] sm:$0xff]
        %v664 = vld [vmem:[%s327 + $0x88] sm:$0xff]
        %v665 = vld [vmem:[%s327 + $0x90] sm:$0xff]
        %v666 = vld [vmem:[%s327 + $0x98] sm:$0xff]
        %v667 = vld [vmem:[%s327 + $0xa0] sm:$0xff]
        %v668 = vld [vmem:[%s327 + $0xa8] sm:$0xff]
        %v669 = vld [vmem:[%s327 + $0xb0] sm:$0xff]
        %v670 = vld [vmem:[%s327 + $0xb8] sm:$0xff]
        %v671 = vld [vmem:[%s327 + $0xc0] sm:$0xff]
        %v672 = vld [vmem:[%s327 + $0xc8] sm:$0xff]
        %v673 = vld [vmem:[%s327 + $0xd0] sm:$0xff]
        %v674 = vld [vmem:[%s327 + $0xd8] sm:$0xff]
        %v676 = vsel %vm445, %v639, 0
        %v679 = vsel %vm445, %v640, 0
        %v682 = vsel %vm445, %v641, 0
        %v685 = vsel %vm445, %v642, 0
        %v688 = vsel %vm445, %v643, 0
        %v691 = vsel %vm445, %v644, 0
        %v694 = vsel %vm445, %v645, 0
        %v697 = vsel %vm445, %v646, 0
        %699 = vmatpush.msra.mxu0 0.0
        %700 = vmatpush.msra.mxu0 0.0
        %701 = vmatpush.msra.mxu0 0.0
        %702 = vmatpush.msra.mxu0 0.0
        %703 = vmatpush.msra.mxu0 0.0
        %704 = vmatpush.msra.mxu0 0.0
        %705 = vmatpush.msra.mxu0 0.0
        %706 = vmatpush.msra.mxu0 0.0
        %707 = vmatpush.msra.mxu0 0.0
        %708 = vmatpush.msra.mxu0 0.0
        %709 = vmatpush.msra.mxu0 0.0
        %710 = vmatpush.msra.mxu0 0.0
        %711 = vmatpush.msra.mxu0 %v668
        %712 = vmatpush.msra.mxu0 %v661
        %713 = vmatpush.msra.mxu0 %v654
        %714 = vmatpush.msra.mxu0 %v647
        %715 = vmatmul.f32.gmra.mxu0 %v676
        %v716 = vpop.f32.mrf.mxu0
        %v717 = vadd.f32 0.0, %v716
        %718 = vmatmul.f32.gmra.mxu0 %v679
        %v719 = vpop.f32.mrf.mxu0
        %v720 = vadd.f32 0.0, %v719
        %721 = vmatmul.f32.gmra.mxu0 %v682
        %v722 = vpop.f32.mrf.mxu0
        %v723 = vadd.f32 0.0, %v722
        %724 = vmatmul.f32.gmra.mxu0 %v685
        %v725 = vpop.f32.mrf.mxu0
        %v726 = vadd.f32 0.0, %v725
        %727 = vmatmul.f32.gmra.mxu0 %v688
        %v728 = vpop.f32.mrf.mxu0
        %v729 = vadd.f32 0.0, %v728
        %730 = vmatmul.f32.gmra.mxu0 %v691
        %v731 = vpop.f32.mrf.mxu0
        %v732 = vadd.f32 0.0, %v731
        %733 = vmatmul.f32.gmra.mxu0 %v694
        %v734 = vpop.f32.mrf.mxu0
        %v735 = vadd.f32 0.0, %v734
        %736 = vmatmul.f32.gmra.mxu0 %v697
        %v737 = vpop.f32.mrf.mxu0
        %v738 = vadd.f32 0.0, %v737
        %739 = vdwg.mxu0
        %740 = vmatpush.msra.mxu0 0.0
        %741 = vmatpush.msra.mxu0 0.0
        %742 = vmatpush.msra.mxu0 0.0
        %743 = vmatpush.msra.mxu0 0.0
        %744 = vmatpush.msra.mxu0 0.0
        %745 = vmatpush.msra.mxu0 0.0
        %746 = vmatpush.msra.mxu0 0.0
        %747 = vmatpush.msra.mxu0 0.0
        %748 = vmatpush.msra.mxu0 0.0
        %749 = vmatpush.msra.mxu0 0.0
        %750 = vmatpush.msra.mxu0 0.0
        %751 = vmatpush.msra.mxu0 0.0
        %752 = vmatpush.msra.mxu0 %v669
        %753 = vmatpush.msra.mxu0 %v662
        %754 = vmatpush.msra.mxu0 %v655
        %755 = vmatpush.msra.mxu0 %v648
        %756 = vmatmul.f32.gmra.mxu0 %v676
        %v757 = vpop.f32.mrf.mxu0
        %v758 = vadd.f32 0.0, %v757
        %759 = vmatmul.f32.gmra.mxu0 %v679
        %v760 = vpop.f32.mrf.mxu0
        %v761 = vadd.f32 0.0, %v760
        %762 = vmatmul.f32.gmra.mxu0 %v682
        %v763 = vpop.f32.mrf.mxu0
        %v764 = vadd.f32 0.0, %v763
        %765 = vmatmul.f32.gmra.mxu0 %v685
        %v766 = vpop.f32.mrf.mxu0
        %v767 = vadd.f32 0.0, %v766
        %768 = vmatmul.f32.gmra.mxu0 %v688
        %v769 = vpop.f32.mrf.mxu0
        %v770 = vadd.f32 0.0, %v769
        %771 = vmatmul.f32.gmra.mxu0 %v691
        %v772 = vpop.f32.mrf.mxu0
        %v773 = vadd.f32 0.0, %v772
        %774 = vmatmul.f32.gmra.mxu0 %v694
        %v775 = vpop.f32.mrf.mxu0
        %v776 = vadd.f32 0.0, %v775
        %777 = vmatmul.f32.gmra.mxu0 %v697
        %v778 = vpop.f32.mrf.mxu0
        %v779 = vadd.f32 0.0, %v778
        %780 = vdwg.mxu0
        %781 = vmatpush.msra.mxu0 0.0
        %782 = vmatpush.msra.mxu0 0.0
        %783 = vmatpush.msra.mxu0 0.0
        %784 = vmatpush.msra.mxu0 0.0
        %785 = vmatpush.msra.mxu0 0.0
        %786 = vmatpush.msra.mxu0 0.0
        %787 = vmatpush.msra.mxu0 0.0
        %788 = vmatpush.msra.mxu0 0.0
        %789 = vmatpush.msra.mxu0 0.0
        %790 = vmatpush.msra.mxu0 0.0
        %791 = vmatpush.msra.mxu0 0.0
        %792 = vmatpush.msra.mxu0 0.0
        %793 = vmatpush.msra.mxu0 %v670
        %794 = vmatpush.msra.mxu0 %v663
        %795 = vmatpush.msra.mxu0 %v656
        %796 = vmatpush.msra.mxu0 %v649
        %797 = vmatmul.f32.gmra.mxu0 %v676
        %v798 = vpop.f32.mrf.mxu0
        %v799 = vadd.f32 0.0, %v798
        %800 = vmatmul.f32.gmra.mxu0 %v679
        %v801 = vpop.f32.mrf.mxu0
        %v802 = vadd.f32 0.0, %v801
        %803 = vmatmul.f32.gmra.mxu0 %v682
        %v804 = vpop.f32.mrf.mxu0
        %v805 = vadd.f32 0.0, %v804
        %806 = vmatmul.f32.gmra.mxu0 %v685
        %v807 = vpop.f32.mrf.mxu0
        %v808 = vadd.f32 0.0, %v807
        %809 = vmatmul.f32.gmra.mxu0 %v688
        %v810 = vpop.f32.mrf.mxu0
        %v811 = vadd.f32 0.0, %v810
        %812 = vmatmul.f32.gmra.mxu0 %v691
        %v813 = vpop.f32.mrf.mxu0
        %v814 = vadd.f32 0.0, %v813
        %815 = vmatmul.f32.gmra.mxu0 %v694
        %v816 = vpop.f32.mrf.mxu0
        %v817 = vadd.f32 0.0, %v816
        %818 = vmatmul.f32.gmra.mxu0 %v697
        %v819 = vpop.f32.mrf.mxu0
        %v820 = vadd.f32 0.0, %v819
        %821 = vdwg.mxu0
        %822 = vmatpush.msra.mxu0 0.0
        %823 = vmatpush.msra.mxu0 0.0
        %824 = vmatpush.msra.mxu0 0.0
        %825 = vmatpush.msra.mxu0 0.0
        %826 = vmatpush.msra.mxu0 0.0
        %827 = vmatpush.msra.mxu0 0.0
        %828 = vmatpush.msra.mxu0 0.0
        %829 = vmatpush.msra.mxu0 0.0
        %830 = vmatpush.msra.mxu0 0.0
        %831 = vmatpush.msra.mxu0 0.0
        %832 = vmatpush.msra.mxu0 0.0
        %833 = vmatpush.msra.mxu0 0.0
        %834 = vmatpush.msra.mxu0 %v671
        %835 = vmatpush.msra.mxu0 %v664
        %836 = vmatpush.msra.mxu0 %v657
        %837 = vmatpush.msra.mxu0 %v650
        %838 = vmatmul.f32.gmra.mxu0 %v676
        %v839 = vpop.f32.mrf.mxu0
        %v840 = vadd.f32 0.0, %v839
        %841 = vmatmul.f32.gmra.mxu0 %v679
        %v842 = vpop.f32.mrf.mxu0
        %v843 = vadd.f32 0.0, %v842
        %844 = vmatmul.f32.gmra.mxu0 %v682
        %v845 = vpop.f32.mrf.mxu0
        %v846 = vadd.f32 0.0, %v845
        %847 = vmatmul.f32.gmra.mxu0 %v685
        %v848 = vpop.f32.mrf.mxu0
        %v849 = vadd.f32 0.0, %v848
        %850 = vmatmul.f32.gmra.mxu0 %v688
        %v851 = vpop.f32.mrf.mxu0
        %v852 = vadd.f32 0.0, %v851
        %853 = vmatmul.f32.gmra.mxu0 %v691
        %v854 = vpop.f32.mrf.mxu0
        %v855 = vadd.f32 0.0, %v854
        %856 = vmatmul.f32.gmra.mxu0 %v694
        %v857 = vpop.f32.mrf.mxu0
        %v858 = vadd.f32 0.0, %v857
        %859 = vmatmul.f32.gmra.mxu0 %v697
        %v860 = vpop.f32.mrf.mxu0
        %v861 = vadd.f32 0.0, %v860
        %862 = vdwg.mxu0
        %863 = vmatpush.msra.mxu0 0.0
        %864 = vmatpush.msra.mxu0 0.0
        %865 = vmatpush.msra.mxu0 0.0
        %866 = vmatpush.msra.mxu0 0.0
        %867 = vmatpush.msra.mxu0 0.0
        %868 = vmatpush.msra.mxu0 0.0
        %869 = vmatpush.msra.mxu0 0.0
        %870 = vmatpush.msra.mxu0 0.0
        %871 = vmatpush.msra.mxu0 0.0
        %872 = vmatpush.msra.mxu0 0.0
        %873 = vmatpush.msra.mxu0 0.0
        %874 = vmatpush.msra.mxu0 0.0
        %875 = vmatpush.msra.mxu0 %v672
        %876 = vmatpush.msra.mxu0 %v665
        %877 = vmatpush.msra.mxu0 %v658
        %878 = vmatpush.msra.mxu0 %v651
        %879 = vmatmul.f32.gmra.mxu0 %v676
        %v880 = vpop.f32.mrf.mxu0
        %v881 = vadd.f32 0.0, %v880
        %882 = vmatmul.f32.gmra.mxu0 %v679
        %v883 = vpop.f32.mrf.mxu0
        %v884 = vadd.f32 0.0, %v883
        %885 = vmatmul.f32.gmra.mxu0 %v682
        %v886 = vpop.f32.mrf.mxu0
        %v887 = vadd.f32 0.0, %v886
        %888 = vmatmul.f32.gmra.mxu0 %v685
        %v889 = vpop.f32.mrf.mxu0
        %v890 = vadd.f32 0.0, %v889
        %891 = vmatmul.f32.gmra.mxu0 %v688
        %v892 = vpop.f32.mrf.mxu0
        %v893 = vadd.f32 0.0, %v892
        %894 = vmatmul.f32.gmra.mxu0 %v691
        %v895 = vpop.f32.mrf.mxu0
        %v896 = vadd.f32 0.0, %v895
        %897 = vmatmul.f32.gmra.mxu0 %v694
        %v898 = vpop.f32.mrf.mxu0
        %v899 = vadd.f32 0.0, %v898
        %900 = vmatmul.f32.gmra.mxu0 %v697
        %v901 = vpop.f32.mrf.mxu0
        %v902 = vadd.f32 0.0, %v901
        %903 = vdwg.mxu0
        %904 = vmatpush.msra.mxu0 0.0
        %905 = vmatpush.msra.mxu0 0.0
        %906 = vmatpush.msra.mxu0 0.0
        %907 = vmatpush.msra.mxu0 0.0
        %908 = vmatpush.msra.mxu0 0.0
        %909 = vmatpush.msra.mxu0 0.0
        %910 = vmatpush.msra.mxu0 0.0
        %911 = vmatpush.msra.mxu0 0.0
        %912 = vmatpush.msra.mxu0 0.0
        %913 = vmatpush.msra.mxu0 0.0
        %914 = vmatpush.msra.mxu0 0.0
        %915 = vmatpush.msra.mxu0 0.0
        %916 = vmatpush.msra.mxu0 %v673
        %917 = vmatpush.msra.mxu0 %v666
        %918 = vmatpush.msra.mxu0 %v659
        %919 = vmatpush.msra.mxu0 %v652
        %920 = vmatmul.f32.gmra.mxu0 %v676
        %v921 = vpop.f32.mrf.mxu0
        %v922 = vadd.f32 0.0, %v921
        %923 = vmatmul.f32.gmra.mxu0 %v679
        %v924 = vpop.f32.mrf.mxu0
        %v925 = vadd.f32 0.0, %v924
        %926 = vmatmul.f32.gmra.mxu0 %v682
        %v927 = vpop.f32.mrf.mxu0
        %v928 = vadd.f32 0.0, %v927
        %929 = vmatmul.f32.gmra.mxu0 %v685
        %v930 = vpop.f32.mrf.mxu0
        %v931 = vadd.f32 0.0, %v930
        %932 = vmatmul.f32.gmra.mxu0 %v688
        %v933 = vpop.f32.mrf.mxu0
        %v934 = vadd.f32 0.0, %v933
        %935 = vmatmul.f32.gmra.mxu0 %v691
        %v936 = vpop.f32.mrf.mxu0
        %v937 = vadd.f32 0.0, %v936
        %938 = vmatmul.f32.gmra.mxu0 %v694
        %v939 = vpop.f32.mrf.mxu0
        %v940 = vadd.f32 0.0, %v939
        %941 = vmatmul.f32.gmra.mxu0 %v697
        %v942 = vpop.f32.mrf.mxu0
        %v943 = vadd.f32 0.0, %v942
        %944 = vdwg.mxu0
        %945 = vmatpush.msra.mxu0 0.0
        %946 = vmatpush.msra.mxu0 0.0
        %947 = vmatpush.msra.mxu0 0.0
        %948 = vmatpush.msra.mxu0 0.0
        %949 = vmatpush.msra.mxu0 0.0
        %950 = vmatpush.msra.mxu0 0.0
        %951 = vmatpush.msra.mxu0 0.0
        %952 = vmatpush.msra.mxu0 0.0
        %953 = vmatpush.msra.mxu0 0.0
        %954 = vmatpush.msra.mxu0 0.0
        %955 = vmatpush.msra.mxu0 0.0
        %956 = vmatpush.msra.mxu0 0.0
        %957 = vmatpush.msra.mxu0 %v674
        %958 = vmatpush.msra.mxu0 %v667
        %959 = vmatpush.msra.mxu0 %v660
        %960 = vmatpush.msra.mxu0 %v653
        %961 = vmatmul.f32.gmra.mxu0 %v676
        %v962 = vpop.f32.mrf.mxu0
        %v963 = vadd.f32 0.0, %v962
        %964 = vmatmul.f32.gmra.mxu0 %v679
        %v965 = vpop.f32.mrf.mxu0
        %v966 = vadd.f32 0.0, %v965
        %967 = vmatmul.f32.gmra.mxu0 %v682
        %v968 = vpop.f32.mrf.mxu0
        %v969 = vadd.f32 0.0, %v968
        %970 = vmatmul.f32.gmra.mxu0 %v685
        %v971 = vpop.f32.mrf.mxu0
        %v972 = vadd.f32 0.0, %v971
        %973 = vmatmul.f32.gmra.mxu0 %v688
        %v974 = vpop.f32.mrf.mxu0
        %v975 = vadd.f32 0.0, %v974
        %976 = vmatmul.f32.gmra.mxu0 %v691
        %v977 = vpop.f32.mrf.mxu0
        %v978 = vadd.f32 0.0, %v977
        %979 = vmatmul.f32.gmra.mxu0 %v694
        %v980 = vpop.f32.mrf.mxu0
        %v981 = vadd.f32 0.0, %v980
        %982 = vmatmul.f32.gmra.mxu0 %v697
        %v983 = vpop.f32.mrf.mxu0
        %v984 = vadd.f32 0.0, %v983
        %985 = vdwg.mxu0
        %v986 = vperm.slane %v415, 7
        %v987 = vadd.f32 %v963, %v986
        %v988 = vadd.f32 %v966, %v986
        %v989 = vadd.f32 %v969, %v986
        %v990 = vadd.f32 %v972, %v986
        %v991 = vadd.f32 %v975, %v986
        %v992 = vadd.f32 %v978, %v986
        %v993 = vadd.f32 %v981, %v986
        %v994 = vadd.f32 %v984, %v986
        %v995 = vmul.f32 %v987, 0.17677669
        %v996 = vmul.f32 %v988, 0.17677669
        %v997 = vmul.f32 %v989, 0.17677669
        %v998 = vmul.f32 %v990, 0.17677669
        %v999 = vmul.f32 %v991, 0.17677669
        %v1000 = vmul.f32 %v992, 0.17677669
        %v1001 = vmul.f32 %v993, 0.17677669
        %v1002 = vmul.f32 %v994, 0.17677669
        %v1003 = vld [vmem:[%s393] sm:$0xf]
        %v1004 = vld [vmem:[%s393 + $0x4] sm:$0xf]
        %v1005 = vld [vmem:[%s393 + $0x8] sm:$0xf]
        %v1006 = vld [vmem:[%s393 + $0xc] sm:$0xf]
        %v1007 = vld [vmem:[%s393 + $0x10] sm:$0xf]
        %v1008 = vld [vmem:[%s393 + $0x14] sm:$0xf]
        %v1009 = vld [vmem:[%s393 + $0x18] sm:$0xf]
        %v1010 = vld [vmem:[%s393 + $0x1c] sm:$0xf]
        %v1011 = vunpack.c.l.bf16 %v1003
        %v1012 = vunpack.c.l.bf16 %v1004
        %v1013 = vunpack.c.l.bf16 %v1005
        %v1014 = vunpack.c.l.bf16 %v1006
        %v1015 = vunpack.c.l.bf16 %v1007
        %v1016 = vunpack.c.l.bf16 %v1008
        %v1017 = vunpack.c.l.bf16 %v1009
        %v1018 = vunpack.c.l.bf16 %v1010
        %1020 = vset.pattern.permute.xlu0 1
        %1021 = vperm.xlu0 %1020, %v987
        %v1022 = vpop.permute.xlu0 %1021
        %1025 = vset.pattern.permute.xlu0 1
        %1026 = vperm.xlu0 %1025, %v988
        %v1027 = vpop.permute.xlu0 %1026
        %1030 = vset.pattern.permute.xlu0 1
        %1031 = vperm.xlu0 %1030, %v989
        %v1032 = vpop.permute.xlu0 %1031
        %1035 = vset.pattern.permute.xlu0 1
        %1036 = vperm.xlu0 %1035, %v990
        %v1037 = vpop.permute.xlu0 %1036
        %1040 = vset.pattern.permute.xlu0 1
        %1041 = vperm.xlu0 %1040, %v991
        %v1042 = vpop.permute.xlu0 %1041
        %1045 = vset.pattern.permute.xlu0 1
        %1046 = vperm.xlu0 %1045, %v992
        %v1047 = vpop.permute.xlu0 %1046
        %1050 = vset.pattern.permute.xlu0 1
        %1051 = vperm.xlu0 %1050, %v993
        %v1052 = vpop.permute.xlu0 %1051
        %1055 = vset.pattern.permute.xlu0 1
        %1056 = vperm.xlu0 %1055, %v994
        %v1057 = vpop.permute.xlu0 %1056
        %v1059 = vmul.f32 %v1022, %v1011
        %v1060 = vmul.f32 %v1027, %v1012
        %v1061 = vmul.f32 %v1032, %v1013
        %v1062 = vmul.f32 %v1037, %v1014
        %v1063 = vmul.f32 %v1042, %v1015
        %v1064 = vmul.f32 %v1047, %v1016
        %v1065 = vmul.f32 %v1052, %v1017
        %v1066 = vmul.f32 %v1057, %v1018
        %v1067 = vld [vmem:[%s2] sm:$0xff]
        %v1068 = vld [vmem:[%s2 + $0x8] sm:$0xff]
        %v1069 = vld [vmem:[%s2 + $0x10] sm:$0xff]
        %v1070 = vld [vmem:[%s2 + $0x18] sm:$0xff]
        %v1071 = vld [vmem:[%s2 + $0x20] sm:$0xff]
        %v1072 = vld [vmem:[%s2 + $0x28] sm:$0xff]
        %v1073 = vld [vmem:[%s2 + $0x30] sm:$0xff]
        %v1074 = vld [vmem:[%s2 + $0x38] sm:$0xff]
        %v1075 = vadd.f32 %v1059, %v1067
        %v1076 = vadd.f32 %v1060, %v1068
        %v1077 = vadd.f32 %v1061, %v1069
        %v1078 = vadd.f32 %v1062, %v1070
        %v1079 = vadd.f32 %v1063, %v1071
        %v1080 = vadd.f32 %v1064, %v1072
        %v1081 = vadd.f32 %v1065, %v1073
        %v1082 = vadd.f32 %v1066, %v1074
        %v1084 = vsel %vm445, %v717, 0
        %v1087 = vsel %vm445, %v720, 0
        %v1090 = vsel %vm445, %v723, 0
        %v1093 = vsel %vm445, %v726, 0
        %v1096 = vsel %vm445, %v729, 0
        %v1099 = vsel %vm445, %v732, 0
        %v1102 = vsel %vm445, %v735, 0
        %v1105 = vsel %vm445, %v738, 0
        %v1108 = vsel %vm445, %v799, 0
        %v1111 = vsel %vm445, %v802, 0
        %v1114 = vsel %vm445, %v805, 0
        %v1117 = vsel %vm445, %v808, 0
        %v1120 = vsel %vm445, %v811, 0
        %v1123 = vsel %vm445, %v814, 0
        %v1126 = vsel %vm445, %v817, 0
        %v1129 = vsel %vm445, %v820, 0
        %1131 = vmatpush.xpose.msra.mxu0 0.0
        %1132 = vmatpush.xpose.msra.mxu0 0.0
        %1133 = vmatpush.xpose.msra.mxu0 0.0
        %1134 = vmatpush.xpose.msra.mxu0 0.0
        %1135 = vmatpush.xpose.msra.mxu0 0.0
        %1136 = vmatpush.xpose.msra.mxu0 0.0
        %1137 = vmatpush.xpose.msra.mxu0 0.0
        %1138 = vmatpush.xpose.msra.mxu0 0.0
        %1139 = vmatpush.xpose.msra.mxu0 %v1129
        %1140 = vmatpush.xpose.msra.mxu0 %v1126
        %1141 = vmatpush.xpose.msra.mxu0 %v1123
        %1142 = vmatpush.xpose.msra.mxu0 %v1120
        %1143 = vmatpush.xpose.msra.mxu0 %v1117
        %1144 = vmatpush.xpose.msra.mxu0 %v1114
        %1145 = vmatpush.xpose.msra.mxu0 %v1111
        %1146 = vmatpush.xpose.msra.mxu0 %v1108
        %1147 = vmatmul.f32.gmra.mxu0 %v1084
        %v1148 = vpop.f32.mrf.mxu0
        %v1149 = vadd.f32 0.0, %v1148
        %1150 = vmatmul.f32.gmra.mxu0 %v1087
        %v1151 = vpop.f32.mrf.mxu0
        %v1152 = vadd.f32 0.0, %v1151
        %1153 = vmatmul.f32.gmra.mxu0 %v1090
        %v1154 = vpop.f32.mrf.mxu0
        %v1155 = vadd.f32 0.0, %v1154
        %1156 = vmatmul.f32.gmra.mxu0 %v1093
        %v1157 = vpop.f32.mrf.mxu0
        %v1158 = vadd.f32 0.0, %v1157
        %1159 = vmatmul.f32.gmra.mxu0 %v1096
        %v1160 = vpop.f32.mrf.mxu0
        %v1161 = vadd.f32 0.0, %v1160
        %1162 = vmatmul.f32.gmra.mxu0 %v1099
        %v1163 = vpop.f32.mrf.mxu0
        %v1164 = vadd.f32 0.0, %v1163
        %1165 = vmatmul.f32.gmra.mxu0 %v1102
        %v1166 = vpop.f32.mrf.mxu0
        %v1167 = vadd.f32 0.0, %v1166
        %1168 = vmatmul.f32.gmra.mxu0 %v1105
        %v1169 = vpop.f32.mrf.mxu0
        %v1170 = vadd.f32 0.0, %v1169
        %1171 = vdwg.mxu0
        %1173 = vset.pattern.permute.xlu0 0
        %1174 = vperm.xlu0 %1173, %v995
        %v1175 = vpop.permute.xlu0 %1174
        %1178 = vset.pattern.permute.xlu0 0
        %1179 = vperm.xlu0 %1178, %v996
        %v1180 = vpop.permute.xlu0 %1179
        %1183 = vset.pattern.permute.xlu0 0
        %1184 = vperm.xlu0 %1183, %v997
        %v1185 = vpop.permute.xlu0 %1184
        %1188 = vset.pattern.permute.xlu0 0
        %1189 = vperm.xlu0 %1188, %v998
        %v1190 = vpop.permute.xlu0 %1189
        %1193 = vset.pattern.permute.xlu0 0
        %1194 = vperm.xlu0 %1193, %v999
        %v1195 = vpop.permute.xlu0 %1194
        %1198 = vset.pattern.permute.xlu0 0
        %1199 = vperm.xlu0 %1198, %v1000
        %v1200 = vpop.permute.xlu0 %1199
        %1203 = vset.pattern.permute.xlu0 0
        %1204 = vperm.xlu0 %1203, %v1001
        %v1205 = vpop.permute.xlu0 %1204
        %1208 = vset.pattern.permute.xlu0 0
        %1209 = vperm.xlu0 %1208, %v1002
        %v1210 = vpop.permute.xlu0 %1209
        %v1212 = vmul.f32 %v1175, %v1149
        %v1213 = vmul.f32 %v1180, %v1152
        %v1214 = vmul.f32 %v1185, %v1155
        %v1215 = vmul.f32 %v1190, %v1158
        %v1216 = vmul.f32 %v1195, %v1161
        %v1217 = vmul.f32 %v1200, %v1164
        %v1218 = vmul.f32 %v1205, %v1167
        %v1219 = vmul.f32 %v1210, %v1170
        %v1220 = vadd.f32 %v1212, %v1075
        %v1221 = vadd.f32 %v1213, %v1076
        %v1222 = vadd.f32 %v1214, %v1077
        %v1223 = vadd.f32 %v1215, %v1078
        %v1224 = vadd.f32 %v1216, %v1079
        %v1225 = vadd.f32 %v1217, %v1080
        %v1226 = vadd.f32 %v1218, %v1081
        %v1227 = vadd.f32 %v1219, %v1082
        %vm1228 = vcmask 523264
        %v1229 = vsel %vm1228, %v1220, -inf
        %1230 = vmax.xlane.f32.xlu0 %v1229
        %v1231 = vpop.xlane.xlu0 %1230
        %v1232 = vsel %vm1228, %v1221, -inf
        %1233 = vmax.xlane.f32.xlu0 %v1232
        %v1234 = vpop.xlane.xlu0 %1233
        %v1235 = vsel %vm1228, %v1222, -inf
        %1236 = vmax.xlane.f32.xlu0 %v1235
        %v1237 = vpop.xlane.xlu0 %1236
        %v1238 = vsel %vm1228, %v1223, -inf
        %1239 = vmax.xlane.f32.xlu0 %v1238
        %v1240 = vpop.xlane.xlu0 %1239
        %v1241 = vsel %vm1228, %v1224, -inf
        %1242 = vmax.xlane.f32.xlu0 %v1241
        %v1243 = vpop.xlane.xlu0 %1242
        %v1244 = vsel %vm1228, %v1225, -inf
        %1245 = vmax.xlane.f32.xlu0 %v1244
        %v1246 = vpop.xlane.xlu0 %1245
        %v1247 = vsel %vm1228, %v1226, -inf
        %1248 = vmax.xlane.f32.xlu0 %v1247
        %v1249 = vpop.xlane.xlu0 %1248
        %v1250 = vsel %vm1228, %v1227, -inf
        %1251 = vmax.xlane.f32.xlu0 %v1250
        %v1252 = vpop.xlane.xlu0 %1251
        %v1253 = vsub.f32 %v1220, %v1231
        %v1254 = vsub.f32 %v1221, %v1234
        %v1255 = vsub.f32 %v1222, %v1237
        %v1256 = vsub.f32 %v1223, %v1240
        %v1257 = vsub.f32 %v1224, %v1243
        %v1258 = vsub.f32 %v1225, %v1246
        %v1259 = vsub.f32 %v1226, %v1249
        %v1260 = vsub.f32 %v1227, %v1252
        %v1261 = vmul.f32 %v1253, 1.442695
        %v1262 = vpow.pop %v1261
        %v1263 = vmul.f32 %v1254, 1.442695
        %v1264 = vpow.pop %v1263
        %v1265 = vmul.f32 %v1255, 1.442695
        %v1266 = vpow.pop %v1265
        %v1267 = vmul.f32 %v1256, 1.442695
        %v1268 = vpow.pop %v1267
        %v1269 = vmul.f32 %v1257, 1.442695
        %v1270 = vpow.pop %v1269
        %v1271 = vmul.f32 %v1258, 1.442695
        %v1272 = vpow.pop %v1271
        %v1273 = vmul.f32 %v1259, 1.442695
        %v1274 = vpow.pop %v1273
        %v1275 = vmul.f32 %v1260, 1.442695
        %v1276 = vpow.pop %v1275
        %v1277 = vsel %vm1228, %v1262, 0.0
        %1278 = vadd.xlane.f32.xlu0 %v1277
        %v1279 = vpop.xlane.xlu0 %1278
        %v1280 = vsel %vm1228, %v1264, 0.0
        %1281 = vadd.xlane.f32.xlu0 %v1280
        %v1282 = vpop.xlane.xlu0 %1281
        %v1283 = vsel %vm1228, %v1266, 0.0
        %1284 = vadd.xlane.f32.xlu0 %v1283
        %v1285 = vpop.xlane.xlu0 %1284
        %v1286 = vsel %vm1228, %v1268, 0.0
        %1287 = vadd.xlane.f32.xlu0 %v1286
        %v1288 = vpop.xlane.xlu0 %1287
        %v1289 = vsel %vm1228, %v1270, 0.0
        %1290 = vadd.xlane.f32.xlu0 %v1289
        %v1291 = vpop.xlane.xlu0 %1290
        %v1292 = vsel %vm1228, %v1272, 0.0
        %1293 = vadd.xlane.f32.xlu0 %v1292
        %v1294 = vpop.xlane.xlu0 %1293
        %v1295 = vsel %vm1228, %v1274, 0.0
        %1296 = vadd.xlane.f32.xlu0 %v1295
        %v1297 = vpop.xlane.xlu0 %1296
        %v1298 = vsel %vm1228, %v1276, 0.0
        %1299 = vadd.xlane.f32.xlu0 %v1298
        %v1300 = vpop.xlane.xlu0 %1299
        %v1301 = vrcp.pop %v1279
        %v1302 = vmul.f32 %v1279, %v1301
        %v1303 = vsub.f32 1.0, %v1302
        %v1304 = vmul.f32 %v1301, %v1303
        %v1305 = vadd.f32 %v1301, %v1304
        %vm1306 = vweird.f32 %v1279
        %vm1307 = vweird.f32 %v1301
        %vm1308 = vmor %vm1306, %vm1307
        %v1309 = vsel %vm1308, %v1301, %v1305
        %v1310 = vand.u32 2147483647, %v1279
        %vm1311 = vcmp.eq.f32.partialorder %v1310, 8.507059e+37
        %v1312 = vand.u32 %v1279, 2147483648
        %v1313 = vor.u32 1.1754944e-38, %v1312
        %v1314 = vsel %vm1311, %v1313, %v1309
        %v1315 = vrcp.pop %v1282
        %v1316 = vmul.f32 %v1282, %v1315
        %v1317 = vsub.f32 1.0, %v1316
        %v1318 = vmul.f32 %v1315, %v1317
        %v1319 = vadd.f32 %v1315, %v1318
        %vm1320 = vweird.f32 %v1282
        %vm1321 = vweird.f32 %v1315
        %vm1322 = vmor %vm1320, %vm1321
        %v1323 = vsel %vm1322, %v1315, %v1319
        %v1324 = vand.u32 2147483647, %v1282
        %vm1325 = vcmp.eq.f32.partialorder %v1324, 8.507059e+37
        %v1326 = vand.u32 %v1282, 2147483648
        %v1327 = vor.u32 1.1754944e-38, %v1326
        %v1328 = vsel %vm1325, %v1327, %v1323
        %v1329 = vrcp.pop %v1285
        %v1330 = vmul.f32 %v1285, %v1329
        %v1331 = vsub.f32 1.0, %v1330
        %v1332 = vmul.f32 %v1329, %v1331
        %v1333 = vadd.f32 %v1329, %v1332
        %vm1334 = vweird.f32 %v1285
        %vm1335 = vweird.f32 %v1329
        %vm1336 = vmor %vm1334, %vm1335
        %v1337 = vsel %vm1336, %v1329, %v1333
        %v1338 = vand.u32 2147483647, %v1285
        %vm1339 = vcmp.eq.f32.partialorder %v1338, 8.507059e+37
        %v1340 = vand.u32 %v1285, 2147483648
        %v1341 = vor.u32 1.1754944e-38, %v1340
        %v1342 = vsel %vm1339, %v1341, %v1337
        %v1343 = vrcp.pop %v1288
        %v1344 = vmul.f32 %v1288, %v1343
        %v1345 = vsub.f32 1.0, %v1344
        %v1346 = vmul.f32 %v1343, %v1345
        %v1347 = vadd.f32 %v1343, %v1346
        %vm1348 = vweird.f32 %v1288
        %vm1349 = vweird.f32 %v1343
        %vm1350 = vmor %vm1348, %vm1349
        %v1351 = vsel %vm1350, %v1343, %v1347
        %v1352 = vand.u32 2147483647, %v1288
        %vm1353 = vcmp.eq.f32.partialorder %v1352, 8.507059e+37
        %v1354 = vand.u32 %v1288, 2147483648
        %v1355 = vor.u32 1.1754944e-38, %v1354
        %v1356 = vsel %vm1353, %v1355, %v1351
        %v1357 = vrcp.pop %v1291
        %v1358 = vmul.f32 %v1291, %v1357
        %v1359 = vsub.f32 1.0, %v1358
        %v1360 = vmul.f32 %v1357, %v1359
        %v1361 = vadd.f32 %v1357, %v1360
        %vm1362 = vweird.f32 %v1291
        %vm1363 = vweird.f32 %v1357
        %vm1364 = vmor %vm1362, %vm1363
        %v1365 = vsel %vm1364, %v1357, %v1361
        %v1366 = vand.u32 2147483647, %v1291
        %vm1367 = vcmp.eq.f32.partialorder %v1366, 8.507059e+37
        %v1368 = vand.u32 %v1291, 2147483648
        %v1369 = vor.u32 1.1754944e-38, %v1368
        %v1370 = vsel %vm1367, %v1369, %v1365
        %v1371 = vrcp.pop %v1294
        %v1372 = vmul.f32 %v1294, %v1371
        %v1373 = vsub.f32 1.0, %v1372
        %v1374 = vmul.f32 %v1371, %v1373
        %v1375 = vadd.f32 %v1371, %v1374
        %vm1376 = vweird.f32 %v1294
        %vm1377 = vweird.f32 %v1371
        %vm1378 = vmor %vm1376, %vm1377
        %v1379 = vsel %vm1378, %v1371, %v1375
        %v1380 = vand.u32 2147483647, %v1294
        %vm1381 = vcmp.eq.f32.partialorder %v1380, 8.507059e+37
        %v1382 = vand.u32 %v1294, 2147483648
        %v1383 = vor.u32 1.1754944e-38, %v1382
        %v1384 = vsel %vm1381, %v1383, %v1379
        %v1385 = vrcp.pop %v1297
        %v1386 = vmul.f32 %v1297, %v1385
        %v1387 = vsub.f32 1.0, %v1386
        %v1388 = vmul.f32 %v1385, %v1387
        %v1389 = vadd.f32 %v1385, %v1388
        %vm1390 = vweird.f32 %v1297
        %vm1391 = vweird.f32 %v1385
        %vm1392 = vmor %vm1390, %vm1391
        %v1393 = vsel %vm1392, %v1385, %v1389
        %v1394 = vand.u32 2147483647, %v1297
        %vm1395 = vcmp.eq.f32.partialorder %v1394, 8.507059e+37
        %v1396 = vand.u32 %v1297, 2147483648
        %v1397 = vor.u32 1.1754944e-38, %v1396
        %v1398 = vsel %vm1395, %v1397, %v1393
        %v1399 = vrcp.pop %v1300
        %v1400 = vmul.f32 %v1300, %v1399
        %v1401 = vsub.f32 1.0, %v1400
        %v1402 = vmul.f32 %v1399, %v1401
        %v1403 = vadd.f32 %v1399, %v1402
        %vm1404 = vweird.f32 %v1300
        %vm1405 = vweird.f32 %v1399
        %vm1406 = vmor %vm1404, %vm1405
        %v1407 = vsel %vm1406, %v1399, %v1403
        %v1408 = vand.u32 2147483647, %v1300
        %vm1409 = vcmp.eq.f32.partialorder %v1408, 8.507059e+37
        %v1410 = vand.u32 %v1300, 2147483648
        %v1411 = vor.u32 1.1754944e-38, %v1410
        %v1412 = vsel %vm1409, %v1411, %v1407
        %v1413 = vmul.f32 %v1262, %v1314
        %v1414 = vmul.f32 %v1264, %v1328
        %v1415 = vmul.f32 %v1266, %v1342
        %v1416 = vmul.f32 %v1268, %v1356
        %v1417 = vmul.f32 %v1270, %v1370
        %v1418 = vmul.f32 %v1272, %v1384
        %v1419 = vmul.f32 %v1274, %v1398
        %v1420 = vmul.f32 %v1276, %v1412
        %1421 = vrot.lane.b32.xlu0 %v717, 96
        %v1422 = vpop.permute.xlu0 %1421
        %1423 = vrot.lane.b32.xlu0 %v720, 96
        %v1424 = vpop.permute.xlu0 %1423
        %1425 = vrot.lane.b32.xlu0 %v723, 96
        %v1426 = vpop.permute.xlu0 %1425
        %1427 = vrot.lane.b32.xlu0 %v726, 96
        %v1428 = vpop.permute.xlu0 %1427
        %1429 = vrot.lane.b32.xlu0 %v729, 96
        %v1430 = vpop.permute.xlu0 %1429
        %1431 = vrot.lane.b32.xlu0 %v732, 96
        %v1432 = vpop.permute.xlu0 %1431
        %1433 = vrot.lane.b32.xlu0 %v735, 96
        %v1434 = vpop.permute.xlu0 %1433
        %1435 = vrot.lane.b32.xlu0 %v738, 96
        %v1436 = vpop.permute.xlu0 %1435
        %1437 = vrot.lane.b32.xlu0 %v799, 96
        %v1438 = vpop.permute.xlu0 %1437
        %1439 = vrot.lane.b32.xlu0 %v802, 96
        %v1440 = vpop.permute.xlu0 %1439
        %1441 = vrot.lane.b32.xlu0 %v805, 96
        %v1442 = vpop.permute.xlu0 %1441
        %1443 = vrot.lane.b32.xlu0 %v808, 96
        %v1444 = vpop.permute.xlu0 %1443
        %1445 = vrot.lane.b32.xlu0 %v811, 96
        %v1446 = vpop.permute.xlu0 %1445
        %1447 = vrot.lane.b32.xlu0 %v814, 96
        %v1448 = vpop.permute.xlu0 %1447
        %1449 = vrot.lane.b32.xlu0 %v817, 96
        %v1450 = vpop.permute.xlu0 %1449
        %1451 = vrot.lane.b32.xlu0 %v820, 96
        %v1452 = vpop.permute.xlu0 %1451
        %v1453 = vsel %vm445, %v1422, 0
        %v1455 = vsel %vm445, %v1424, 0
        %v1457 = vsel %vm445, %v1426, 0
        %v1459 = vsel %vm445, %v1428, 0
        %v1461 = vsel %vm445, %v1430, 0
        %v1463 = vsel %vm445, %v1432, 0
        %v1465 = vsel %vm445, %v1434, 0
        %v1467 = vsel %vm445, %v1436, 0
        %v1469 = vsel %vm445, %v1438, 0
        %v1471 = vsel %vm445, %v1440, 0
        %v1473 = vsel %vm445, %v1442, 0
        %v1475 = vsel %vm445, %v1444, 0
        %v1477 = vsel %vm445, %v1446, 0
        %v1479 = vsel %vm445, %v1448, 0
        %v1481 = vsel %vm445, %v1450, 0
        %v1483 = vsel %vm445, %v1452, 0
        %1485 = vmatpush.xpose.msra.mxu0 0.0
        %1486 = vmatpush.xpose.msra.mxu0 0.0
        %1487 = vmatpush.xpose.msra.mxu0 0.0
        %1488 = vmatpush.xpose.msra.mxu0 0.0
        %1489 = vmatpush.xpose.msra.mxu0 0.0
        %1490 = vmatpush.xpose.msra.mxu0 0.0
        %1491 = vmatpush.xpose.msra.mxu0 0.0
        %1492 = vmatpush.xpose.msra.mxu0 0.0
        %1493 = vmatpush.xpose.msra.mxu0 %v1483
        %1494 = vmatpush.xpose.msra.mxu0 %v1481
        %1495 = vmatpush.xpose.msra.mxu0 %v1479
        %1496 = vmatpush.xpose.msra.mxu0 %v1477
        %1497 = vmatpush.xpose.msra.mxu0 %v1475
        %1498 = vmatpush.xpose.msra.mxu0 %v1473
        %1499 = vmatpush.xpose.msra.mxu0 %v1471
        %1500 = vmatpush.xpose.msra.mxu0 %v1469
        %1501 = vmatmul.f32.gmra.mxu0 %v1453
        %v1502 = vpop.f32.mrf.mxu0
        %v1503 = vadd.f32 0.0, %v1502
        %1504 = vmatmul.f32.gmra.mxu0 %v1455
        %v1505 = vpop.f32.mrf.mxu0
        %v1506 = vadd.f32 0.0, %v1505
        %1507 = vmatmul.f32.gmra.mxu0 %v1457
        %v1508 = vpop.f32.mrf.mxu0
        %v1509 = vadd.f32 0.0, %v1508
        %1510 = vmatmul.f32.gmra.mxu0 %v1459
        %v1511 = vpop.f32.mrf.mxu0
        %v1512 = vadd.f32 0.0, %v1511
        %1513 = vmatmul.f32.gmra.mxu0 %v1461
        %v1514 = vpop.f32.mrf.mxu0
        %v1515 = vadd.f32 0.0, %v1514
        %1516 = vmatmul.f32.gmra.mxu0 %v1463
        %v1517 = vpop.f32.mrf.mxu0
        %v1518 = vadd.f32 0.0, %v1517
        %1519 = vmatmul.f32.gmra.mxu0 %v1465
        %v1520 = vpop.f32.mrf.mxu0
        %v1521 = vadd.f32 0.0, %v1520
        %1522 = vmatmul.f32.gmra.mxu0 %v1467
        %v1523 = vpop.f32.mrf.mxu0
        %v1524 = vadd.f32 0.0, %v1523
        %1525 = vdwg.mxu0
        %v1526 = vmul.f32 %v1175, %v1503
        %v1527 = vmul.f32 %v1180, %v1506
        %v1528 = vmul.f32 %v1185, %v1509
        %v1529 = vmul.f32 %v1190, %v1512
        %v1530 = vmul.f32 %v1195, %v1515
        %v1531 = vmul.f32 %v1200, %v1518
        %v1532 = vmul.f32 %v1205, %v1521
        %v1533 = vmul.f32 %v1210, %v1524
        %v1534 = vadd.f32 %v1526, %v1075
        %v1535 = vadd.f32 %v1527, %v1076
        %v1536 = vadd.f32 %v1528, %v1077
        %v1537 = vadd.f32 %v1529, %v1078
        %v1538 = vadd.f32 %v1530, %v1079
        %v1539 = vadd.f32 %v1531, %v1080
        %v1540 = vadd.f32 %v1532, %v1081
        %v1541 = vadd.f32 %v1533, %v1082
        %v1542 = vsel %vm1228, %v1534, -inf
        %1543 = vmax.xlane.f32.xlu0 %v1542
        %v1544 = vpop.xlane.xlu0 %1543
        %v1545 = vsel %vm1228, %v1535, -inf
        %1546 = vmax.xlane.f32.xlu0 %v1545
        %v1547 = vpop.xlane.xlu0 %1546
        %v1548 = vsel %vm1228, %v1536, -inf
        %1549 = vmax.xlane.f32.xlu0 %v1548
        %v1550 = vpop.xlane.xlu0 %1549
        %v1551 = vsel %vm1228, %v1537, -inf
        %1552 = vmax.xlane.f32.xlu0 %v1551
        %v1553 = vpop.xlane.xlu0 %1552
        %v1554 = vsel %vm1228, %v1538, -inf
        %1555 = vmax.xlane.f32.xlu0 %v1554
        %v1556 = vpop.xlane.xlu0 %1555
        %v1557 = vsel %vm1228, %v1539, -inf
        %1558 = vmax.xlane.f32.xlu0 %v1557
        %v1559 = vpop.xlane.xlu0 %1558
        %v1560 = vsel %vm1228, %v1540, -inf
        %1561 = vmax.xlane.f32.xlu0 %v1560
        %v1562 = vpop.xlane.xlu0 %1561
        %v1563 = vsel %vm1228, %v1541, -inf
        %1564 = vmax.xlane.f32.xlu0 %v1563
        %v1565 = vpop.xlane.xlu0 %1564
        %v1566 = vsub.f32 %v1534, %v1544
        %v1567 = vsub.f32 %v1535, %v1547
        %v1568 = vsub.f32 %v1536, %v1550
        %v1569 = vsub.f32 %v1537, %v1553
        %v1570 = vsub.f32 %v1538, %v1556
        %v1571 = vsub.f32 %v1539, %v1559
        %v1572 = vsub.f32 %v1540, %v1562
        %v1573 = vsub.f32 %v1541, %v1565
        %v1574 = vmul.f32 %v1566, 1.442695
        %v1575 = vpow.pop %v1574
        %v1576 = vmul.f32 %v1567, 1.442695
        %v1577 = vpow.pop %v1576
        %v1578 = vmul.f32 %v1568, 1.442695
        %v1579 = vpow.pop %v1578
        %v1580 = vmul.f32 %v1569, 1.442695
        %v1581 = vpow.pop %v1580
        %v1582 = vmul.f32 %v1570, 1.442695
        %v1583 = vpow.pop %v1582
        %v1584 = vmul.f32 %v1571, 1.442695
        %v1585 = vpow.pop %v1584
        %v1586 = vmul.f32 %v1572, 1.442695
        %v1587 = vpow.pop %v1586
        %v1588 = vmul.f32 %v1573, 1.442695
        %v1589 = vpow.pop %v1588
        %v1590 = vsel %vm1228, %v1575, 0.0
        %1591 = vadd.xlane.f32.xlu0 %v1590
        %v1592 = vpop.xlane.xlu0 %1591
        %v1593 = vsel %vm1228, %v1577, 0.0
        %1594 = vadd.xlane.f32.xlu0 %v1593
        %v1595 = vpop.xlane.xlu0 %1594
        %v1596 = vsel %vm1228, %v1579, 0.0
        %1597 = vadd.xlane.f32.xlu0 %v1596
        %v1598 = vpop.xlane.xlu0 %1597
        %v1599 = vsel %vm1228, %v1581, 0.0
        %1600 = vadd.xlane.f32.xlu0 %v1599
        %v1601 = vpop.xlane.xlu0 %1600
        %v1602 = vsel %vm1228, %v1583, 0.0
        %1603 = vadd.xlane.f32.xlu0 %v1602
        %v1604 = vpop.xlane.xlu0 %1603
        %v1605 = vsel %vm1228, %v1585, 0.0
        %1606 = vadd.xlane.f32.xlu0 %v1605
        %v1607 = vpop.xlane.xlu0 %1606
        %v1608 = vsel %vm1228, %v1587, 0.0
        %1609 = vadd.xlane.f32.xlu0 %v1608
        %v1610 = vpop.xlane.xlu0 %1609
        %v1611 = vsel %vm1228, %v1589, 0.0
        %1612 = vadd.xlane.f32.xlu0 %v1611
        %v1613 = vpop.xlane.xlu0 %1612
        %v1614 = vrcp.pop %v1592
        %v1615 = vmul.f32 %v1592, %v1614
        %v1616 = vsub.f32 1.0, %v1615
        %v1617 = vmul.f32 %v1614, %v1616
        %v1618 = vadd.f32 %v1614, %v1617
        %vm1619 = vweird.f32 %v1592
        %vm1620 = vweird.f32 %v1614
        %vm1621 = vmor %vm1619, %vm1620
        %v1622 = vsel %vm1621, %v1614, %v1618
        %v1623 = vand.u32 2147483647, %v1592
        %vm1624 = vcmp.eq.f32.partialorder %v1623, 8.507059e+37
        %v1625 = vand.u32 %v1592, 2147483648
        %v1626 = vor.u32 1.1754944e-38, %v1625
        %v1627 = vsel %vm1624, %v1626, %v1622
        %v1628 = vrcp.pop %v1595
        %v1629 = vmul.f32 %v1595, %v1628
        %v1630 = vsub.f32 1.0, %v1629
        %v1631 = vmul.f32 %v1628, %v1630
        %v1632 = vadd.f32 %v1628, %v1631
        %vm1633 = vweird.f32 %v1595
        %vm1634 = vweird.f32 %v1628
        %vm1635 = vmor %vm1633, %vm1634
        %v1636 = vsel %vm1635, %v1628, %v1632
        %v1637 = vand.u32 2147483647, %v1595
        %vm1638 = vcmp.eq.f32.partialorder %v1637, 8.507059e+37
        %v1639 = vand.u32 %v1595, 2147483648
        %v1640 = vor.u32 1.1754944e-38, %v1639
        %v1641 = vsel %vm1638, %v1640, %v1636
        %v1642 = vrcp.pop %v1598
        %v1643 = vmul.f32 %v1598, %v1642
        %v1644 = vsub.f32 1.0, %v1643
        %v1645 = vmul.f32 %v1642, %v1644
        %v1646 = vadd.f32 %v1642, %v1645
        %vm1647 = vweird.f32 %v1598
        %vm1648 = vweird.f32 %v1642
        %vm1649 = vmor %vm1647, %vm1648
        %v1650 = vsel %vm1649, %v1642, %v1646
        %v1651 = vand.u32 2147483647, %v1598
        %vm1652 = vcmp.eq.f32.partialorder %v1651, 8.507059e+37
        %v1653 = vand.u32 %v1598, 2147483648
        %v1654 = vor.u32 1.1754944e-38, %v1653
        %v1655 = vsel %vm1652, %v1654, %v1650
        %v1656 = vrcp.pop %v1601
        %v1657 = vmul.f32 %v1601, %v1656
        %v1658 = vsub.f32 1.0, %v1657
        %v1659 = vmul.f32 %v1656, %v1658
        %v1660 = vadd.f32 %v1656, %v1659
        %vm1661 = vweird.f32 %v1601
        %vm1662 = vweird.f32 %v1656
        %vm1663 = vmor %vm1661, %vm1662
        %v1664 = vsel %vm1663, %v1656, %v1660
        %v1665 = vand.u32 2147483647, %v1601
        %vm1666 = vcmp.eq.f32.partialorder %v1665, 8.507059e+37
        %v1667 = vand.u32 %v1601, 2147483648
        %v1668 = vor.u32 1.1754944e-38, %v1667
        %v1669 = vsel %vm1666, %v1668, %v1664
        %v1670 = vrcp.pop %v1604
        %v1671 = vmul.f32 %v1604, %v1670
        %v1672 = vsub.f32 1.0, %v1671
        %v1673 = vmul.f32 %v1670, %v1672
        %v1674 = vadd.f32 %v1670, %v1673
        %vm1675 = vweird.f32 %v1604
        %vm1676 = vweird.f32 %v1670
        %vm1677 = vmor %vm1675, %vm1676
        %v1678 = vsel %vm1677, %v1670, %v1674
        %v1679 = vand.u32 2147483647, %v1604
        %vm1680 = vcmp.eq.f32.partialorder %v1679, 8.507059e+37
        %v1681 = vand.u32 %v1604, 2147483648
        %v1682 = vor.u32 1.1754944e-38, %v1681
        %v1683 = vsel %vm1680, %v1682, %v1678
        %v1684 = vrcp.pop %v1607
        %v1685 = vmul.f32 %v1607, %v1684
        %v1686 = vsub.f32 1.0, %v1685
        %v1687 = vmul.f32 %v1684, %v1686
        %v1688 = vadd.f32 %v1684, %v1687
        %vm1689 = vweird.f32 %v1607
        %vm1690 = vweird.f32 %v1684
        %vm1691 = vmor %vm1689, %vm1690
        %v1692 = vsel %vm1691, %v1684, %v1688
        %v1693 = vand.u32 2147483647, %v1607
        %vm1694 = vcmp.eq.f32.partialorder %v1693, 8.507059e+37
        %v1695 = vand.u32 %v1607, 2147483648
        %v1696 = vor.u32 1.1754944e-38, %v1695
        %v1697 = vsel %vm1694, %v1696, %v1692
        %v1698 = vrcp.pop %v1610
        %v1699 = vmul.f32 %v1610, %v1698
        %v1700 = vsub.f32 1.0, %v1699
        %v1701 = vmul.f32 %v1698, %v1700
        %v1702 = vadd.f32 %v1698, %v1701
        %vm1703 = vweird.f32 %v1610
        %vm1704 = vweird.f32 %v1698
        %vm1705 = vmor %vm1703, %vm1704
        %v1706 = vsel %vm1705, %v1698, %v1702
        %v1707 = vand.u32 2147483647, %v1610
        %vm1708 = vcmp.eq.f32.partialorder %v1707, 8.507059e+37
        %v1709 = vand.u32 %v1610, 2147483648
        %v1710 = vor.u32 1.1754944e-38, %v1709
        %v1711 = vsel %vm1708, %v1710, %v1706
        %v1712 = vrcp.pop %v1613
        %v1713 = vmul.f32 %v1613, %v1712
        %v1714 = vsub.f32 1.0, %v1713
        %v1715 = vmul.f32 %v1712, %v1714
        %v1716 = vadd.f32 %v1712, %v1715
        %vm1717 = vweird.f32 %v1613
        %vm1718 = vweird.f32 %v1712
        %vm1719 = vmor %vm1717, %vm1718
        %v1720 = vsel %vm1719, %v1712, %v1716
        %v1721 = vand.u32 2147483647, %v1613
        %vm1722 = vcmp.eq.f32.partialorder %v1721, 8.507059e+37
        %v1723 = vand.u32 %v1613, 2147483648
        %v1724 = vor.u32 1.1754944e-38, %v1723
        %v1725 = vsel %vm1722, %v1724, %v1720
        %v1726 = vmul.f32 %v1575, %v1627
        %v1727 = vmul.f32 %v1577, %v1641
        %v1728 = vmul.f32 %v1579, %v1655
        %v1729 = vmul.f32 %v1581, %v1669
        %v1730 = vmul.f32 %v1583, %v1683
        %v1731 = vmul.f32 %v1585, %v1697
        %v1732 = vmul.f32 %v1587, %v1711
        %v1733 = vmul.f32 %v1589, %v1725
        %1742 = vrot.lane.b32.xlu0 %v881, 96
        %v1743 = vpop.permute.xlu0 %1742
        %1744 = vrot.lane.b32.xlu0 %v884, 96
        %v1745 = vpop.permute.xlu0 %1744
        %1746 = vrot.lane.b32.xlu0 %v887, 96
        %v1747 = vpop.permute.xlu0 %1746
        %1748 = vrot.lane.b32.xlu0 %v890, 96
        %v1749 = vpop.permute.xlu0 %1748
        %1750 = vrot.lane.b32.xlu0 %v893, 96
        %v1751 = vpop.permute.xlu0 %1750
        %1752 = vrot.lane.b32.xlu0 %v896, 96
        %v1753 = vpop.permute.xlu0 %1752
        %1754 = vrot.lane.b32.xlu0 %v899, 96
        %v1755 = vpop.permute.xlu0 %1754
        %1756 = vrot.lane.b32.xlu0 %v902, 96
        %v1757 = vpop.permute.xlu0 %1756
        %v1767 = vsel %vm1228, %v1726, 0
        %v1770 = vsel %vm1228, %v1727, 0
        %v1773 = vsel %vm1228, %v1728, 0
        %v1776 = vsel %vm1228, %v1729, 0
        %v1779 = vsel %vm1228, %v1730, 0
        %v1782 = vsel %vm1228, %v1731, 0
        %v1785 = vsel %vm1228, %v1732, 0
        %v1788 = vsel %vm1228, %v1733, 0
        %1790 = vmatpush.msra.mxu0 0.0
        %1791 = vmatpush.msra.mxu0 0.0
        %1792 = vmatpush.msra.mxu0 0.0
        %1793 = vmatpush.msra.mxu0 0.0
        %1794 = vmatpush.msra.mxu0 0.0
        %1795 = vmatpush.msra.mxu0 0.0
        %1796 = vmatpush.msra.mxu0 0.0
        %1797 = vmatpush.msra.mxu0 0.0
        %1798 = vmatpush.msra.mxu0 %v1757
        %1799 = vmatpush.msra.mxu0 %v1755
        %1800 = vmatpush.msra.mxu0 %v1753
        %1801 = vmatpush.msra.mxu0 %v1751
        %1802 = vmatpush.msra.mxu0 %v1749
        %1803 = vmatpush.msra.mxu0 %v1747
        %1804 = vmatpush.msra.mxu0 %v1745
        %1805 = vmatpush.msra.mxu0 %v1743
        %1806 = vmatmul.f32.gmra.mxu0 %v1767
        %v1807 = vpop.f32.mrf.mxu0
        %v1808 = vadd.f32 0.0, %v1807
        %1809 = vmatmul.f32.gmra.mxu0 %v1770
        %v1810 = vpop.f32.mrf.mxu0
        %v1811 = vadd.f32 0.0, %v1810
        %1812 = vmatmul.f32.gmra.mxu0 %v1773
        %v1813 = vpop.f32.mrf.mxu0
        %v1814 = vadd.f32 0.0, %v1813
        %1815 = vmatmul.f32.gmra.mxu0 %v1776
        %v1816 = vpop.f32.mrf.mxu0
        %v1817 = vadd.f32 0.0, %v1816
        %1818 = vmatmul.f32.gmra.mxu0 %v1779
        %v1819 = vpop.f32.mrf.mxu0
        %v1820 = vadd.f32 0.0, %v1819
        %1821 = vmatmul.f32.gmra.mxu0 %v1782
        %v1822 = vpop.f32.mrf.mxu0
        %v1823 = vadd.f32 0.0, %v1822
        %1824 = vmatmul.f32.gmra.mxu0 %v1785
        %v1825 = vpop.f32.mrf.mxu0
        %v1826 = vadd.f32 0.0, %v1825
        %1827 = vmatmul.f32.gmra.mxu0 %v1788
        %v1828 = vpop.f32.mrf.mxu0
        %v1829 = vadd.f32 0.0, %v1828
        %1830 = vdwg.mxu0
        %v1832 = vsel %vm1228, %v1413, 0
        %v1835 = vsel %vm1228, %v1414, 0
        %v1838 = vsel %vm1228, %v1415, 0
        %v1841 = vsel %vm1228, %v1416, 0
        %v1844 = vsel %vm1228, %v1417, 0
        %v1847 = vsel %vm1228, %v1418, 0
        %v1850 = vsel %vm1228, %v1419, 0
        %v1853 = vsel %vm1228, %v1420, 0
        %1855 = vmatpush.msra.mxu0 0.0
        %1856 = vmatpush.msra.mxu0 0.0
        %1857 = vmatpush.msra.mxu0 0.0
        %1858 = vmatpush.msra.mxu0 0.0
        %1859 = vmatpush.msra.mxu0 0.0
        %1860 = vmatpush.msra.mxu0 0.0
        %1861 = vmatpush.msra.mxu0 0.0
        %1862 = vmatpush.msra.mxu0 0.0
        %1863 = vmatpush.msra.mxu0 %v902
        %1864 = vmatpush.msra.mxu0 %v899
        %1865 = vmatpush.msra.mxu0 %v896
        %1866 = vmatpush.msra.mxu0 %v893
        %1867 = vmatpush.msra.mxu0 %v890
        %1868 = vmatpush.msra.mxu0 %v887
        %1869 = vmatpush.msra.mxu0 %v884
        %1870 = vmatpush.msra.mxu0 %v881
        %1871 = vmatmul.f32.gmra.mxu0 %v1832
        %v1872 = vpop.f32.mrf.mxu0
        %v1873 = vadd.f32 %v1808, %v1872
        %1874 = vmatmul.f32.gmra.mxu0 %v1835
        %v1875 = vpop.f32.mrf.mxu0
        %v1876 = vadd.f32 %v1811, %v1875
        %1877 = vmatmul.f32.gmra.mxu0 %v1838
        %v1878 = vpop.f32.mrf.mxu0
        %v1879 = vadd.f32 %v1814, %v1878
        %1880 = vmatmul.f32.gmra.mxu0 %v1841
        %v1881 = vpop.f32.mrf.mxu0
        %v1882 = vadd.f32 %v1817, %v1881
        %1883 = vmatmul.f32.gmra.mxu0 %v1844
        %v1884 = vpop.f32.mrf.mxu0
        %v1885 = vadd.f32 %v1820, %v1884
        %1886 = vmatmul.f32.gmra.mxu0 %v1847
        %v1887 = vpop.f32.mrf.mxu0
        %v1888 = vadd.f32 %v1823, %v1887
        %1889 = vmatmul.f32.gmra.mxu0 %v1850
        %v1890 = vpop.f32.mrf.mxu0
        %v1891 = vadd.f32 %v1826, %v1890
        %1892 = vmatmul.f32.gmra.mxu0 %v1853
        %v1893 = vpop.f32.mrf.mxu0
        %v1894 = vadd.f32 %v1829, %v1893
        %1895 = vdwg.mxu0
        %1896 = vrot.lane.b32.xlu0 %v717, 64
        %v1897 = vpop.permute.xlu0 %1896
        %1898 = vrot.lane.b32.xlu0 %v720, 64
        %v1899 = vpop.permute.xlu0 %1898
        %1900 = vrot.lane.b32.xlu0 %v723, 64
        %v1901 = vpop.permute.xlu0 %1900
        %1902 = vrot.lane.b32.xlu0 %v726, 64
        %v1903 = vpop.permute.xlu0 %1902
        %1904 = vrot.lane.b32.xlu0 %v729, 64
        %v1905 = vpop.permute.xlu0 %1904
        %1906 = vrot.lane.b32.xlu0 %v732, 64
        %v1907 = vpop.permute.xlu0 %1906
        %1908 = vrot.lane.b32.xlu0 %v735, 64
        %v1909 = vpop.permute.xlu0 %1908
        %1910 = vrot.lane.b32.xlu0 %v738, 64
        %v1911 = vpop.permute.xlu0 %1910
        %1912 = vrot.lane.b32.xlu0 %v799, 64
        %v1913 = vpop.permute.xlu0 %1912
        %1914 = vrot.lane.b32.xlu0 %v802, 64
        %v1915 = vpop.permute.xlu0 %1914
        %1916 = vrot.lane.b32.xlu0 %v805, 64
        %v1917 = vpop.permute.xlu0 %1916
        %1918 = vrot.lane.b32.xlu0 %v808, 64
        %v1919 = vpop.permute.xlu0 %1918
        %1920 = vrot.lane.b32.xlu0 %v811, 64
        %v1921 = vpop.permute.xlu0 %1920
        %1922 = vrot.lane.b32.xlu0 %v814, 64
        %v1923 = vpop.permute.xlu0 %1922
        %1924 = vrot.lane.b32.xlu0 %v817, 64
        %v1925 = vpop.permute.xlu0 %1924
        %1926 = vrot.lane.b32.xlu0 %v820, 64
        %v1927 = vpop.permute.xlu0 %1926
        %v1928 = vsel %vm445, %v1897, 0
        %v1930 = vsel %vm445, %v1899, 0
        %v1932 = vsel %vm445, %v1901, 0
        %v1934 = vsel %vm445, %v1903, 0
        %v1936 = vsel %vm445, %v1905, 0
        %v1938 = vsel %vm445, %v1907, 0
        %v1940 = vsel %vm445, %v1909, 0
        %v1942 = vsel %vm445, %v1911, 0
        %v1944 = vsel %vm445, %v1913, 0
        %v1946 = vsel %vm445, %v1915, 0
        %v1948 = vsel %vm445, %v1917, 0
        %v1950 = vsel %vm445, %v1919, 0
        %v1952 = vsel %vm445, %v1921, 0
        %v1954 = vsel %vm445, %v1923, 0
        %v1956 = vsel %vm445, %v1925, 0
        %v1958 = vsel %vm445, %v1927, 0
        %1960 = vmatpush.xpose.msra.mxu0 0.0
        %1961 = vmatpush.xpose.msra.mxu0 0.0
        %1962 = vmatpush.xpose.msra.mxu0 0.0
        %1963 = vmatpush.xpose.msra.mxu0 0.0
        %1964 = vmatpush.xpose.msra.mxu0 0.0
        %1965 = vmatpush.xpose.msra.mxu0 0.0
        %1966 = vmatpush.xpose.msra.mxu0 0.0
        %1967 = vmatpush.xpose.msra.mxu0 0.0
        %1968 = vmatpush.xpose.msra.mxu0 %v1958
        %1969 = vmatpush.xpose.msra.mxu0 %v1956
        %1970 = vmatpush.xpose.msra.mxu0 %v1954
        %1971 = vmatpush.xpose.msra.mxu0 %v1952
        %1972 = vmatpush.xpose.msra.mxu0 %v1950
        %1973 = vmatpush.xpose.msra.mxu0 %v1948
        %1974 = vmatpush.xpose.msra.mxu0 %v1946
        %1975 = vmatpush.xpose.msra.mxu0 %v1944
        %1976 = vmatmul.f32.gmra.mxu0 %v1928
        %v1977 = vpop.f32.mrf.mxu0
        %v1978 = vadd.f32 0.0, %v1977
        %1979 = vmatmul.f32.gmra.mxu0 %v1930
        %v1980 = vpop.f32.mrf.mxu0
        %v1981 = vadd.f32 0.0, %v1980
        %1982 = vmatmul.f32.gmra.mxu0 %v1932
        %v1983 = vpop.f32.mrf.mxu0
        %v1984 = vadd.f32 0.0, %v1983
        %1985 = vmatmul.f32.gmra.mxu0 %v1934
        %v1986 = vpop.f32.mrf.mxu0
        %v1987 = vadd.f32 0.0, %v1986
        %1988 = vmatmul.f32.gmra.mxu0 %v1936
        %v1989 = vpop.f32.mrf.mxu0
        %v1990 = vadd.f32 0.0, %v1989
        %1991 = vmatmul.f32.gmra.mxu0 %v1938
        %v1992 = vpop.f32.mrf.mxu0
        %v1993 = vadd.f32 0.0, %v1992
        %1994 = vmatmul.f32.gmra.mxu0 %v1940
        %v1995 = vpop.f32.mrf.mxu0
        %v1996 = vadd.f32 0.0, %v1995
        %1997 = vmatmul.f32.gmra.mxu0 %v1942
        %v1998 = vpop.f32.mrf.mxu0
        %v1999 = vadd.f32 0.0, %v1998
        %2000 = vdwg.mxu0
        %v2001 = vmul.f32 %v1175, %v1978
        %v2002 = vmul.f32 %v1180, %v1981
        %v2003 = vmul.f32 %v1185, %v1984
        %v2004 = vmul.f32 %v1190, %v1987
        %v2005 = vmul.f32 %v1195, %v1990
        %v2006 = vmul.f32 %v1200, %v1993
        %v2007 = vmul.f32 %v1205, %v1996
        %v2008 = vmul.f32 %v1210, %v1999
        %v2009 = vadd.f32 %v2001, %v1075
        %v2010 = vadd.f32 %v2002, %v1076
        %v2011 = vadd.f32 %v2003, %v1077
        %v2012 = vadd.f32 %v2004, %v1078
        %v2013 = vadd.f32 %v2005, %v1079
        %v2014 = vadd.f32 %v2006, %v1080
        %v2015 = vadd.f32 %v2007, %v1081
        %v2016 = vadd.f32 %v2008, %v1082
        %v2017 = vsel %vm1228, %v2009, -inf
        %2018 = vmax.xlane.f32.xlu0 %v2017
        %v2019 = vpop.xlane.xlu0 %2018
        %v2020 = vsel %vm1228, %v2010, -inf
        %2021 = vmax.xlane.f32.xlu0 %v2020
        %v2022 = vpop.xlane.xlu0 %2021
        %v2023 = vsel %vm1228, %v2011, -inf
        %2024 = vmax.xlane.f32.xlu0 %v2023
        %v2025 = vpop.xlane.xlu0 %2024
        %v2026 = vsel %vm1228, %v2012, -inf
        %2027 = vmax.xlane.f32.xlu0 %v2026
        %v2028 = vpop.xlane.xlu0 %2027
        %v2029 = vsel %vm1228, %v2013, -inf
        %2030 = vmax.xlane.f32.xlu0 %v2029
        %v2031 = vpop.xlane.xlu0 %2030
        %v2032 = vsel %vm1228, %v2014, -inf
        %2033 = vmax.xlane.f32.xlu0 %v2032
        %v2034 = vpop.xlane.xlu0 %2033
        %v2035 = vsel %vm1228, %v2015, -inf
        %2036 = vmax.xlane.f32.xlu0 %v2035
        %v2037 = vpop.xlane.xlu0 %2036
        %v2038 = vsel %vm1228, %v2016, -inf
        %2039 = vmax.xlane.f32.xlu0 %v2038
        %v2040 = vpop.xlane.xlu0 %2039
        %v2041 = vsub.f32 %v2009, %v2019
        %v2042 = vsub.f32 %v2010, %v2022
        %v2043 = vsub.f32 %v2011, %v2025
        %v2044 = vsub.f32 %v2012, %v2028
        %v2045 = vsub.f32 %v2013, %v2031
        %v2046 = vsub.f32 %v2014, %v2034
        %v2047 = vsub.f32 %v2015, %v2037
        %v2048 = vsub.f32 %v2016, %v2040
        %v2049 = vmul.f32 %v2041, 1.442695
        %v2050 = vpow.pop %v2049
        %v2051 = vmul.f32 %v2042, 1.442695
        %v2052 = vpow.pop %v2051
        %v2053 = vmul.f32 %v2043, 1.442695
        %v2054 = vpow.pop %v2053
        %v2055 = vmul.f32 %v2044, 1.442695
        %v2056 = vpow.pop %v2055
        %v2057 = vmul.f32 %v2045, 1.442695
        %v2058 = vpow.pop %v2057
        %v2059 = vmul.f32 %v2046, 1.442695
        %v2060 = vpow.pop %v2059
        %v2061 = vmul.f32 %v2047, 1.442695
        %v2062 = vpow.pop %v2061
        %v2063 = vmul.f32 %v2048, 1.442695
        %v2064 = vpow.pop %v2063
        %v2065 = vsel %vm1228, %v2050, 0.0
        %2066 = vadd.xlane.f32.xlu0 %v2065
        %v2067 = vpop.xlane.xlu0 %2066
        %v2068 = vsel %vm1228, %v2052, 0.0
        %2069 = vadd.xlane.f32.xlu0 %v2068
        %v2070 = vpop.xlane.xlu0 %2069
        %v2071 = vsel %vm1228, %v2054, 0.0
        %2072 = vadd.xlane.f32.xlu0 %v2071
        %v2073 = vpop.xlane.xlu0 %2072
        %v2074 = vsel %vm1228, %v2056, 0.0
        %2075 = vadd.xlane.f32.xlu0 %v2074
        %v2076 = vpop.xlane.xlu0 %2075
        %v2077 = vsel %vm1228, %v2058, 0.0
        %2078 = vadd.xlane.f32.xlu0 %v2077
        %v2079 = vpop.xlane.xlu0 %2078
        %v2080 = vsel %vm1228, %v2060, 0.0
        %2081 = vadd.xlane.f32.xlu0 %v2080
        %v2082 = vpop.xlane.xlu0 %2081
        %v2083 = vsel %vm1228, %v2062, 0.0
        %2084 = vadd.xlane.f32.xlu0 %v2083
        %v2085 = vpop.xlane.xlu0 %2084
        %v2086 = vsel %vm1228, %v2064, 0.0
        %2087 = vadd.xlane.f32.xlu0 %v2086
        %v2088 = vpop.xlane.xlu0 %2087
        %v2089 = vrcp.pop %v2067
        %v2090 = vmul.f32 %v2067, %v2089
        %v2091 = vsub.f32 1.0, %v2090
        %v2092 = vmul.f32 %v2089, %v2091
        %v2093 = vadd.f32 %v2089, %v2092
        %vm2094 = vweird.f32 %v2067
        %vm2095 = vweird.f32 %v2089
        %vm2096 = vmor %vm2094, %vm2095
        %v2097 = vsel %vm2096, %v2089, %v2093
        %v2098 = vand.u32 2147483647, %v2067
        %vm2099 = vcmp.eq.f32.partialorder %v2098, 8.507059e+37
        %v2100 = vand.u32 %v2067, 2147483648
        %v2101 = vor.u32 1.1754944e-38, %v2100
        %v2102 = vsel %vm2099, %v2101, %v2097
        %v2103 = vrcp.pop %v2070
        %v2104 = vmul.f32 %v2070, %v2103
        %v2105 = vsub.f32 1.0, %v2104
        %v2106 = vmul.f32 %v2103, %v2105
        %v2107 = vadd.f32 %v2103, %v2106
        %vm2108 = vweird.f32 %v2070
        %vm2109 = vweird.f32 %v2103
        %vm2110 = vmor %vm2108, %vm2109
        %v2111 = vsel %vm2110, %v2103, %v2107
        %v2112 = vand.u32 2147483647, %v2070
        %vm2113 = vcmp.eq.f32.partialorder %v2112, 8.507059e+37
        %v2114 = vand.u32 %v2070, 2147483648
        %v2115 = vor.u32 1.1754944e-38, %v2114
        %v2116 = vsel %vm2113, %v2115, %v2111
        %v2117 = vrcp.pop %v2073
        %v2118 = vmul.f32 %v2073, %v2117
        %v2119 = vsub.f32 1.0, %v2118
        %v2120 = vmul.f32 %v2117, %v2119
        %v2121 = vadd.f32 %v2117, %v2120
        %vm2122 = vweird.f32 %v2073
        %vm2123 = vweird.f32 %v2117
        %vm2124 = vmor %vm2122, %vm2123
        %v2125 = vsel %vm2124, %v2117, %v2121
        %v2126 = vand.u32 2147483647, %v2073
        %vm2127 = vcmp.eq.f32.partialorder %v2126, 8.507059e+37
        %v2128 = vand.u32 %v2073, 2147483648
        %v2129 = vor.u32 1.1754944e-38, %v2128
        %v2130 = vsel %vm2127, %v2129, %v2125
        %v2131 = vrcp.pop %v2076
        %v2132 = vmul.f32 %v2076, %v2131
        %v2133 = vsub.f32 1.0, %v2132
        %v2134 = vmul.f32 %v2131, %v2133
        %v2135 = vadd.f32 %v2131, %v2134
        %vm2136 = vweird.f32 %v2076
        %vm2137 = vweird.f32 %v2131
        %vm2138 = vmor %vm2136, %vm2137
        %v2139 = vsel %vm2138, %v2131, %v2135
        %v2140 = vand.u32 2147483647, %v2076
        %vm2141 = vcmp.eq.f32.partialorder %v2140, 8.507059e+37
        %v2142 = vand.u32 %v2076, 2147483648
        %v2143 = vor.u32 1.1754944e-38, %v2142
        %v2144 = vsel %vm2141, %v2143, %v2139
        %v2145 = vrcp.pop %v2079
        %v2146 = vmul.f32 %v2079, %v2145
        %v2147 = vsub.f32 1.0, %v2146
        %v2148 = vmul.f32 %v2145, %v2147
        %v2149 = vadd.f32 %v2145, %v2148
        %vm2150 = vweird.f32 %v2079
        %vm2151 = vweird.f32 %v2145
        %vm2152 = vmor %vm2150, %vm2151
        %v2153 = vsel %vm2152, %v2145, %v2149
        %v2154 = vand.u32 2147483647, %v2079
        %vm2155 = vcmp.eq.f32.partialorder %v2154, 8.507059e+37
        %v2156 = vand.u32 %v2079, 2147483648
        %v2157 = vor.u32 1.1754944e-38, %v2156
        %v2158 = vsel %vm2155, %v2157, %v2153
        %v2159 = vrcp.pop %v2082
        %v2160 = vmul.f32 %v2082, %v2159
        %v2161 = vsub.f32 1.0, %v2160
        %v2162 = vmul.f32 %v2159, %v2161
        %v2163 = vadd.f32 %v2159, %v2162
        %vm2164 = vweird.f32 %v2082
        %vm2165 = vweird.f32 %v2159
        %vm2166 = vmor %vm2164, %vm2165
        %v2167 = vsel %vm2166, %v2159, %v2163
        %v2168 = vand.u32 2147483647, %v2082
        %vm2169 = vcmp.eq.f32.partialorder %v2168, 8.507059e+37
        %v2170 = vand.u32 %v2082, 2147483648
        %v2171 = vor.u32 1.1754944e-38, %v2170
        %v2172 = vsel %vm2169, %v2171, %v2167
        %v2173 = vrcp.pop %v2085
        %v2174 = vmul.f32 %v2085, %v2173
        %v2175 = vsub.f32 1.0, %v2174
        %v2176 = vmul.f32 %v2173, %v2175
        %v2177 = vadd.f32 %v2173, %v2176
        %vm2178 = vweird.f32 %v2085
        %vm2179 = vweird.f32 %v2173
        %vm2180 = vmor %vm2178, %vm2179
        %v2181 = vsel %vm2180, %v2173, %v2177
        %v2182 = vand.u32 2147483647, %v2085
        %vm2183 = vcmp.eq.f32.partialorder %v2182, 8.507059e+37
        %v2184 = vand.u32 %v2085, 2147483648
        %v2185 = vor.u32 1.1754944e-38, %v2184
        %v2186 = vsel %vm2183, %v2185, %v2181
        %v2187 = vrcp.pop %v2088
        %v2188 = vmul.f32 %v2088, %v2187
        %v2189 = vsub.f32 1.0, %v2188
        %v2190 = vmul.f32 %v2187, %v2189
        %v2191 = vadd.f32 %v2187, %v2190
        %vm2192 = vweird.f32 %v2088
        %vm2193 = vweird.f32 %v2187
        %vm2194 = vmor %vm2192, %vm2193
        %v2195 = vsel %vm2194, %v2187, %v2191
        %v2196 = vand.u32 2147483647, %v2088
        %vm2197 = vcmp.eq.f32.partialorder %v2196, 8.507059e+37
        %v2198 = vand.u32 %v2088, 2147483648
        %v2199 = vor.u32 1.1754944e-38, %v2198
        %v2200 = vsel %vm2197, %v2199, %v2195
        %v2201 = vmul.f32 %v2050, %v2102
        %v2202 = vmul.f32 %v2052, %v2116
        %v2203 = vmul.f32 %v2054, %v2130
        %v2204 = vmul.f32 %v2056, %v2144
        %v2205 = vmul.f32 %v2058, %v2158
        %v2206 = vmul.f32 %v2060, %v2172
        %v2207 = vmul.f32 %v2062, %v2186
        %v2208 = vmul.f32 %v2064, %v2200
        %2209 = vrot.lane.b32.xlu0 %v881, 64
        %v2210 = vpop.permute.xlu0 %2209
        %2211 = vrot.lane.b32.xlu0 %v884, 64
        %v2212 = vpop.permute.xlu0 %2211
        %2213 = vrot.lane.b32.xlu0 %v887, 64
        %v2214 = vpop.permute.xlu0 %2213
        %2215 = vrot.lane.b32.xlu0 %v890, 64
        %v2216 = vpop.permute.xlu0 %2215
        %2217 = vrot.lane.b32.xlu0 %v893, 64
        %v2218 = vpop.permute.xlu0 %2217
        %2219 = vrot.lane.b32.xlu0 %v896, 64
        %v2220 = vpop.permute.xlu0 %2219
        %2221 = vrot.lane.b32.xlu0 %v899, 64
        %v2222 = vpop.permute.xlu0 %2221
        %2223 = vrot.lane.b32.xlu0 %v902, 64
        %v2224 = vpop.permute.xlu0 %2223
        %v2234 = vsel %vm1228, %v2201, 0
        %v2237 = vsel %vm1228, %v2202, 0
        %v2240 = vsel %vm1228, %v2203, 0
        %v2243 = vsel %vm1228, %v2204, 0
        %v2246 = vsel %vm1228, %v2205, 0
        %v2249 = vsel %vm1228, %v2206, 0
        %v2252 = vsel %vm1228, %v2207, 0
        %v2255 = vsel %vm1228, %v2208, 0
        %2257 = vmatpush.msra.mxu0 0.0
        %2258 = vmatpush.msra.mxu0 0.0
        %2259 = vmatpush.msra.mxu0 0.0
        %2260 = vmatpush.msra.mxu0 0.0
        %2261 = vmatpush.msra.mxu0 0.0
        %2262 = vmatpush.msra.mxu0 0.0
        %2263 = vmatpush.msra.mxu0 0.0
        %2264 = vmatpush.msra.mxu0 0.0
        %2265 = vmatpush.msra.mxu0 %v2224
        %2266 = vmatpush.msra.mxu0 %v2222
        %2267 = vmatpush.msra.mxu0 %v2220
        %2268 = vmatpush.msra.mxu0 %v2218
        %2269 = vmatpush.msra.mxu0 %v2216
        %2270 = vmatpush.msra.mxu0 %v2214
        %2271 = vmatpush.msra.mxu0 %v2212
        %2272 = vmatpush.msra.mxu0 %v2210
        %2273 = vmatmul.f32.gmra.mxu0 %v2234
        %v2274 = vpop.f32.mrf.mxu0
        %v2275 = vadd.f32 0.0, %v2274
        %2276 = vmatmul.f32.gmra.mxu0 %v2237
        %v2277 = vpop.f32.mrf.mxu0
        %v2278 = vadd.f32 0.0, %v2277
        %2279 = vmatmul.f32.gmra.mxu0 %v2240
        %v2280 = vpop.f32.mrf.mxu0
        %v2281 = vadd.f32 0.0, %v2280
        %2282 = vmatmul.f32.gmra.mxu0 %v2243
        %v2283 = vpop.f32.mrf.mxu0
        %v2284 = vadd.f32 0.0, %v2283
        %2285 = vmatmul.f32.gmra.mxu0 %v2246
        %v2286 = vpop.f32.mrf.mxu0
        %v2287 = vadd.f32 0.0, %v2286
        %2288 = vmatmul.f32.gmra.mxu0 %v2249
        %v2289 = vpop.f32.mrf.mxu0
        %v2290 = vadd.f32 0.0, %v2289
        %2291 = vmatmul.f32.gmra.mxu0 %v2252
        %v2292 = vpop.f32.mrf.mxu0
        %v2293 = vadd.f32 0.0, %v2292
        %2294 = vmatmul.f32.gmra.mxu0 %v2255
        %v2295 = vpop.f32.mrf.mxu0
        %v2296 = vadd.f32 0.0, %v2295
        %2297 = vdwg.mxu0
        %v2298 = vadd.f32 %v1873, %v2275
        %v2299 = vadd.f32 %v1876, %v2278
        %v2300 = vadd.f32 %v1879, %v2281
        %v2301 = vadd.f32 %v1882, %v2284
        %v2302 = vadd.f32 %v1885, %v2287
        %v2303 = vadd.f32 %v1888, %v2290
        %v2304 = vadd.f32 %v1891, %v2293
        %v2305 = vadd.f32 %v1894, %v2296
        %2306 = vrot.lane.b32.xlu0 %v717, 32
        %v2307 = vpop.permute.xlu0 %2306
        %2308 = vrot.lane.b32.xlu0 %v720, 32
        %v2309 = vpop.permute.xlu0 %2308
        %2310 = vrot.lane.b32.xlu0 %v723, 32
        %v2311 = vpop.permute.xlu0 %2310
        %2312 = vrot.lane.b32.xlu0 %v726, 32
        %v2313 = vpop.permute.xlu0 %2312
        %2314 = vrot.lane.b32.xlu0 %v729, 32
        %v2315 = vpop.permute.xlu0 %2314
        %2316 = vrot.lane.b32.xlu0 %v732, 32
        %v2317 = vpop.permute.xlu0 %2316
        %2318 = vrot.lane.b32.xlu0 %v735, 32
        %v2319 = vpop.permute.xlu0 %2318
        %2320 = vrot.lane.b32.xlu0 %v738, 32
        %v2321 = vpop.permute.xlu0 %2320
        %2322 = vrot.lane.b32.xlu0 %v799, 32
        %v2323 = vpop.permute.xlu0 %2322
        %2324 = vrot.lane.b32.xlu0 %v802, 32
        %v2325 = vpop.permute.xlu0 %2324
        %2326 = vrot.lane.b32.xlu0 %v805, 32
        %v2327 = vpop.permute.xlu0 %2326
        %2328 = vrot.lane.b32.xlu0 %v808, 32
        %v2329 = vpop.permute.xlu0 %2328
        %2330 = vrot.lane.b32.xlu0 %v811, 32
        %v2331 = vpop.permute.xlu0 %2330
        %2332 = vrot.lane.b32.xlu0 %v814, 32
        %v2333 = vpop.permute.xlu0 %2332
        %2334 = vrot.lane.b32.xlu0 %v817, 32
        %v2335 = vpop.permute.xlu0 %2334
        %2336 = vrot.lane.b32.xlu0 %v820, 32
        %v2337 = vpop.permute.xlu0 %2336
        %v2338 = vsel %vm445, %v2307, 0
        %v2340 = vsel %vm445, %v2309, 0
        %v2342 = vsel %vm445, %v2311, 0
        %v2344 = vsel %vm445, %v2313, 0
        %v2346 = vsel %vm445, %v2315, 0
        %v2348 = vsel %vm445, %v2317, 0
        %v2350 = vsel %vm445, %v2319, 0
        %v2352 = vsel %vm445, %v2321, 0
        %v2354 = vsel %vm445, %v2323, 0
        %v2356 = vsel %vm445, %v2325, 0
        %v2358 = vsel %vm445, %v2327, 0
        %v2360 = vsel %vm445, %v2329, 0
        %v2362 = vsel %vm445, %v2331, 0
        %v2364 = vsel %vm445, %v2333, 0
        %v2366 = vsel %vm445, %v2335, 0
        %v2368 = vsel %vm445, %v2337, 0
        %2370 = vmatpush.xpose.msra.mxu0 0.0
        %2371 = vmatpush.xpose.msra.mxu0 0.0
        %2372 = vmatpush.xpose.msra.mxu0 0.0
        %2373 = vmatpush.xpose.msra.mxu0 0.0
        %2374 = vmatpush.xpose.msra.mxu0 0.0
        %2375 = vmatpush.xpose.msra.mxu0 0.0
        %2376 = vmatpush.xpose.msra.mxu0 0.0
        %2377 = vmatpush.xpose.msra.mxu0 0.0
        %2378 = vmatpush.xpose.msra.mxu0 %v2368
        %2379 = vmatpush.xpose.msra.mxu0 %v2366
        %2380 = vmatpush.xpose.msra.mxu0 %v2364
        %2381 = vmatpush.xpose.msra.mxu0 %v2362
        %2382 = vmatpush.xpose.msra.mxu0 %v2360
        %2383 = vmatpush.xpose.msra.mxu0 %v2358
        %2384 = vmatpush.xpose.msra.mxu0 %v2356
        %2385 = vmatpush.xpose.msra.mxu0 %v2354
        %2386 = vmatmul.f32.gmra.mxu0 %v2338
        %v2387 = vpop.f32.mrf.mxu0
        %v2388 = vadd.f32 0.0, %v2387
        %2389 = vmatmul.f32.gmra.mxu0 %v2340
        %v2390 = vpop.f32.mrf.mxu0
        %v2391 = vadd.f32 0.0, %v2390
        %2392 = vmatmul.f32.gmra.mxu0 %v2342
        %v2393 = vpop.f32.mrf.mxu0
        %v2394 = vadd.f32 0.0, %v2393
        %2395 = vmatmul.f32.gmra.mxu0 %v2344
        %v2396 = vpop.f32.mrf.mxu0
        %v2397 = vadd.f32 0.0, %v2396
        %2398 = vmatmul.f32.gmra.mxu0 %v2346
        %v2399 = vpop.f32.mrf.mxu0
        %v2400 = vadd.f32 0.0, %v2399
        %2401 = vmatmul.f32.gmra.mxu0 %v2348
        %v2402 = vpop.f32.mrf.mxu0
        %v2403 = vadd.f32 0.0, %v2402
        %2404 = vmatmul.f32.gmra.mxu0 %v2350
        %v2405 = vpop.f32.mrf.mxu0
        %v2406 = vadd.f32 0.0, %v2405
        %2407 = vmatmul.f32.gmra.mxu0 %v2352
        %v2408 = vpop.f32.mrf.mxu0
        %v2409 = vadd.f32 0.0, %v2408
        %2410 = vdwg.mxu0
        %v2411 = vmul.f32 %v1175, %v2388
        %v2412 = vmul.f32 %v1180, %v2391
        %v2413 = vmul.f32 %v1185, %v2394
        %v2414 = vmul.f32 %v1190, %v2397
        %v2415 = vmul.f32 %v1195, %v2400
        %v2416 = vmul.f32 %v1200, %v2403
        %v2417 = vmul.f32 %v1205, %v2406
        %v2418 = vmul.f32 %v1210, %v2409
        %v2419 = vadd.f32 %v2411, %v1075
        %v2420 = vadd.f32 %v2412, %v1076
        %v2421 = vadd.f32 %v2413, %v1077
        %v2422 = vadd.f32 %v2414, %v1078
        %v2423 = vadd.f32 %v2415, %v1079
        %v2424 = vadd.f32 %v2416, %v1080
        %v2425 = vadd.f32 %v2417, %v1081
        %v2426 = vadd.f32 %v2418, %v1082
        %v2427 = vsel %vm1228, %v2419, -inf
        %2428 = vmax.xlane.f32.xlu0 %v2427
        %v2429 = vpop.xlane.xlu0 %2428
        %v2430 = vsel %vm1228, %v2420, -inf
        %2431 = vmax.xlane.f32.xlu0 %v2430
        %v2432 = vpop.xlane.xlu0 %2431
        %v2433 = vsel %vm1228, %v2421, -inf
        %2434 = vmax.xlane.f32.xlu0 %v2433
        %v2435 = vpop.xlane.xlu0 %2434
        %v2436 = vsel %vm1228, %v2422, -inf
        %2437 = vmax.xlane.f32.xlu0 %v2436
        %v2438 = vpop.xlane.xlu0 %2437
        %v2439 = vsel %vm1228, %v2423, -inf
        %2440 = vmax.xlane.f32.xlu0 %v2439
        %v2441 = vpop.xlane.xlu0 %2440
        %v2442 = vsel %vm1228, %v2424, -inf
        %2443 = vmax.xlane.f32.xlu0 %v2442
        %v2444 = vpop.xlane.xlu0 %2443
        %v2445 = vsel %vm1228, %v2425, -inf
        %2446 = vmax.xlane.f32.xlu0 %v2445
        %v2447 = vpop.xlane.xlu0 %2446
        %v2448 = vsel %vm1228, %v2426, -inf
        %2449 = vmax.xlane.f32.xlu0 %v2448
        %v2450 = vpop.xlane.xlu0 %2449
        %v2451 = vsub.f32 %v2419, %v2429
        %v2452 = vsub.f32 %v2420, %v2432
        %v2453 = vsub.f32 %v2421, %v2435
        %v2454 = vsub.f32 %v2422, %v2438
        %v2455 = vsub.f32 %v2423, %v2441
        %v2456 = vsub.f32 %v2424, %v2444
        %v2457 = vsub.f32 %v2425, %v2447
        %v2458 = vsub.f32 %v2426, %v2450
        %v2459 = vmul.f32 %v2451, 1.442695
        %v2460 = vpow.pop %v2459
        %v2461 = vmul.f32 %v2452, 1.442695
        %v2462 = vpow.pop %v2461
        %v2463 = vmul.f32 %v2453, 1.442695
        %v2464 = vpow.pop %v2463
        %v2465 = vmul.f32 %v2454, 1.442695
        %v2466 = vpow.pop %v2465
        %v2467 = vmul.f32 %v2455, 1.442695
        %v2468 = vpow.pop %v2467
        %v2469 = vmul.f32 %v2456, 1.442695
        %v2470 = vpow.pop %v2469
        %v2471 = vmul.f32 %v2457, 1.442695
        %v2472 = vpow.pop %v2471
        %v2473 = vmul.f32 %v2458, 1.442695
        %v2474 = vpow.pop %v2473
        %v2475 = vsel %vm1228, %v2460, 0.0
        %2476 = vadd.xlane.f32.xlu0 %v2475
        %v2477 = vpop.xlane.xlu0 %2476
        %v2478 = vsel %vm1228, %v2462, 0.0
        %2479 = vadd.xlane.f32.xlu0 %v2478
        %v2480 = vpop.xlane.xlu0 %2479
        %v2481 = vsel %vm1228, %v2464, 0.0
        %2482 = vadd.xlane.f32.xlu0 %v2481
        %v2483 = vpop.xlane.xlu0 %2482
        %v2484 = vsel %vm1228, %v2466, 0.0
        %2485 = vadd.xlane.f32.xlu0 %v2484
        %v2486 = vpop.xlane.xlu0 %2485
        %v2487 = vsel %vm1228, %v2468, 0.0
        %2488 = vadd.xlane.f32.xlu0 %v2487
        %v2489 = vpop.xlane.xlu0 %2488
        %v2490 = vsel %vm1228, %v2470, 0.0
        %2491 = vadd.xlane.f32.xlu0 %v2490
        %v2492 = vpop.xlane.xlu0 %2491
        %v2493 = vsel %vm1228, %v2472, 0.0
        %2494 = vadd.xlane.f32.xlu0 %v2493
        %v2495 = vpop.xlane.xlu0 %2494
        %v2496 = vsel %vm1228, %v2474, 0.0
        %2497 = vadd.xlane.f32.xlu0 %v2496
        %v2498 = vpop.xlane.xlu0 %2497
        %v2499 = vrcp.pop %v2477
        %v2500 = vmul.f32 %v2477, %v2499
        %v2501 = vsub.f32 1.0, %v2500
        %v2502 = vmul.f32 %v2499, %v2501
        %v2503 = vadd.f32 %v2499, %v2502
        %vm2504 = vweird.f32 %v2477
        %vm2505 = vweird.f32 %v2499
        %vm2506 = vmor %vm2504, %vm2505
        %v2507 = vsel %vm2506, %v2499, %v2503
        %v2508 = vand.u32 2147483647, %v2477
        %vm2509 = vcmp.eq.f32.partialorder %v2508, 8.507059e+37
        %v2510 = vand.u32 %v2477, 2147483648
        %v2511 = vor.u32 1.1754944e-38, %v2510
        %v2512 = vsel %vm2509, %v2511, %v2507
        %v2513 = vrcp.pop %v2480
        %v2514 = vmul.f32 %v2480, %v2513
        %v2515 = vsub.f32 1.0, %v2514
        %v2516 = vmul.f32 %v2513, %v2515
        %v2517 = vadd.f32 %v2513, %v2516
        %vm2518 = vweird.f32 %v2480
        %vm2519 = vweird.f32 %v2513
        %vm2520 = vmor %vm2518, %vm2519
        %v2521 = vsel %vm2520, %v2513, %v2517
        %v2522 = vand.u32 2147483647, %v2480
        %vm2523 = vcmp.eq.f32.partialorder %v2522, 8.507059e+37
        %v2524 = vand.u32 %v2480, 2147483648
        %v2525 = vor.u32 1.1754944e-38, %v2524
        %v2526 = vsel %vm2523, %v2525, %v2521
        %v2527 = vrcp.pop %v2483
        %v2528 = vmul.f32 %v2483, %v2527
        %v2529 = vsub.f32 1.0, %v2528
        %v2530 = vmul.f32 %v2527, %v2529
        %v2531 = vadd.f32 %v2527, %v2530
        %vm2532 = vweird.f32 %v2483
        %vm2533 = vweird.f32 %v2527
        %vm2534 = vmor %vm2532, %vm2533
        %v2535 = vsel %vm2534, %v2527, %v2531
        %v2536 = vand.u32 2147483647, %v2483
        %vm2537 = vcmp.eq.f32.partialorder %v2536, 8.507059e+37
        %v2538 = vand.u32 %v2483, 2147483648
        %v2539 = vor.u32 1.1754944e-38, %v2538
        %v2540 = vsel %vm2537, %v2539, %v2535
        %v2541 = vrcp.pop %v2486
        %v2542 = vmul.f32 %v2486, %v2541
        %v2543 = vsub.f32 1.0, %v2542
        %v2544 = vmul.f32 %v2541, %v2543
        %v2545 = vadd.f32 %v2541, %v2544
        %vm2546 = vweird.f32 %v2486
        %vm2547 = vweird.f32 %v2541
        %vm2548 = vmor %vm2546, %vm2547
        %v2549 = vsel %vm2548, %v2541, %v2545
        %v2550 = vand.u32 2147483647, %v2486
        %vm2551 = vcmp.eq.f32.partialorder %v2550, 8.507059e+37
        %v2552 = vand.u32 %v2486, 2147483648
        %v2553 = vor.u32 1.1754944e-38, %v2552
        %v2554 = vsel %vm2551, %v2553, %v2549
        %v2555 = vrcp.pop %v2489
        %v2556 = vmul.f32 %v2489, %v2555
        %v2557 = vsub.f32 1.0, %v2556
        %v2558 = vmul.f32 %v2555, %v2557
        %v2559 = vadd.f32 %v2555, %v2558
        %vm2560 = vweird.f32 %v2489
        %vm2561 = vweird.f32 %v2555
        %vm2562 = vmor %vm2560, %vm2561
        %v2563 = vsel %vm2562, %v2555, %v2559
        %v2564 = vand.u32 2147483647, %v2489
        %vm2565 = vcmp.eq.f32.partialorder %v2564, 8.507059e+37
        %v2566 = vand.u32 %v2489, 2147483648
        %v2567 = vor.u32 1.1754944e-38, %v2566
        %v2568 = vsel %vm2565, %v2567, %v2563
        %v2569 = vrcp.pop %v2492
        %v2570 = vmul.f32 %v2492, %v2569
        %v2571 = vsub.f32 1.0, %v2570
        %v2572 = vmul.f32 %v2569, %v2571
        %v2573 = vadd.f32 %v2569, %v2572
        %vm2574 = vweird.f32 %v2492
        %vm2575 = vweird.f32 %v2569
        %vm2576 = vmor %vm2574, %vm2575
        %v2577 = vsel %vm2576, %v2569, %v2573
        %v2578 = vand.u32 2147483647, %v2492
        %vm2579 = vcmp.eq.f32.partialorder %v2578, 8.507059e+37
        %v2580 = vand.u32 %v2492, 2147483648
        %v2581 = vor.u32 1.1754944e-38, %v2580
        %v2582 = vsel %vm2579, %v2581, %v2577
        %v2583 = vrcp.pop %v2495
        %v2584 = vmul.f32 %v2495, %v2583
        %v2585 = vsub.f32 1.0, %v2584
        %v2586 = vmul.f32 %v2583, %v2585
        %v2587 = vadd.f32 %v2583, %v2586
        %vm2588 = vweird.f32 %v2495
        %vm2589 = vweird.f32 %v2583
        %vm2590 = vmor %vm2588, %vm2589
        %v2591 = vsel %vm2590, %v2583, %v2587
        %v2592 = vand.u32 2147483647, %v2495
        %vm2593 = vcmp.eq.f32.partialorder %v2592, 8.507059e+37
        %v2594 = vand.u32 %v2495, 2147483648
        %v2595 = vor.u32 1.1754944e-38, %v2594
        %v2596 = vsel %vm2593, %v2595, %v2591
        %v2597 = vrcp.pop %v2498
        %v2598 = vmul.f32 %v2498, %v2597
        %v2599 = vsub.f32 1.0, %v2598
        %v2600 = vmul.f32 %v2597, %v2599
        %v2601 = vadd.f32 %v2597, %v2600
        %vm2602 = vweird.f32 %v2498
        %vm2603 = vweird.f32 %v2597
        %vm2604 = vmor %vm2602, %vm2603
        %v2605 = vsel %vm2604, %v2597, %v2601
        %v2606 = vand.u32 2147483647, %v2498
        %vm2607 = vcmp.eq.f32.partialorder %v2606, 8.507059e+37
        %v2608 = vand.u32 %v2498, 2147483648
        %v2609 = vor.u32 1.1754944e-38, %v2608
        %v2610 = vsel %vm2607, %v2609, %v2605
        %v2611 = vmul.f32 %v2460, %v2512
        %v2612 = vmul.f32 %v2462, %v2526
        %v2613 = vmul.f32 %v2464, %v2540
        %v2614 = vmul.f32 %v2466, %v2554
        %v2615 = vmul.f32 %v2468, %v2568
        %v2616 = vmul.f32 %v2470, %v2582
        %v2617 = vmul.f32 %v2472, %v2596
        %v2618 = vmul.f32 %v2474, %v2610
        %2619 = vrot.lane.b32.xlu0 %v881, 32
        %v2620 = vpop.permute.xlu0 %2619
        %2621 = vrot.lane.b32.xlu0 %v884, 32
        %v2622 = vpop.permute.xlu0 %2621
        %2623 = vrot.lane.b32.xlu0 %v887, 32
        %v2624 = vpop.permute.xlu0 %2623
        %2625 = vrot.lane.b32.xlu0 %v890, 32
        %v2626 = vpop.permute.xlu0 %2625
        %2627 = vrot.lane.b32.xlu0 %v893, 32
        %v2628 = vpop.permute.xlu0 %2627
        %2629 = vrot.lane.b32.xlu0 %v896, 32
        %v2630 = vpop.permute.xlu0 %2629
        %2631 = vrot.lane.b32.xlu0 %v899, 32
        %v2632 = vpop.permute.xlu0 %2631
        %2633 = vrot.lane.b32.xlu0 %v902, 32
        %v2634 = vpop.permute.xlu0 %2633
        %v2644 = vsel %vm1228, %v2611, 0
        %v2647 = vsel %vm1228, %v2612, 0
        %v2650 = vsel %vm1228, %v2613, 0
        %v2653 = vsel %vm1228, %v2614, 0
        %v2656 = vsel %vm1228, %v2615, 0
        %v2659 = vsel %vm1228, %v2616, 0
        %v2662 = vsel %vm1228, %v2617, 0
        %v2665 = vsel %vm1228, %v2618, 0
        %2667 = vmatpush.msra.mxu0 0.0
        %2668 = vmatpush.msra.mxu0 0.0
        %2669 = vmatpush.msra.mxu0 0.0
        %2670 = vmatpush.msra.mxu0 0.0
        %2671 = vmatpush.msra.mxu0 0.0
        %2672 = vmatpush.msra.mxu0 0.0
        %2673 = vmatpush.msra.mxu0 0.0
        %2674 = vmatpush.msra.mxu0 0.0
        %2675 = vmatpush.msra.mxu0 %v2634
        %2676 = vmatpush.msra.mxu0 %v2632
        %2677 = vmatpush.msra.mxu0 %v2630
        %2678 = vmatpush.msra.mxu0 %v2628
        %2679 = vmatpush.msra.mxu0 %v2626
        %2680 = vmatpush.msra.mxu0 %v2624
        %2681 = vmatpush.msra.mxu0 %v2622
        %2682 = vmatpush.msra.mxu0 %v2620
        %2683 = vmatmul.f32.gmra.mxu0 %v2644
        %v2684 = vpop.f32.mrf.mxu0
        %v2685 = vadd.f32 0.0, %v2684
        %2686 = vmatmul.f32.gmra.mxu0 %v2647
        %v2687 = vpop.f32.mrf.mxu0
        %v2688 = vadd.f32 0.0, %v2687
        %2689 = vmatmul.f32.gmra.mxu0 %v2650
        %v2690 = vpop.f32.mrf.mxu0
        %v2691 = vadd.f32 0.0, %v2690
        %2692 = vmatmul.f32.gmra.mxu0 %v2653
        %v2693 = vpop.f32.mrf.mxu0
        %v2694 = vadd.f32 0.0, %v2693
        %2695 = vmatmul.f32.gmra.mxu0 %v2656
        %v2696 = vpop.f32.mrf.mxu0
        %v2697 = vadd.f32 0.0, %v2696
        %2698 = vmatmul.f32.gmra.mxu0 %v2659
        %v2699 = vpop.f32.mrf.mxu0
        %v2700 = vadd.f32 0.0, %v2699
        %2701 = vmatmul.f32.gmra.mxu0 %v2662
        %v2702 = vpop.f32.mrf.mxu0
        %v2703 = vadd.f32 0.0, %v2702
        %2704 = vmatmul.f32.gmra.mxu0 %v2665
        %v2705 = vpop.f32.mrf.mxu0
        %v2706 = vadd.f32 0.0, %v2705
        %2707 = vdwg.mxu0
        %v2708 = vadd.f32 %v2298, %v2685
        %v2709 = vadd.f32 %v2299, %v2688
        %v2710 = vadd.f32 %v2300, %v2691
        %v2711 = vadd.f32 %v2301, %v2694
        %v2712 = vadd.f32 %v2302, %v2697
        %v2713 = vadd.f32 %v2303, %v2700
        %v2714 = vadd.f32 %v2304, %v2703
        %v2715 = vadd.f32 %v2305, %v2706
        %v2717 = vsel %vm445, %v758, 0
        %v2720 = vsel %vm445, %v761, 0
        %v2723 = vsel %vm445, %v764, 0
        %v2726 = vsel %vm445, %v767, 0
        %v2729 = vsel %vm445, %v770, 0
        %v2732 = vsel %vm445, %v773, 0
        %v2735 = vsel %vm445, %v776, 0
        %v2738 = vsel %vm445, %v779, 0
        %v2741 = vsel %vm445, %v840, 0
        %v2744 = vsel %vm445, %v843, 0
        %v2747 = vsel %vm445, %v846, 0
        %v2750 = vsel %vm445, %v849, 0
        %v2753 = vsel %vm445, %v852, 0
        %v2756 = vsel %vm445, %v855, 0
        %v2759 = vsel %vm445, %v858, 0
        %v2762 = vsel %vm445, %v861, 0
        %2764 = vmatpush.xpose.msra.mxu0 0.0
        %2765 = vmatpush.xpose.msra.mxu0 0.0
        %2766 = vmatpush.xpose.msra.mxu0 0.0
        %2767 = vmatpush.xpose.msra.mxu0 0.0
        %2768 = vmatpush.xpose.msra.mxu0 0.0
        %2769 = vmatpush.xpose.msra.mxu0 0.0
        %2770 = vmatpush.xpose.msra.mxu0 0.0
        %2771 = vmatpush.xpose.msra.mxu0 0.0
        %2772 = vmatpush.xpose.msra.mxu0 %v2762
        %2773 = vmatpush.xpose.msra.mxu0 %v2759
        %2774 = vmatpush.xpose.msra.mxu0 %v2756
        %2775 = vmatpush.xpose.msra.mxu0 %v2753
        %2776 = vmatpush.xpose.msra.mxu0 %v2750
        %2777 = vmatpush.xpose.msra.mxu0 %v2747
        %2778 = vmatpush.xpose.msra.mxu0 %v2744
        %2779 = vmatpush.xpose.msra.mxu0 %v2741
        %2780 = vmatmul.f32.gmra.mxu0 %v2717
        %v2781 = vpop.f32.mrf.mxu0
        %v2782 = vadd.f32 0.0, %v2781
        %2783 = vmatmul.f32.gmra.mxu0 %v2720
        %v2784 = vpop.f32.mrf.mxu0
        %v2785 = vadd.f32 0.0, %v2784
        %2786 = vmatmul.f32.gmra.mxu0 %v2723
        %v2787 = vpop.f32.mrf.mxu0
        %v2788 = vadd.f32 0.0, %v2787
        %2789 = vmatmul.f32.gmra.mxu0 %v2726
        %v2790 = vpop.f32.mrf.mxu0
        %v2791 = vadd.f32 0.0, %v2790
        %2792 = vmatmul.f32.gmra.mxu0 %v2729
        %v2793 = vpop.f32.mrf.mxu0
        %v2794 = vadd.f32 0.0, %v2793
        %2795 = vmatmul.f32.gmra.mxu0 %v2732
        %v2796 = vpop.f32.mrf.mxu0
        %v2797 = vadd.f32 0.0, %v2796
        %2798 = vmatmul.f32.gmra.mxu0 %v2735
        %v2799 = vpop.f32.mrf.mxu0
        %v2800 = vadd.f32 0.0, %v2799
        %2801 = vmatmul.f32.gmra.mxu0 %v2738
        %v2802 = vpop.f32.mrf.mxu0
        %v2803 = vadd.f32 0.0, %v2802
        %2804 = vdwg.mxu0
        %v2805 = vmul.f32 %v1175, %v2782
        %v2806 = vmul.f32 %v1180, %v2785
        %v2807 = vmul.f32 %v1185, %v2788
        %v2808 = vmul.f32 %v1190, %v2791
        %v2809 = vmul.f32 %v1195, %v2794
        %v2810 = vmul.f32 %v1200, %v2797
        %v2811 = vmul.f32 %v1205, %v2800
        %v2812 = vmul.f32 %v1210, %v2803
        %v2813 = vadd.f32 %v2805, %v1075
        %v2814 = vadd.f32 %v2806, %v1076
        %v2815 = vadd.f32 %v2807, %v1077
        %v2816 = vadd.f32 %v2808, %v1078
        %v2817 = vadd.f32 %v2809, %v1079
        %v2818 = vadd.f32 %v2810, %v1080
        %v2819 = vadd.f32 %v2811, %v1081
        %v2820 = vadd.f32 %v2812, %v1082
        %v2821 = vsel %vm1228, %v2813, -inf
        %2822 = vmax.xlane.f32.xlu0 %v2821
        %v2823 = vpop.xlane.xlu0 %2822
        %v2824 = vsel %vm1228, %v2814, -inf
        %2825 = vmax.xlane.f32.xlu0 %v2824
        %v2826 = vpop.xlane.xlu0 %2825
        %v2827 = vsel %vm1228, %v2815, -inf
        %2828 = vmax.xlane.f32.xlu0 %v2827
        %v2829 = vpop.xlane.xlu0 %2828
        %v2830 = vsel %vm1228, %v2816, -inf
        %2831 = vmax.xlane.f32.xlu0 %v2830
        %v2832 = vpop.xlane.xlu0 %2831
        %v2833 = vsel %vm1228, %v2817, -inf
        %2834 = vmax.xlane.f32.xlu0 %v2833
        %v2835 = vpop.xlane.xlu0 %2834
        %v2836 = vsel %vm1228, %v2818, -inf
        %2837 = vmax.xlane.f32.xlu0 %v2836
        %v2838 = vpop.xlane.xlu0 %2837
        %v2839 = vsel %vm1228, %v2819, -inf
        %2840 = vmax.xlane.f32.xlu0 %v2839
        %v2841 = vpop.xlane.xlu0 %2840
        %v2842 = vsel %vm1228, %v2820, -inf
        %2843 = vmax.xlane.f32.xlu0 %v2842
        %v2844 = vpop.xlane.xlu0 %2843
        %v2845 = vsub.f32 %v2813, %v2823
        %v2846 = vsub.f32 %v2814, %v2826
        %v2847 = vsub.f32 %v2815, %v2829
        %v2848 = vsub.f32 %v2816, %v2832
        %v2849 = vsub.f32 %v2817, %v2835
        %v2850 = vsub.f32 %v2818, %v2838
        %v2851 = vsub.f32 %v2819, %v2841
        %v2852 = vsub.f32 %v2820, %v2844
        %v2853 = vmul.f32 %v2845, 1.442695
        %v2854 = vpow.pop %v2853
        %v2855 = vmul.f32 %v2846, 1.442695
        %v2856 = vpow.pop %v2855
        %v2857 = vmul.f32 %v2847, 1.442695
        %v2858 = vpow.pop %v2857
        %v2859 = vmul.f32 %v2848, 1.442695
        %v2860 = vpow.pop %v2859
        %v2861 = vmul.f32 %v2849, 1.442695
        %v2862 = vpow.pop %v2861
        %v2863 = vmul.f32 %v2850, 1.442695
        %v2864 = vpow.pop %v2863
        %v2865 = vmul.f32 %v2851, 1.442695
        %v2866 = vpow.pop %v2865
        %v2867 = vmul.f32 %v2852, 1.442695
        %v2868 = vpow.pop %v2867
        %v2869 = vsel %vm1228, %v2854, 0.0
        %2870 = vadd.xlane.f32.xlu0 %v2869
        %v2871 = vpop.xlane.xlu0 %2870
        %v2872 = vsel %vm1228, %v2856, 0.0
        %2873 = vadd.xlane.f32.xlu0 %v2872
        %v2874 = vpop.xlane.xlu0 %2873
        %v2875 = vsel %vm1228, %v2858, 0.0
        %2876 = vadd.xlane.f32.xlu0 %v2875
        %v2877 = vpop.xlane.xlu0 %2876
        %v2878 = vsel %vm1228, %v2860, 0.0
        %2879 = vadd.xlane.f32.xlu0 %v2878
        %v2880 = vpop.xlane.xlu0 %2879
        %v2881 = vsel %vm1228, %v2862, 0.0
        %2882 = vadd.xlane.f32.xlu0 %v2881
        %v2883 = vpop.xlane.xlu0 %2882
        %v2884 = vsel %vm1228, %v2864, 0.0
        %2885 = vadd.xlane.f32.xlu0 %v2884
        %v2886 = vpop.xlane.xlu0 %2885
        %v2887 = vsel %vm1228, %v2866, 0.0
        %2888 = vadd.xlane.f32.xlu0 %v2887
        %v2889 = vpop.xlane.xlu0 %2888
        %v2890 = vsel %vm1228, %v2868, 0.0
        %2891 = vadd.xlane.f32.xlu0 %v2890
        %v2892 = vpop.xlane.xlu0 %2891
        %v2893 = vrcp.pop %v2871
        %v2894 = vmul.f32 %v2871, %v2893
        %v2895 = vsub.f32 1.0, %v2894
        %v2896 = vmul.f32 %v2893, %v2895
        %v2897 = vadd.f32 %v2893, %v2896
        %vm2898 = vweird.f32 %v2871
        %vm2899 = vweird.f32 %v2893
        %vm2900 = vmor %vm2898, %vm2899
        %v2901 = vsel %vm2900, %v2893, %v2897
        %v2902 = vand.u32 2147483647, %v2871
        %vm2903 = vcmp.eq.f32.partialorder %v2902, 8.507059e+37
        %v2904 = vand.u32 %v2871, 2147483648
        %v2905 = vor.u32 1.1754944e-38, %v2904
        %v2906 = vsel %vm2903, %v2905, %v2901
        %v2907 = vrcp.pop %v2874
        %v2908 = vmul.f32 %v2874, %v2907
        %v2909 = vsub.f32 1.0, %v2908
        %v2910 = vmul.f32 %v2907, %v2909
        %v2911 = vadd.f32 %v2907, %v2910
        %vm2912 = vweird.f32 %v2874
        %vm2913 = vweird.f32 %v2907
        %vm2914 = vmor %vm2912, %vm2913
        %v2915 = vsel %vm2914, %v2907, %v2911
        %v2916 = vand.u32 2147483647, %v2874
        %vm2917 = vcmp.eq.f32.partialorder %v2916, 8.507059e+37
        %v2918 = vand.u32 %v2874, 2147483648
        %v2919 = vor.u32 1.1754944e-38, %v2918
        %v2920 = vsel %vm2917, %v2919, %v2915
        %v2921 = vrcp.pop %v2877
        %v2922 = vmul.f32 %v2877, %v2921
        %v2923 = vsub.f32 1.0, %v2922
        %v2924 = vmul.f32 %v2921, %v2923
        %v2925 = vadd.f32 %v2921, %v2924
        %vm2926 = vweird.f32 %v2877
        %vm2927 = vweird.f32 %v2921
        %vm2928 = vmor %vm2926, %vm2927
        %v2929 = vsel %vm2928, %v2921, %v2925
        %v2930 = vand.u32 2147483647, %v2877
        %vm2931 = vcmp.eq.f32.partialorder %v2930, 8.507059e+37
        %v2932 = vand.u32 %v2877, 2147483648
        %v2933 = vor.u32 1.1754944e-38, %v2932
        %v2934 = vsel %vm2931, %v2933, %v2929
        %v2935 = vrcp.pop %v2880
        %v2936 = vmul.f32 %v2880, %v2935
        %v2937 = vsub.f32 1.0, %v2936
        %v2938 = vmul.f32 %v2935, %v2937
        %v2939 = vadd.f32 %v2935, %v2938
        %vm2940 = vweird.f32 %v2880
        %vm2941 = vweird.f32 %v2935
        %vm2942 = vmor %vm2940, %vm2941
        %v2943 = vsel %vm2942, %v2935, %v2939
        %v2944 = vand.u32 2147483647, %v2880
        %vm2945 = vcmp.eq.f32.partialorder %v2944, 8.507059e+37
        %v2946 = vand.u32 %v2880, 2147483648
        %v2947 = vor.u32 1.1754944e-38, %v2946
        %v2948 = vsel %vm2945, %v2947, %v2943
        %v2949 = vrcp.pop %v2883
        %v2950 = vmul.f32 %v2883, %v2949
        %v2951 = vsub.f32 1.0, %v2950
        %v2952 = vmul.f32 %v2949, %v2951
        %v2953 = vadd.f32 %v2949, %v2952
        %vm2954 = vweird.f32 %v2883
        %vm2955 = vweird.f32 %v2949
        %vm2956 = vmor %vm2954, %vm2955
        %v2957 = vsel %vm2956, %v2949, %v2953
        %v2958 = vand.u32 2147483647, %v2883
        %vm2959 = vcmp.eq.f32.partialorder %v2958, 8.507059e+37
        %v2960 = vand.u32 %v2883, 2147483648
        %v2961 = vor.u32 1.1754944e-38, %v2960
        %v2962 = vsel %vm2959, %v2961, %v2957
        %v2963 = vrcp.pop %v2886
        %v2964 = vmul.f32 %v2886, %v2963
        %v2965 = vsub.f32 1.0, %v2964
        %v2966 = vmul.f32 %v2963, %v2965
        %v2967 = vadd.f32 %v2963, %v2966
        %vm2968 = vweird.f32 %v2886
        %vm2969 = vweird.f32 %v2963
        %vm2970 = vmor %vm2968, %vm2969
        %v2971 = vsel %vm2970, %v2963, %v2967
        %v2972 = vand.u32 2147483647, %v2886
        %vm2973 = vcmp.eq.f32.partialorder %v2972, 8.507059e+37
        %v2974 = vand.u32 %v2886, 2147483648
        %v2975 = vor.u32 1.1754944e-38, %v2974
        %v2976 = vsel %vm2973, %v2975, %v2971
        %v2977 = vrcp.pop %v2889
        %v2978 = vmul.f32 %v2889, %v2977
        %v2979 = vsub.f32 1.0, %v2978
        %v2980 = vmul.f32 %v2977, %v2979
        %v2981 = vadd.f32 %v2977, %v2980
        %vm2982 = vweird.f32 %v2889
        %vm2983 = vweird.f32 %v2977
        %vm2984 = vmor %vm2982, %vm2983
        %v2985 = vsel %vm2984, %v2977, %v2981
        %v2986 = vand.u32 2147483647, %v2889
        %vm2987 = vcmp.eq.f32.partialorder %v2986, 8.507059e+37
        %v2988 = vand.u32 %v2889, 2147483648
        %v2989 = vor.u32 1.1754944e-38, %v2988
        %v2990 = vsel %vm2987, %v2989, %v2985
        %v2991 = vrcp.pop %v2892
        %v2992 = vmul.f32 %v2892, %v2991
        %v2993 = vsub.f32 1.0, %v2992
        %v2994 = vmul.f32 %v2991, %v2993
        %v2995 = vadd.f32 %v2991, %v2994
        %vm2996 = vweird.f32 %v2892
        %vm2997 = vweird.f32 %v2991
        %vm2998 = vmor %vm2996, %vm2997
        %v2999 = vsel %vm2998, %v2991, %v2995
        %v3000 = vand.u32 2147483647, %v2892
        %vm3001 = vcmp.eq.f32.partialorder %v3000, 8.507059e+37
        %v3002 = vand.u32 %v2892, 2147483648
        %v3003 = vor.u32 1.1754944e-38, %v3002
        %v3004 = vsel %vm3001, %v3003, %v2999
        %v3005 = vmul.f32 %v2854, %v2906
        %v3006 = vmul.f32 %v2856, %v2920
        %v3007 = vmul.f32 %v2858, %v2934
        %v3008 = vmul.f32 %v2860, %v2948
        %v3009 = vmul.f32 %v2862, %v2962
        %v3010 = vmul.f32 %v2864, %v2976
        %v3011 = vmul.f32 %v2866, %v2990
        %v3012 = vmul.f32 %v2868, %v3004
        %v3014 = vsel %vm1228, %v3005, 0
        %v3017 = vsel %vm1228, %v3006, 0
        %v3020 = vsel %vm1228, %v3007, 0
        %v3023 = vsel %vm1228, %v3008, 0
        %v3026 = vsel %vm1228, %v3009, 0
        %v3029 = vsel %vm1228, %v3010, 0
        %v3032 = vsel %vm1228, %v3011, 0
        %v3035 = vsel %vm1228, %v3012, 0
        %3037 = vmatpush.msra.mxu0 0.0
        %3038 = vmatpush.msra.mxu0 0.0
        %3039 = vmatpush.msra.mxu0 0.0
        %3040 = vmatpush.msra.mxu0 0.0
        %3041 = vmatpush.msra.mxu0 0.0
        %3042 = vmatpush.msra.mxu0 0.0
        %3043 = vmatpush.msra.mxu0 0.0
        %3044 = vmatpush.msra.mxu0 0.0
        %3045 = vmatpush.msra.mxu0 %v943
        %3046 = vmatpush.msra.mxu0 %v940
        %3047 = vmatpush.msra.mxu0 %v937
        %3048 = vmatpush.msra.mxu0 %v934
        %3049 = vmatpush.msra.mxu0 %v931
        %3050 = vmatpush.msra.mxu0 %v928
        %3051 = vmatpush.msra.mxu0 %v925
        %3052 = vmatpush.msra.mxu0 %v922
        %3053 = vmatmul.f32.gmra.mxu0 %v3014
        %v3054 = vpop.f32.mrf.mxu0
        %v3055 = vadd.f32 0.0, %v3054
        %3056 = vmatmul.f32.gmra.mxu0 %v3017
        %v3057 = vpop.f32.mrf.mxu0
        %v3058 = vadd.f32 0.0, %v3057
        %3059 = vmatmul.f32.gmra.mxu0 %v3020
        %v3060 = vpop.f32.mrf.mxu0
        %v3061 = vadd.f32 0.0, %v3060
        %3062 = vmatmul.f32.gmra.mxu0 %v3023
        %v3063 = vpop.f32.mrf.mxu0
        %v3064 = vadd.f32 0.0, %v3063
        %3065 = vmatmul.f32.gmra.mxu0 %v3026
        %v3066 = vpop.f32.mrf.mxu0
        %v3067 = vadd.f32 0.0, %v3066
        %3068 = vmatmul.f32.gmra.mxu0 %v3029
        %v3069 = vpop.f32.mrf.mxu0
        %v3070 = vadd.f32 0.0, %v3069
        %3071 = vmatmul.f32.gmra.mxu0 %v3032
        %v3072 = vpop.f32.mrf.mxu0
        %v3073 = vadd.f32 0.0, %v3072
        %3074 = vmatmul.f32.gmra.mxu0 %v3035
        %v3075 = vpop.f32.mrf.mxu0
        %v3076 = vadd.f32 0.0, %v3075
        %3077 = vdwg.mxu0
        %v3078 = vadd.f32 %v2708, %v3055
        %v3079 = vadd.f32 %v2709, %v3058
        %v3080 = vadd.f32 %v2710, %v3061
        %v3081 = vadd.f32 %v2711, %v3064
        %v3082 = vadd.f32 %v2712, %v3067
        %v3083 = vadd.f32 %v2713, %v3070
        %v3084 = vadd.f32 %v2714, %v3073
        %v3085 = vadd.f32 %v2715, %v3076
        %3086 = vrot.lane.b32.xlu0 %v758, 96
        %v3087 = vpop.permute.xlu0 %3086
        %3088 = vrot.lane.b32.xlu0 %v761, 96
        %v3089 = vpop.permute.xlu0 %3088
        %3090 = vrot.lane.b32.xlu0 %v764, 96
        %v3091 = vpop.permute.xlu0 %3090
        %3092 = vrot.lane.b32.xlu0 %v767, 96
        %v3093 = vpop.permute.xlu0 %3092
        %3094 = vrot.lane.b32.xlu0 %v770, 96
        %v3095 = vpop.permute.xlu0 %3094
        %3096 = vrot.lane.b32.xlu0 %v773, 96
        %v3097 = vpop.permute.xlu0 %3096
        %3098 = vrot.lane.b32.xlu0 %v776, 96
        %v3099 = vpop.permute.xlu0 %3098
        %3100 = vrot.lane.b32.xlu0 %v779, 96
        %v3101 = vpop.permute.xlu0 %3100
        %3102 = vrot.lane.b32.xlu0 %v840, 96
        %v3103 = vpop.permute.xlu0 %3102
        %3104 = vrot.lane.b32.xlu0 %v843, 96
        %v3105 = vpop.permute.xlu0 %3104
        %3106 = vrot.lane.b32.xlu0 %v846, 96
        %v3107 = vpop.permute.xlu0 %3106
        %3108 = vrot.lane.b32.xlu0 %v849, 96
        %v3109 = vpop.permute.xlu0 %3108
        %3110 = vrot.lane.b32.xlu0 %v852, 96
        %v3111 = vpop.permute.xlu0 %3110
        %3112 = vrot.lane.b32.xlu0 %v855, 96
        %v3113 = vpop.permute.xlu0 %3112
        %3114 = vrot.lane.b32.xlu0 %v858, 96
        %v3115 = vpop.permute.xlu0 %3114
        %3116 = vrot.lane.b32.xlu0 %v861, 96
        %v3117 = vpop.permute.xlu0 %3116
        %v3118 = vsel %vm445, %v3087, 0
        %v3120 = vsel %vm445, %v3089, 0
        %v3122 = vsel %vm445, %v3091, 0
        %v3124 = vsel %vm445, %v3093, 0
        %v3126 = vsel %vm445, %v3095, 0
        %v3128 = vsel %vm445, %v3097, 0
        %v3130 = vsel %vm445, %v3099, 0
        %v3132 = vsel %vm445, %v3101, 0
        %v3134 = vsel %vm445, %v3103, 0
        %v3136 = vsel %vm445, %v3105, 0
        %v3138 = vsel %vm445, %v3107, 0
        %v3140 = vsel %vm445, %v3109, 0
        %v3142 = vsel %vm445, %v3111, 0
        %v3144 = vsel %vm445, %v3113, 0
        %v3146 = vsel %vm445, %v3115, 0
        %v3148 = vsel %vm445, %v3117, 0
        %3150 = vmatpush.xpose.msra.mxu0 0.0
        %3151 = vmatpush.xpose.msra.mxu0 0.0
        %3152 = vmatpush.xpose.msra.mxu0 0.0
        %3153 = vmatpush.xpose.msra.mxu0 0.0
        %3154 = vmatpush.xpose.msra.mxu0 0.0
        %3155 = vmatpush.xpose.msra.mxu0 0.0
        %3156 = vmatpush.xpose.msra.mxu0 0.0
        %3157 = vmatpush.xpose.msra.mxu0 0.0
        %3158 = vmatpush.xpose.msra.mxu0 %v3148
        %3159 = vmatpush.xpose.msra.mxu0 %v3146
        %3160 = vmatpush.xpose.msra.mxu0 %v3144
        %3161 = vmatpush.xpose.msra.mxu0 %v3142
        %3162 = vmatpush.xpose.msra.mxu0 %v3140
        %3163 = vmatpush.xpose.msra.mxu0 %v3138
        %3164 = vmatpush.xpose.msra.mxu0 %v3136
        %3165 = vmatpush.xpose.msra.mxu0 %v3134
        %3166 = vmatmul.f32.gmra.mxu0 %v3118
        %v3167 = vpop.f32.mrf.mxu0
        %v3168 = vadd.f32 0.0, %v3167
        %3169 = vmatmul.f32.gmra.mxu0 %v3120
        %v3170 = vpop.f32.mrf.mxu0
        %v3171 = vadd.f32 0.0, %v3170
        %3172 = vmatmul.f32.gmra.mxu0 %v3122
        %v3173 = vpop.f32.mrf.mxu0
        %v3174 = vadd.f32 0.0, %v3173
        %3175 = vmatmul.f32.gmra.mxu0 %v3124
        %v3176 = vpop.f32.mrf.mxu0
        %v3177 = vadd.f32 0.0, %v3176
        %3178 = vmatmul.f32.gmra.mxu0 %v3126
        %v3179 = vpop.f32.mrf.mxu0
        %v3180 = vadd.f32 0.0, %v3179
        %3181 = vmatmul.f32.gmra.mxu0 %v3128
        %v3182 = vpop.f32.mrf.mxu0
        %v3183 = vadd.f32 0.0, %v3182
        %3184 = vmatmul.f32.gmra.mxu0 %v3130
        %v3185 = vpop.f32.mrf.mxu0
        %v3186 = vadd.f32 0.0, %v3185
        %3187 = vmatmul.f32.gmra.mxu0 %v3132
        %v3188 = vpop.f32.mrf.mxu0
        %v3189 = vadd.f32 0.0, %v3188
        %3190 = vdwg.mxu0
        %v3191 = vmul.f32 %v1175, %v3168
        %v3192 = vmul.f32 %v1180, %v3171
        %v3193 = vmul.f32 %v1185, %v3174
        %v3194 = vmul.f32 %v1190, %v3177
        %v3195 = vmul.f32 %v1195, %v3180
        %v3196 = vmul.f32 %v1200, %v3183
        %v3197 = vmul.f32 %v1205, %v3186
        %v3198 = vmul.f32 %v1210, %v3189
        %v3199 = vadd.f32 %v3191, %v1075
        %v3200 = vadd.f32 %v3192, %v1076
        %v3201 = vadd.f32 %v3193, %v1077
        %v3202 = vadd.f32 %v3194, %v1078
        %v3203 = vadd.f32 %v3195, %v1079
        %v3204 = vadd.f32 %v3196, %v1080
        %v3205 = vadd.f32 %v3197, %v1081
        %v3206 = vadd.f32 %v3198, %v1082
        %v3207 = vsel %vm1228, %v3199, -inf
        %3208 = vmax.xlane.f32.xlu0 %v3207
        %v3209 = vpop.xlane.xlu0 %3208
        %v3210 = vsel %vm1228, %v3200, -inf
        %3211 = vmax.xlane.f32.xlu0 %v3210
        %v3212 = vpop.xlane.xlu0 %3211
        %v3213 = vsel %vm1228, %v3201, -inf
        %3214 = vmax.xlane.f32.xlu0 %v3213
        %v3215 = vpop.xlane.xlu0 %3214
        %v3216 = vsel %vm1228, %v3202, -inf
        %3217 = vmax.xlane.f32.xlu0 %v3216
        %v3218 = vpop.xlane.xlu0 %3217
        %v3219 = vsel %vm1228, %v3203, -inf
        %3220 = vmax.xlane.f32.xlu0 %v3219
        %v3221 = vpop.xlane.xlu0 %3220
        %v3222 = vsel %vm1228, %v3204, -inf
        %3223 = vmax.xlane.f32.xlu0 %v3222
        %v3224 = vpop.xlane.xlu0 %3223
        %v3225 = vsel %vm1228, %v3205, -inf
        %3226 = vmax.xlane.f32.xlu0 %v3225
        %v3227 = vpop.xlane.xlu0 %3226
        %v3228 = vsel %vm1228, %v3206, -inf
        %3229 = vmax.xlane.f32.xlu0 %v3228
        %v3230 = vpop.xlane.xlu0 %3229
        %v3231 = vsub.f32 %v3199, %v3209
        %v3232 = vsub.f32 %v3200, %v3212
        %v3233 = vsub.f32 %v3201, %v3215
        %v3234 = vsub.f32 %v3202, %v3218
        %v3235 = vsub.f32 %v3203, %v3221
        %v3236 = vsub.f32 %v3204, %v3224
        %v3237 = vsub.f32 %v3205, %v3227
        %v3238 = vsub.f32 %v3206, %v3230
        %v3239 = vmul.f32 %v3231, 1.442695
        %v3240 = vpow.pop %v3239
        %v3241 = vmul.f32 %v3232, 1.442695
        %v3242 = vpow.pop %v3241
        %v3243 = vmul.f32 %v3233, 1.442695
        %v3244 = vpow.pop %v3243
        %v3245 = vmul.f32 %v3234, 1.442695
        %v3246 = vpow.pop %v3245
        %v3247 = vmul.f32 %v3235, 1.442695
        %v3248 = vpow.pop %v3247
        %v3249 = vmul.f32 %v3236, 1.442695
        %v3250 = vpow.pop %v3249
        %v3251 = vmul.f32 %v3237, 1.442695
        %v3252 = vpow.pop %v3251
        %v3253 = vmul.f32 %v3238, 1.442695
        %v3254 = vpow.pop %v3253
        %v3255 = vsel %vm1228, %v3240, 0.0
        %3256 = vadd.xlane.f32.xlu0 %v3255
        %v3257 = vpop.xlane.xlu0 %3256
        %v3258 = vsel %vm1228, %v3242, 0.0
        %3259 = vadd.xlane.f32.xlu0 %v3258
        %v3260 = vpop.xlane.xlu0 %3259
        %v3261 = vsel %vm1228, %v3244, 0.0
        %3262 = vadd.xlane.f32.xlu0 %v3261
        %v3263 = vpop.xlane.xlu0 %3262
        %v3264 = vsel %vm1228, %v3246, 0.0
        %3265 = vadd.xlane.f32.xlu0 %v3264
        %v3266 = vpop.xlane.xlu0 %3265
        %v3267 = vsel %vm1228, %v3248, 0.0
        %3268 = vadd.xlane.f32.xlu0 %v3267
        %v3269 = vpop.xlane.xlu0 %3268
        %v3270 = vsel %vm1228, %v3250, 0.0
        %3271 = vadd.xlane.f32.xlu0 %v3270
        %v3272 = vpop.xlane.xlu0 %3271
        %v3273 = vsel %vm1228, %v3252, 0.0
        %3274 = vadd.xlane.f32.xlu0 %v3273
        %v3275 = vpop.xlane.xlu0 %3274
        %v3276 = vsel %vm1228, %v3254, 0.0
        %3277 = vadd.xlane.f32.xlu0 %v3276
        %v3278 = vpop.xlane.xlu0 %3277
        %v3279 = vrcp.pop %v3257
        %v3280 = vmul.f32 %v3257, %v3279
        %v3281 = vsub.f32 1.0, %v3280
        %v3282 = vmul.f32 %v3279, %v3281
        %v3283 = vadd.f32 %v3279, %v3282
        %vm3284 = vweird.f32 %v3257
        %vm3285 = vweird.f32 %v3279
        %vm3286 = vmor %vm3284, %vm3285
        %v3287 = vsel %vm3286, %v3279, %v3283
        %v3288 = vand.u32 2147483647, %v3257
        %vm3289 = vcmp.eq.f32.partialorder %v3288, 8.507059e+37
        %v3290 = vand.u32 %v3257, 2147483648
        %v3291 = vor.u32 1.1754944e-38, %v3290
        %v3292 = vsel %vm3289, %v3291, %v3287
        %v3293 = vrcp.pop %v3260
        %v3294 = vmul.f32 %v3260, %v3293
        %v3295 = vsub.f32 1.0, %v3294
        %v3296 = vmul.f32 %v3293, %v3295
        %v3297 = vadd.f32 %v3293, %v3296
        %vm3298 = vweird.f32 %v3260
        %vm3299 = vweird.f32 %v3293
        %vm3300 = vmor %vm3298, %vm3299
        %v3301 = vsel %vm3300, %v3293, %v3297
        %v3302 = vand.u32 2147483647, %v3260
        %vm3303 = vcmp.eq.f32.partialorder %v3302, 8.507059e+37
        %v3304 = vand.u32 %v3260, 2147483648
        %v3305 = vor.u32 1.1754944e-38, %v3304
        %v3306 = vsel %vm3303, %v3305, %v3301
        %v3307 = vrcp.pop %v3263
        %v3308 = vmul.f32 %v3263, %v3307
        %v3309 = vsub.f32 1.0, %v3308
        %v3310 = vmul.f32 %v3307, %v3309
        %v3311 = vadd.f32 %v3307, %v3310
        %vm3312 = vweird.f32 %v3263
        %vm3313 = vweird.f32 %v3307
        %vm3314 = vmor %vm3312, %vm3313
        %v3315 = vsel %vm3314, %v3307, %v3311
        %v3316 = vand.u32 2147483647, %v3263
        %vm3317 = vcmp.eq.f32.partialorder %v3316, 8.507059e+37
        %v3318 = vand.u32 %v3263, 2147483648
        %v3319 = vor.u32 1.1754944e-38, %v3318
        %v3320 = vsel %vm3317, %v3319, %v3315
        %v3321 = vrcp.pop %v3266
        %v3322 = vmul.f32 %v3266, %v3321
        %v3323 = vsub.f32 1.0, %v3322
        %v3324 = vmul.f32 %v3321, %v3323
        %v3325 = vadd.f32 %v3321, %v3324
        %vm3326 = vweird.f32 %v3266
        %vm3327 = vweird.f32 %v3321
        %vm3328 = vmor %vm3326, %vm3327
        %v3329 = vsel %vm3328, %v3321, %v3325
        %v3330 = vand.u32 2147483647, %v3266
        %vm3331 = vcmp.eq.f32.partialorder %v3330, 8.507059e+37
        %v3332 = vand.u32 %v3266, 2147483648
        %v3333 = vor.u32 1.1754944e-38, %v3332
        %v3334 = vsel %vm3331, %v3333, %v3329
        %v3335 = vrcp.pop %v3269
        %v3336 = vmul.f32 %v3269, %v3335
        %v3337 = vsub.f32 1.0, %v3336
        %v3338 = vmul.f32 %v3335, %v3337
        %v3339 = vadd.f32 %v3335, %v3338
        %vm3340 = vweird.f32 %v3269
        %vm3341 = vweird.f32 %v3335
        %vm3342 = vmor %vm3340, %vm3341
        %v3343 = vsel %vm3342, %v3335, %v3339
        %v3344 = vand.u32 2147483647, %v3269
        %vm3345 = vcmp.eq.f32.partialorder %v3344, 8.507059e+37
        %v3346 = vand.u32 %v3269, 2147483648
        %v3347 = vor.u32 1.1754944e-38, %v3346
        %v3348 = vsel %vm3345, %v3347, %v3343
        %v3349 = vrcp.pop %v3272
        %v3350 = vmul.f32 %v3272, %v3349
        %v3351 = vsub.f32 1.0, %v3350
        %v3352 = vmul.f32 %v3349, %v3351
        %v3353 = vadd.f32 %v3349, %v3352
        %vm3354 = vweird.f32 %v3272
        %vm3355 = vweird.f32 %v3349
        %vm3356 = vmor %vm3354, %vm3355
        %v3357 = vsel %vm3356, %v3349, %v3353
        %v3358 = vand.u32 2147483647, %v3272
        %vm3359 = vcmp.eq.f32.partialorder %v3358, 8.507059e+37
        %v3360 = vand.u32 %v3272, 2147483648
        %v3361 = vor.u32 1.1754944e-38, %v3360
        %v3362 = vsel %vm3359, %v3361, %v3357
        %v3363 = vrcp.pop %v3275
        %v3364 = vmul.f32 %v3275, %v3363
        %v3365 = vsub.f32 1.0, %v3364
        %v3366 = vmul.f32 %v3363, %v3365
        %v3367 = vadd.f32 %v3363, %v3366
        %vm3368 = vweird.f32 %v3275
        %vm3369 = vweird.f32 %v3363
        %vm3370 = vmor %vm3368, %vm3369
        %v3371 = vsel %vm3370, %v3363, %v3367
        %v3372 = vand.u32 2147483647, %v3275
        %vm3373 = vcmp.eq.f32.partialorder %v3372, 8.507059e+37
        %v3374 = vand.u32 %v3275, 2147483648
        %v3375 = vor.u32 1.1754944e-38, %v3374
        %v3376 = vsel %vm3373, %v3375, %v3371
        %v3377 = vrcp.pop %v3278
        %v3378 = vmul.f32 %v3278, %v3377
        %v3379 = vsub.f32 1.0, %v3378
        %v3380 = vmul.f32 %v3377, %v3379
        %v3381 = vadd.f32 %v3377, %v3380
        %vm3382 = vweird.f32 %v3278
        %vm3383 = vweird.f32 %v3377
        %vm3384 = vmor %vm3382, %vm3383
        %v3385 = vsel %vm3384, %v3377, %v3381
        %v3386 = vand.u32 2147483647, %v3278
        %vm3387 = vcmp.eq.f32.partialorder %v3386, 8.507059e+37
        %v3388 = vand.u32 %v3278, 2147483648
        %v3389 = vor.u32 1.1754944e-38, %v3388
        %v3390 = vsel %vm3387, %v3389, %v3385
        %v3391 = vmul.f32 %v3240, %v3292
        %v3392 = vmul.f32 %v3242, %v3306
        %v3393 = vmul.f32 %v3244, %v3320
        %v3394 = vmul.f32 %v3246, %v3334
        %v3395 = vmul.f32 %v3248, %v3348
        %v3396 = vmul.f32 %v3250, %v3362
        %v3397 = vmul.f32 %v3252, %v3376
        %v3398 = vmul.f32 %v3254, %v3390
        %3407 = vrot.lane.b32.xlu0 %v922, 96
        %v3408 = vpop.permute.xlu0 %3407
        %3409 = vrot.lane.b32.xlu0 %v925, 96
        %v3410 = vpop.permute.xlu0 %3409
        %3411 = vrot.lane.b32.xlu0 %v928, 96
        %v3412 = vpop.permute.xlu0 %3411
        %3413 = vrot.lane.b32.xlu0 %v931, 96
        %v3414 = vpop.permute.xlu0 %3413
        %3415 = vrot.lane.b32.xlu0 %v934, 96
        %v3416 = vpop.permute.xlu0 %3415
        %3417 = vrot.lane.b32.xlu0 %v937, 96
        %v3418 = vpop.permute.xlu0 %3417
        %3419 = vrot.lane.b32.xlu0 %v940, 96
        %v3420 = vpop.permute.xlu0 %3419
        %3421 = vrot.lane.b32.xlu0 %v943, 96
        %v3422 = vpop.permute.xlu0 %3421
        %v3432 = vsel %vm1228, %v3391, 0
        %v3435 = vsel %vm1228, %v3392, 0
        %v3438 = vsel %vm1228, %v3393, 0
        %v3441 = vsel %vm1228, %v3394, 0
        %v3444 = vsel %vm1228, %v3395, 0
        %v3447 = vsel %vm1228, %v3396, 0
        %v3450 = vsel %vm1228, %v3397, 0
        %v3453 = vsel %vm1228, %v3398, 0
        %3455 = vmatpush.msra.mxu0 0.0
        %3456 = vmatpush.msra.mxu0 0.0
        %3457 = vmatpush.msra.mxu0 0.0
        %3458 = vmatpush.msra.mxu0 0.0
        %3459 = vmatpush.msra.mxu0 0.0
        %3460 = vmatpush.msra.mxu0 0.0
        %3461 = vmatpush.msra.mxu0 0.0
        %3462 = vmatpush.msra.mxu0 0.0
        %3463 = vmatpush.msra.mxu0 %v3422
        %3464 = vmatpush.msra.mxu0 %v3420
        %3465 = vmatpush.msra.mxu0 %v3418
        %3466 = vmatpush.msra.mxu0 %v3416
        %3467 = vmatpush.msra.mxu0 %v3414
        %3468 = vmatpush.msra.mxu0 %v3412
        %3469 = vmatpush.msra.mxu0 %v3410
        %3470 = vmatpush.msra.mxu0 %v3408
        %3471 = vmatmul.f32.gmra.mxu0 %v3432
        %v3472 = vpop.f32.mrf.mxu0
        %v3473 = vadd.f32 0.0, %v3472
        %3474 = vmatmul.f32.gmra.mxu0 %v3435
        %v3475 = vpop.f32.mrf.mxu0
        %v3476 = vadd.f32 0.0, %v3475
        %3477 = vmatmul.f32.gmra.mxu0 %v3438
        %v3478 = vpop.f32.mrf.mxu0
        %v3479 = vadd.f32 0.0, %v3478
        %3480 = vmatmul.f32.gmra.mxu0 %v3441
        %v3481 = vpop.f32.mrf.mxu0
        %v3482 = vadd.f32 0.0, %v3481
        %3483 = vmatmul.f32.gmra.mxu0 %v3444
        %v3484 = vpop.f32.mrf.mxu0
        %v3485 = vadd.f32 0.0, %v3484
        %3486 = vmatmul.f32.gmra.mxu0 %v3447
        %v3487 = vpop.f32.mrf.mxu0
        %v3488 = vadd.f32 0.0, %v3487
        %3489 = vmatmul.f32.gmra.mxu0 %v3450
        %v3490 = vpop.f32.mrf.mxu0
        %v3491 = vadd.f32 0.0, %v3490
        %3492 = vmatmul.f32.gmra.mxu0 %v3453
        %v3493 = vpop.f32.mrf.mxu0
        %v3494 = vadd.f32 0.0, %v3493
        %3495 = vdwg.mxu0
        %v3496 = vadd.f32 %v3078, %v3473
        %v3497 = vadd.f32 %v3079, %v3476
        %v3498 = vadd.f32 %v3080, %v3479
        %v3499 = vadd.f32 %v3081, %v3482
        %v3500 = vadd.f32 %v3082, %v3485
        %v3501 = vadd.f32 %v3083, %v3488
        %v3502 = vadd.f32 %v3084, %v3491
        %v3503 = vadd.f32 %v3085, %v3494
        %3504 = vrot.lane.b32.xlu0 %v758, 64
        %v3505 = vpop.permute.xlu0 %3504
        %3506 = vrot.lane.b32.xlu0 %v761, 64
        %v3507 = vpop.permute.xlu0 %3506
        %3508 = vrot.lane.b32.xlu0 %v764, 64
        %v3509 = vpop.permute.xlu0 %3508
        %3510 = vrot.lane.b32.xlu0 %v767, 64
        %v3511 = vpop.permute.xlu0 %3510
        %3512 = vrot.lane.b32.xlu0 %v770, 64
        %v3513 = vpop.permute.xlu0 %3512
        %3514 = vrot.lane.b32.xlu0 %v773, 64
        %v3515 = vpop.permute.xlu0 %3514
        %3516 = vrot.lane.b32.xlu0 %v776, 64
        %v3517 = vpop.permute.xlu0 %3516
        %3518 = vrot.lane.b32.xlu0 %v779, 64
        %v3519 = vpop.permute.xlu0 %3518
        %3520 = vrot.lane.b32.xlu0 %v840, 64
        %v3521 = vpop.permute.xlu0 %3520
        %3522 = vrot.lane.b32.xlu0 %v843, 64
        %v3523 = vpop.permute.xlu0 %3522
        %3524 = vrot.lane.b32.xlu0 %v846, 64
        %v3525 = vpop.permute.xlu0 %3524
        %3526 = vrot.lane.b32.xlu0 %v849, 64
        %v3527 = vpop.permute.xlu0 %3526
        %3528 = vrot.lane.b32.xlu0 %v852, 64
        %v3529 = vpop.permute.xlu0 %3528
        %3530 = vrot.lane.b32.xlu0 %v855, 64
        %v3531 = vpop.permute.xlu0 %3530
        %3532 = vrot.lane.b32.xlu0 %v858, 64
        %v3533 = vpop.permute.xlu0 %3532
        %3534 = vrot.lane.b32.xlu0 %v861, 64
        %v3535 = vpop.permute.xlu0 %3534
        %v3536 = vsel %vm445, %v3505, 0
        %v3538 = vsel %vm445, %v3507, 0
        %v3540 = vsel %vm445, %v3509, 0
        %v3542 = vsel %vm445, %v3511, 0
        %v3544 = vsel %vm445, %v3513, 0
        %v3546 = vsel %vm445, %v3515, 0
        %v3548 = vsel %vm445, %v3517, 0
        %v3550 = vsel %vm445, %v3519, 0
        %v3552 = vsel %vm445, %v3521, 0
        %v3554 = vsel %vm445, %v3523, 0
        %v3556 = vsel %vm445, %v3525, 0
        %v3558 = vsel %vm445, %v3527, 0
        %v3560 = vsel %vm445, %v3529, 0
        %v3562 = vsel %vm445, %v3531, 0
        %v3564 = vsel %vm445, %v3533, 0
        %v3566 = vsel %vm445, %v3535, 0
        %3568 = vmatpush.xpose.msra.mxu0 0.0
        %3569 = vmatpush.xpose.msra.mxu0 0.0
        %3570 = vmatpush.xpose.msra.mxu0 0.0
        %3571 = vmatpush.xpose.msra.mxu0 0.0
        %3572 = vmatpush.xpose.msra.mxu0 0.0
        %3573 = vmatpush.xpose.msra.mxu0 0.0
        %3574 = vmatpush.xpose.msra.mxu0 0.0
        %3575 = vmatpush.xpose.msra.mxu0 0.0
        %3576 = vmatpush.xpose.msra.mxu0 %v3566
        %3577 = vmatpush.xpose.msra.mxu0 %v3564
        %3578 = vmatpush.xpose.msra.mxu0 %v3562
        %3579 = vmatpush.xpose.msra.mxu0 %v3560
        %3580 = vmatpush.xpose.msra.mxu0 %v3558
        %3581 = vmatpush.xpose.msra.mxu0 %v3556
        %3582 = vmatpush.xpose.msra.mxu0 %v3554
        %3583 = vmatpush.xpose.msra.mxu0 %v3552
        %3584 = vmatmul.f32.gmra.mxu0 %v3536
        %v3585 = vpop.f32.mrf.mxu0
        %v3586 = vadd.f32 0.0, %v3585
        %3587 = vmatmul.f32.gmra.mxu0 %v3538
        %v3588 = vpop.f32.mrf.mxu0
        %v3589 = vadd.f32 0.0, %v3588
        %3590 = vmatmul.f32.gmra.mxu0 %v3540
        %v3591 = vpop.f32.mrf.mxu0
        %v3592 = vadd.f32 0.0, %v3591
        %3593 = vmatmul.f32.gmra.mxu0 %v3542
        %v3594 = vpop.f32.mrf.mxu0
        %v3595 = vadd.f32 0.0, %v3594
        %3596 = vmatmul.f32.gmra.mxu0 %v3544
        %v3597 = vpop.f32.mrf.mxu0
        %v3598 = vadd.f32 0.0, %v3597
        %3599 = vmatmul.f32.gmra.mxu0 %v3546
        %v3600 = vpop.f32.mrf.mxu0
        %v3601 = vadd.f32 0.0, %v3600
        %3602 = vmatmul.f32.gmra.mxu0 %v3548
        %v3603 = vpop.f32.mrf.mxu0
        %v3604 = vadd.f32 0.0, %v3603
        %3605 = vmatmul.f32.gmra.mxu0 %v3550
        %v3606 = vpop.f32.mrf.mxu0
        %v3607 = vadd.f32 0.0, %v3606
        %3608 = vdwg.mxu0
        %v3609 = vmul.f32 %v1175, %v3586
        %v3610 = vmul.f32 %v1180, %v3589
        %v3611 = vmul.f32 %v1185, %v3592
        %v3612 = vmul.f32 %v1190, %v3595
        %v3613 = vmul.f32 %v1195, %v3598
        %v3614 = vmul.f32 %v1200, %v3601
        %v3615 = vmul.f32 %v1205, %v3604
        %v3616 = vmul.f32 %v1210, %v3607
        %v3617 = vadd.f32 %v3609, %v1075
        %v3618 = vadd.f32 %v3610, %v1076
        %v3619 = vadd.f32 %v3611, %v1077
        %v3620 = vadd.f32 %v3612, %v1078
        %v3621 = vadd.f32 %v3613, %v1079
        %v3622 = vadd.f32 %v3614, %v1080
        %v3623 = vadd.f32 %v3615, %v1081
        %v3624 = vadd.f32 %v3616, %v1082
        %v3625 = vsel %vm1228, %v3617, -inf
        %3626 = vmax.xlane.f32.xlu0 %v3625
        %v3627 = vpop.xlane.xlu0 %3626
        %v3628 = vsel %vm1228, %v3618, -inf
        %3629 = vmax.xlane.f32.xlu0 %v3628
        %v3630 = vpop.xlane.xlu0 %3629
        %v3631 = vsel %vm1228, %v3619, -inf
        %3632 = vmax.xlane.f32.xlu0 %v3631
        %v3633 = vpop.xlane.xlu0 %3632
        %v3634 = vsel %vm1228, %v3620, -inf
        %3635 = vmax.xlane.f32.xlu0 %v3634
        %v3636 = vpop.xlane.xlu0 %3635
        %v3637 = vsel %vm1228, %v3621, -inf
        %3638 = vmax.xlane.f32.xlu0 %v3637
        %v3639 = vpop.xlane.xlu0 %3638
        %v3640 = vsel %vm1228, %v3622, -inf
        %3641 = vmax.xlane.f32.xlu0 %v3640
        %v3642 = vpop.xlane.xlu0 %3641
        %v3643 = vsel %vm1228, %v3623, -inf
        %3644 = vmax.xlane.f32.xlu0 %v3643
        %v3645 = vpop.xlane.xlu0 %3644
        %v3646 = vsel %vm1228, %v3624, -inf
        %3647 = vmax.xlane.f32.xlu0 %v3646
        %v3648 = vpop.xlane.xlu0 %3647
        %v3649 = vsub.f32 %v3617, %v3627
        %v3650 = vsub.f32 %v3618, %v3630
        %v3651 = vsub.f32 %v3619, %v3633
        %v3652 = vsub.f32 %v3620, %v3636
        %v3653 = vsub.f32 %v3621, %v3639
        %v3654 = vsub.f32 %v3622, %v3642
        %v3655 = vsub.f32 %v3623, %v3645
        %v3656 = vsub.f32 %v3624, %v3648
        %v3657 = vmul.f32 %v3649, 1.442695
        %v3658 = vpow.pop %v3657
        %v3659 = vmul.f32 %v3650, 1.442695
        %v3660 = vpow.pop %v3659
        %v3661 = vmul.f32 %v3651, 1.442695
        %v3662 = vpow.pop %v3661
        %v3663 = vmul.f32 %v3652, 1.442695
        %v3664 = vpow.pop %v3663
        %v3665 = vmul.f32 %v3653, 1.442695
        %v3666 = vpow.pop %v3665
        %v3667 = vmul.f32 %v3654, 1.442695
        %v3668 = vpow.pop %v3667
        %v3669 = vmul.f32 %v3655, 1.442695
        %v3670 = vpow.pop %v3669
        %v3671 = vmul.f32 %v3656, 1.442695
        %v3672 = vpow.pop %v3671
        %v3673 = vsel %vm1228, %v3658, 0.0
        %3674 = vadd.xlane.f32.xlu0 %v3673
        %v3675 = vpop.xlane.xlu0 %3674
        %v3676 = vsel %vm1228, %v3660, 0.0
        %3677 = vadd.xlane.f32.xlu0 %v3676
        %v3678 = vpop.xlane.xlu0 %3677
        %v3679 = vsel %vm1228, %v3662, 0.0
        %3680 = vadd.xlane.f32.xlu0 %v3679
        %v3681 = vpop.xlane.xlu0 %3680
        %v3682 = vsel %vm1228, %v3664, 0.0
        %3683 = vadd.xlane.f32.xlu0 %v3682
        %v3684 = vpop.xlane.xlu0 %3683
        %v3685 = vsel %vm1228, %v3666, 0.0
        %3686 = vadd.xlane.f32.xlu0 %v3685
        %v3687 = vpop.xlane.xlu0 %3686
        %v3688 = vsel %vm1228, %v3668, 0.0
        %3689 = vadd.xlane.f32.xlu0 %v3688
        %v3690 = vpop.xlane.xlu0 %3689
        %v3691 = vsel %vm1228, %v3670, 0.0
        %3692 = vadd.xlane.f32.xlu0 %v3691
        %v3693 = vpop.xlane.xlu0 %3692
        %v3694 = vsel %vm1228, %v3672, 0.0
        %3695 = vadd.xlane.f32.xlu0 %v3694
        %v3696 = vpop.xlane.xlu0 %3695
        %v3697 = vrcp.pop %v3675
        %v3698 = vmul.f32 %v3675, %v3697
        %v3699 = vsub.f32 1.0, %v3698
        %v3700 = vmul.f32 %v3697, %v3699
        %v3701 = vadd.f32 %v3697, %v3700
        %vm3702 = vweird.f32 %v3675
        %vm3703 = vweird.f32 %v3697
        %vm3704 = vmor %vm3702, %vm3703
        %v3705 = vsel %vm3704, %v3697, %v3701
        %v3706 = vand.u32 2147483647, %v3675
        %vm3707 = vcmp.eq.f32.partialorder %v3706, 8.507059e+37
        %v3708 = vand.u32 %v3675, 2147483648
        %v3709 = vor.u32 1.1754944e-38, %v3708
        %v3710 = vsel %vm3707, %v3709, %v3705
        %v3711 = vrcp.pop %v3678
        %v3712 = vmul.f32 %v3678, %v3711
        %v3713 = vsub.f32 1.0, %v3712
        %v3714 = vmul.f32 %v3711, %v3713
        %v3715 = vadd.f32 %v3711, %v3714
        %vm3716 = vweird.f32 %v3678
        %vm3717 = vweird.f32 %v3711
        %vm3718 = vmor %vm3716, %vm3717
        %v3719 = vsel %vm3718, %v3711, %v3715
        %v3720 = vand.u32 2147483647, %v3678
        %vm3721 = vcmp.eq.f32.partialorder %v3720, 8.507059e+37
        %v3722 = vand.u32 %v3678, 2147483648
        %v3723 = vor.u32 1.1754944e-38, %v3722
        %v3724 = vsel %vm3721, %v3723, %v3719
        %v3725 = vrcp.pop %v3681
        %v3726 = vmul.f32 %v3681, %v3725
        %v3727 = vsub.f32 1.0, %v3726
        %v3728 = vmul.f32 %v3725, %v3727
        %v3729 = vadd.f32 %v3725, %v3728
        %vm3730 = vweird.f32 %v3681
        %vm3731 = vweird.f32 %v3725
        %vm3732 = vmor %vm3730, %vm3731
        %v3733 = vsel %vm3732, %v3725, %v3729
        %v3734 = vand.u32 2147483647, %v3681
        %vm3735 = vcmp.eq.f32.partialorder %v3734, 8.507059e+37
        %v3736 = vand.u32 %v3681, 2147483648
        %v3737 = vor.u32 1.1754944e-38, %v3736
        %v3738 = vsel %vm3735, %v3737, %v3733
        %v3739 = vrcp.pop %v3684
        %v3740 = vmul.f32 %v3684, %v3739
        %v3741 = vsub.f32 1.0, %v3740
        %v3742 = vmul.f32 %v3739, %v3741
        %v3743 = vadd.f32 %v3739, %v3742
        %vm3744 = vweird.f32 %v3684
        %vm3745 = vweird.f32 %v3739
        %vm3746 = vmor %vm3744, %vm3745
        %v3747 = vsel %vm3746, %v3739, %v3743
        %v3748 = vand.u32 2147483647, %v3684
        %vm3749 = vcmp.eq.f32.partialorder %v3748, 8.507059e+37
        %v3750 = vand.u32 %v3684, 2147483648
        %v3751 = vor.u32 1.1754944e-38, %v3750
        %v3752 = vsel %vm3749, %v3751, %v3747
        %v3753 = vrcp.pop %v3687
        %v3754 = vmul.f32 %v3687, %v3753
        %v3755 = vsub.f32 1.0, %v3754
        %v3756 = vmul.f32 %v3753, %v3755
        %v3757 = vadd.f32 %v3753, %v3756
        %vm3758 = vweird.f32 %v3687
        %vm3759 = vweird.f32 %v3753
        %vm3760 = vmor %vm3758, %vm3759
        %v3761 = vsel %vm3760, %v3753, %v3757
        %v3762 = vand.u32 2147483647, %v3687
        %vm3763 = vcmp.eq.f32.partialorder %v3762, 8.507059e+37
        %v3764 = vand.u32 %v3687, 2147483648
        %v3765 = vor.u32 1.1754944e-38, %v3764
        %v3766 = vsel %vm3763, %v3765, %v3761
        %v3767 = vrcp.pop %v3690
        %v3768 = vmul.f32 %v3690, %v3767
        %v3769 = vsub.f32 1.0, %v3768
        %v3770 = vmul.f32 %v3767, %v3769
        %v3771 = vadd.f32 %v3767, %v3770
        %vm3772 = vweird.f32 %v3690
        %vm3773 = vweird.f32 %v3767
        %vm3774 = vmor %vm3772, %vm3773
        %v3775 = vsel %vm3774, %v3767, %v3771
        %v3776 = vand.u32 2147483647, %v3690
        %vm3777 = vcmp.eq.f32.partialorder %v3776, 8.507059e+37
        %v3778 = vand.u32 %v3690, 2147483648
        %v3779 = vor.u32 1.1754944e-38, %v3778
        %v3780 = vsel %vm3777, %v3779, %v3775
        %v3781 = vrcp.pop %v3693
        %v3782 = vmul.f32 %v3693, %v3781
        %v3783 = vsub.f32 1.0, %v3782
        %v3784 = vmul.f32 %v3781, %v3783
        %v3785 = vadd.f32 %v3781, %v3784
        %vm3786 = vweird.f32 %v3693
        %vm3787 = vweird.f32 %v3781
        %vm3788 = vmor %vm3786, %vm3787
        %v3789 = vsel %vm3788, %v3781, %v3785
        %v3790 = vand.u32 2147483647, %v3693
        %vm3791 = vcmp.eq.f32.partialorder %v3790, 8.507059e+37
        %v3792 = vand.u32 %v3693, 2147483648
        %v3793 = vor.u32 1.1754944e-38, %v3792
        %v3794 = vsel %vm3791, %v3793, %v3789
        %v3795 = vrcp.pop %v3696
        %v3796 = vmul.f32 %v3696, %v3795
        %v3797 = vsub.f32 1.0, %v3796
        %v3798 = vmul.f32 %v3795, %v3797
        %v3799 = vadd.f32 %v3795, %v3798
        %vm3800 = vweird.f32 %v3696
        %vm3801 = vweird.f32 %v3795
        %vm3802 = vmor %vm3800, %vm3801
        %v3803 = vsel %vm3802, %v3795, %v3799
        %v3804 = vand.u32 2147483647, %v3696
        %vm3805 = vcmp.eq.f32.partialorder %v3804, 8.507059e+37
        %v3806 = vand.u32 %v3696, 2147483648
        %v3807 = vor.u32 1.1754944e-38, %v3806
        %v3808 = vsel %vm3805, %v3807, %v3803
        %v3809 = vmul.f32 %v3658, %v3710
        %v3810 = vmul.f32 %v3660, %v3724
        %v3811 = vmul.f32 %v3662, %v3738
        %v3812 = vmul.f32 %v3664, %v3752
        %v3813 = vmul.f32 %v3666, %v3766
        %v3814 = vmul.f32 %v3668, %v3780
        %v3815 = vmul.f32 %v3670, %v3794
        %v3816 = vmul.f32 %v3672, %v3808
        %3817 = vrot.lane.b32.xlu0 %v922, 64
        %v3818 = vpop.permute.xlu0 %3817
        %3819 = vrot.lane.b32.xlu0 %v925, 64
        %v3820 = vpop.permute.xlu0 %3819
        %3821 = vrot.lane.b32.xlu0 %v928, 64
        %v3822 = vpop.permute.xlu0 %3821
        %3823 = vrot.lane.b32.xlu0 %v931, 64
        %v3824 = vpop.permute.xlu0 %3823
        %3825 = vrot.lane.b32.xlu0 %v934, 64
        %v3826 = vpop.permute.xlu0 %3825
        %3827 = vrot.lane.b32.xlu0 %v937, 64
        %v3828 = vpop.permute.xlu0 %3827
        %3829 = vrot.lane.b32.xlu0 %v940, 64
        %v3830 = vpop.permute.xlu0 %3829
        %3831 = vrot.lane.b32.xlu0 %v943, 64
        %v3832 = vpop.permute.xlu0 %3831
        %v3842 = vsel %vm1228, %v3809, 0
        %v3845 = vsel %vm1228, %v3810, 0
        %v3848 = vsel %vm1228, %v3811, 0
        %v3851 = vsel %vm1228, %v3812, 0
        %v3854 = vsel %vm1228, %v3813, 0
        %v3857 = vsel %vm1228, %v3814, 0
        %v3860 = vsel %vm1228, %v3815, 0
        %v3863 = vsel %vm1228, %v3816, 0
        %3865 = vmatpush.msra.mxu0 0.0
        %3866 = vmatpush.msra.mxu0 0.0
        %3867 = vmatpush.msra.mxu0 0.0
        %3868 = vmatpush.msra.mxu0 0.0
        %3869 = vmatpush.msra.mxu0 0.0
        %3870 = vmatpush.msra.mxu0 0.0
        %3871 = vmatpush.msra.mxu0 0.0
        %3872 = vmatpush.msra.mxu0 0.0
        %3873 = vmatpush.msra.mxu0 %v3832
        %3874 = vmatpush.msra.mxu0 %v3830
        %3875 = vmatpush.msra.mxu0 %v3828
        %3876 = vmatpush.msra.mxu0 %v3826
        %3877 = vmatpush.msra.mxu0 %v3824
        %3878 = vmatpush.msra.mxu0 %v3822
        %3879 = vmatpush.msra.mxu0 %v3820
        %3880 = vmatpush.msra.mxu0 %v3818
        %3881 = vmatmul.f32.gmra.mxu0 %v3842
        %v3882 = vpop.f32.mrf.mxu0
        %v3883 = vadd.f32 0.0, %v3882
        %3884 = vmatmul.f32.gmra.mxu0 %v3845
        %v3885 = vpop.f32.mrf.mxu0
        %v3886 = vadd.f32 0.0, %v3885
        %3887 = vmatmul.f32.gmra.mxu0 %v3848
        %v3888 = vpop.f32.mrf.mxu0
        %v3889 = vadd.f32 0.0, %v3888
        %3890 = vmatmul.f32.gmra.mxu0 %v3851
        %v3891 = vpop.f32.mrf.mxu0
        %v3892 = vadd.f32 0.0, %v3891
        %3893 = vmatmul.f32.gmra.mxu0 %v3854
        %v3894 = vpop.f32.mrf.mxu0
        %v3895 = vadd.f32 0.0, %v3894
        %3896 = vmatmul.f32.gmra.mxu0 %v3857
        %v3897 = vpop.f32.mrf.mxu0
        %v3898 = vadd.f32 0.0, %v3897
        %3899 = vmatmul.f32.gmra.mxu0 %v3860
        %v3900 = vpop.f32.mrf.mxu0
        %v3901 = vadd.f32 0.0, %v3900
        %3902 = vmatmul.f32.gmra.mxu0 %v3863
        %v3903 = vpop.f32.mrf.mxu0
        %v3904 = vadd.f32 0.0, %v3903
        %3905 = vdwg.mxu0
        %v3906 = vadd.f32 %v3496, %v3883
        %v3907 = vadd.f32 %v3497, %v3886
        %v3908 = vadd.f32 %v3498, %v3889
        %v3909 = vadd.f32 %v3499, %v3892
        %v3910 = vadd.f32 %v3500, %v3895
        %v3911 = vadd.f32 %v3501, %v3898
        %v3912 = vadd.f32 %v3502, %v3901
        %v3913 = vadd.f32 %v3503, %v3904
        %3914 = vrot.lane.b32.xlu0 %v758, 32
        %v3915 = vpop.permute.xlu0 %3914
        %3916 = vrot.lane.b32.xlu0 %v761, 32
        %v3917 = vpop.permute.xlu0 %3916
        %3918 = vrot.lane.b32.xlu0 %v764, 32
        %v3919 = vpop.permute.xlu0 %3918
        %3920 = vrot.lane.b32.xlu0 %v767, 32
        %v3921 = vpop.permute.xlu0 %3920
        %3922 = vrot.lane.b32.xlu0 %v770, 32
        %v3923 = vpop.permute.xlu0 %3922
        %3924 = vrot.lane.b32.xlu0 %v773, 32
        %v3925 = vpop.permute.xlu0 %3924
        %3926 = vrot.lane.b32.xlu0 %v776, 32
        %v3927 = vpop.permute.xlu0 %3926
        %3928 = vrot.lane.b32.xlu0 %v779, 32
        %v3929 = vpop.permute.xlu0 %3928
        %3930 = vrot.lane.b32.xlu0 %v840, 32
        %v3931 = vpop.permute.xlu0 %3930
        %3932 = vrot.lane.b32.xlu0 %v843, 32
        %v3933 = vpop.permute.xlu0 %3932
        %3934 = vrot.lane.b32.xlu0 %v846, 32
        %v3935 = vpop.permute.xlu0 %3934
        %3936 = vrot.lane.b32.xlu0 %v849, 32
        %v3937 = vpop.permute.xlu0 %3936
        %3938 = vrot.lane.b32.xlu0 %v852, 32
        %v3939 = vpop.permute.xlu0 %3938
        %3940 = vrot.lane.b32.xlu0 %v855, 32
        %v3941 = vpop.permute.xlu0 %3940
        %3942 = vrot.lane.b32.xlu0 %v858, 32
        %v3943 = vpop.permute.xlu0 %3942
        %3944 = vrot.lane.b32.xlu0 %v861, 32
        %v3945 = vpop.permute.xlu0 %3944
        %v3946 = vsel %vm445, %v3915, 0
        %v3948 = vsel %vm445, %v3917, 0
        %v3950 = vsel %vm445, %v3919, 0
        %v3952 = vsel %vm445, %v3921, 0
        %v3954 = vsel %vm445, %v3923, 0
        %v3956 = vsel %vm445, %v3925, 0
        %v3958 = vsel %vm445, %v3927, 0
        %v3960 = vsel %vm445, %v3929, 0
        %v3962 = vsel %vm445, %v3931, 0
        %v3964 = vsel %vm445, %v3933, 0
        %v3966 = vsel %vm445, %v3935, 0
        %v3968 = vsel %vm445, %v3937, 0
        %v3970 = vsel %vm445, %v3939, 0
        %v3972 = vsel %vm445, %v3941, 0
        %v3974 = vsel %vm445, %v3943, 0
        %v3976 = vsel %vm445, %v3945, 0
        %3978 = vmatpush.xpose.msra.mxu0 0.0
        %3979 = vmatpush.xpose.msra.mxu0 0.0
        %3980 = vmatpush.xpose.msra.mxu0 0.0
        %3981 = vmatpush.xpose.msra.mxu0 0.0
        %3982 = vmatpush.xpose.msra.mxu0 0.0
        %3983 = vmatpush.xpose.msra.mxu0 0.0
        %3984 = vmatpush.xpose.msra.mxu0 0.0
        %3985 = vmatpush.xpose.msra.mxu0 0.0
        %3986 = vmatpush.xpose.msra.mxu0 %v3976
        %3987 = vmatpush.xpose.msra.mxu0 %v3974
        %3988 = vmatpush.xpose.msra.mxu0 %v3972
        %3989 = vmatpush.xpose.msra.mxu0 %v3970
        %3990 = vmatpush.xpose.msra.mxu0 %v3968
        %3991 = vmatpush.xpose.msra.mxu0 %v3966
        %3992 = vmatpush.xpose.msra.mxu0 %v3964
        %3993 = vmatpush.xpose.msra.mxu0 %v3962
        %3994 = vmatmul.f32.gmra.mxu0 %v3946
        %v3995 = vpop.f32.mrf.mxu0
        %v3996 = vadd.f32 0.0, %v3995
        %3997 = vmatmul.f32.gmra.mxu0 %v3948
        %v3998 = vpop.f32.mrf.mxu0
        %v3999 = vadd.f32 0.0, %v3998
        %4000 = vmatmul.f32.gmra.mxu0 %v3950
        %v4001 = vpop.f32.mrf.mxu0
        %v4002 = vadd.f32 0.0, %v4001
        %4003 = vmatmul.f32.gmra.mxu0 %v3952
        %v4004 = vpop.f32.mrf.mxu0
        %v4005 = vadd.f32 0.0, %v4004
        %4006 = vmatmul.f32.gmra.mxu0 %v3954
        %v4007 = vpop.f32.mrf.mxu0
        %v4008 = vadd.f32 0.0, %v4007
        %4009 = vmatmul.f32.gmra.mxu0 %v3956
        %v4010 = vpop.f32.mrf.mxu0
        %v4011 = vadd.f32 0.0, %v4010
        %4012 = vmatmul.f32.gmra.mxu0 %v3958
        %v4013 = vpop.f32.mrf.mxu0
        %v4014 = vadd.f32 0.0, %v4013
        %4015 = vmatmul.f32.gmra.mxu0 %v3960
        %v4016 = vpop.f32.mrf.mxu0
        %v4017 = vadd.f32 0.0, %v4016
        %4018 = vdwg.mxu0
        %v4019 = vmul.f32 %v1175, %v3996
        %v4020 = vmul.f32 %v1180, %v3999
        %v4021 = vmul.f32 %v1185, %v4002
        %v4022 = vmul.f32 %v1190, %v4005
        %v4023 = vmul.f32 %v1195, %v4008
        %v4024 = vmul.f32 %v1200, %v4011
        %v4025 = vmul.f32 %v1205, %v4014
        %v4026 = vmul.f32 %v1210, %v4017
        %v4027 = vadd.f32 %v4019, %v1075
        %v4028 = vadd.f32 %v4020, %v1076
        %v4029 = vadd.f32 %v4021, %v1077
        %v4030 = vadd.f32 %v4022, %v1078
        %v4031 = vadd.f32 %v4023, %v1079
        %v4032 = vadd.f32 %v4024, %v1080
        %v4033 = vadd.f32 %v4025, %v1081
        %v4034 = vadd.f32 %v4026, %v1082
        %v4035 = vsel %vm1228, %v4027, -inf
        %4036 = vmax.xlane.f32.xlu0 %v4035
        %v4037 = vpop.xlane.xlu0 %4036
        %v4038 = vsel %vm1228, %v4028, -inf
        %4039 = vmax.xlane.f32.xlu0 %v4038
        %v4040 = vpop.xlane.xlu0 %4039
        %v4041 = vsel %vm1228, %v4029, -inf
        %4042 = vmax.xlane.f32.xlu0 %v4041
        %v4043 = vpop.xlane.xlu0 %4042
        %v4044 = vsel %vm1228, %v4030, -inf
        %4045 = vmax.xlane.f32.xlu0 %v4044
        %v4046 = vpop.xlane.xlu0 %4045
        %v4047 = vsel %vm1228, %v4031, -inf
        %4048 = vmax.xlane.f32.xlu0 %v4047
        %v4049 = vpop.xlane.xlu0 %4048
        %v4050 = vsel %vm1228, %v4032, -inf
        %4051 = vmax.xlane.f32.xlu0 %v4050
        %v4052 = vpop.xlane.xlu0 %4051
        %v4053 = vsel %vm1228, %v4033, -inf
        %4054 = vmax.xlane.f32.xlu0 %v4053
        %v4055 = vpop.xlane.xlu0 %4054
        %v4056 = vsel %vm1228, %v4034, -inf
        %4057 = vmax.xlane.f32.xlu0 %v4056
        %v4058 = vpop.xlane.xlu0 %4057
        %v4059 = vsub.f32 %v4027, %v4037
        %v4060 = vsub.f32 %v4028, %v4040
        %v4061 = vsub.f32 %v4029, %v4043
        %v4062 = vsub.f32 %v4030, %v4046
        %v4063 = vsub.f32 %v4031, %v4049
        %v4064 = vsub.f32 %v4032, %v4052
        %v4065 = vsub.f32 %v4033, %v4055
        %v4066 = vsub.f32 %v4034, %v4058
        %v4067 = vmul.f32 %v4059, 1.442695
        %v4068 = vpow.pop %v4067
        %v4069 = vmul.f32 %v4060, 1.442695
        %v4070 = vpow.pop %v4069
        %v4071 = vmul.f32 %v4061, 1.442695
        %v4072 = vpow.pop %v4071
        %v4073 = vmul.f32 %v4062, 1.442695
        %v4074 = vpow.pop %v4073
        %v4075 = vmul.f32 %v4063, 1.442695
        %v4076 = vpow.pop %v4075
        %v4077 = vmul.f32 %v4064, 1.442695
        %v4078 = vpow.pop %v4077
        %v4079 = vmul.f32 %v4065, 1.442695
        %v4080 = vpow.pop %v4079
        %v4081 = vmul.f32 %v4066, 1.442695
        %v4082 = vpow.pop %v4081
        %v4083 = vsel %vm1228, %v4068, 0.0
        %4084 = vadd.xlane.f32.xlu0 %v4083
        %v4085 = vpop.xlane.xlu0 %4084
        %v4086 = vsel %vm1228, %v4070, 0.0
        %4087 = vadd.xlane.f32.xlu0 %v4086
        %v4088 = vpop.xlane.xlu0 %4087
        %v4089 = vsel %vm1228, %v4072, 0.0
        %4090 = vadd.xlane.f32.xlu0 %v4089
        %v4091 = vpop.xlane.xlu0 %4090
        %v4092 = vsel %vm1228, %v4074, 0.0
        %4093 = vadd.xlane.f32.xlu0 %v4092
        %v4094 = vpop.xlane.xlu0 %4093
        %v4095 = vsel %vm1228, %v4076, 0.0
        %4096 = vadd.xlane.f32.xlu0 %v4095
        %v4097 = vpop.xlane.xlu0 %4096
        %v4098 = vsel %vm1228, %v4078, 0.0
        %4099 = vadd.xlane.f32.xlu0 %v4098
        %v4100 = vpop.xlane.xlu0 %4099
        %v4101 = vsel %vm1228, %v4080, 0.0
        %4102 = vadd.xlane.f32.xlu0 %v4101
        %v4103 = vpop.xlane.xlu0 %4102
        %v4104 = vsel %vm1228, %v4082, 0.0
        %4105 = vadd.xlane.f32.xlu0 %v4104
        %v4106 = vpop.xlane.xlu0 %4105
        %v4107 = vrcp.pop %v4085
        %v4108 = vmul.f32 %v4085, %v4107
        %v4109 = vsub.f32 1.0, %v4108
        %v4110 = vmul.f32 %v4107, %v4109
        %v4111 = vadd.f32 %v4107, %v4110
        %vm4112 = vweird.f32 %v4085
        %vm4113 = vweird.f32 %v4107
        %vm4114 = vmor %vm4112, %vm4113
        %v4115 = vsel %vm4114, %v4107, %v4111
        %v4116 = vand.u32 2147483647, %v4085
        %vm4117 = vcmp.eq.f32.partialorder %v4116, 8.507059e+37
        %v4118 = vand.u32 %v4085, 2147483648
        %v4119 = vor.u32 1.1754944e-38, %v4118
        %v4120 = vsel %vm4117, %v4119, %v4115
        %v4121 = vrcp.pop %v4088
        %v4122 = vmul.f32 %v4088, %v4121
        %v4123 = vsub.f32 1.0, %v4122
        %v4124 = vmul.f32 %v4121, %v4123
        %v4125 = vadd.f32 %v4121, %v4124
        %vm4126 = vweird.f32 %v4088
        %vm4127 = vweird.f32 %v4121
        %vm4128 = vmor %vm4126, %vm4127
        %v4129 = vsel %vm4128, %v4121, %v4125
        %v4130 = vand.u32 2147483647, %v4088
        %vm4131 = vcmp.eq.f32.partialorder %v4130, 8.507059e+37
        %v4132 = vand.u32 %v4088, 2147483648
        %v4133 = vor.u32 1.1754944e-38, %v4132
        %v4134 = vsel %vm4131, %v4133, %v4129
        %v4135 = vrcp.pop %v4091
        %v4136 = vmul.f32 %v4091, %v4135
        %v4137 = vsub.f32 1.0, %v4136
        %v4138 = vmul.f32 %v4135, %v4137
        %v4139 = vadd.f32 %v4135, %v4138
        %vm4140 = vweird.f32 %v4091
        %vm4141 = vweird.f32 %v4135
        %vm4142 = vmor %vm4140, %vm4141
        %v4143 = vsel %vm4142, %v4135, %v4139
        %v4144 = vand.u32 2147483647, %v4091
        %vm4145 = vcmp.eq.f32.partialorder %v4144, 8.507059e+37
        %v4146 = vand.u32 %v4091, 2147483648
        %v4147 = vor.u32 1.1754944e-38, %v4146
        %v4148 = vsel %vm4145, %v4147, %v4143
        %v4149 = vrcp.pop %v4094
        %v4150 = vmul.f32 %v4094, %v4149
        %v4151 = vsub.f32 1.0, %v4150
        %v4152 = vmul.f32 %v4149, %v4151
        %v4153 = vadd.f32 %v4149, %v4152
        %vm4154 = vweird.f32 %v4094
        %vm4155 = vweird.f32 %v4149
        %vm4156 = vmor %vm4154, %vm4155
        %v4157 = vsel %vm4156, %v4149, %v4153
        %v4158 = vand.u32 2147483647, %v4094
        %vm4159 = vcmp.eq.f32.partialorder %v4158, 8.507059e+37
        %v4160 = vand.u32 %v4094, 2147483648
        %v4161 = vor.u32 1.1754944e-38, %v4160
        %v4162 = vsel %vm4159, %v4161, %v4157
        %v4163 = vrcp.pop %v4097
        %v4164 = vmul.f32 %v4097, %v4163
        %v4165 = vsub.f32 1.0, %v4164
        %v4166 = vmul.f32 %v4163, %v4165
        %v4167 = vadd.f32 %v4163, %v4166
        %vm4168 = vweird.f32 %v4097
        %vm4169 = vweird.f32 %v4163
        %vm4170 = vmor %vm4168, %vm4169
        %v4171 = vsel %vm4170, %v4163, %v4167
        %v4172 = vand.u32 2147483647, %v4097
        %vm4173 = vcmp.eq.f32.partialorder %v4172, 8.507059e+37
        %v4174 = vand.u32 %v4097, 2147483648
        %v4175 = vor.u32 1.1754944e-38, %v4174
        %v4176 = vsel %vm4173, %v4175, %v4171
        %v4177 = vrcp.pop %v4100
        %v4178 = vmul.f32 %v4100, %v4177
        %v4179 = vsub.f32 1.0, %v4178
        %v4180 = vmul.f32 %v4177, %v4179
        %v4181 = vadd.f32 %v4177, %v4180
        %vm4182 = vweird.f32 %v4100
        %vm4183 = vweird.f32 %v4177
        %vm4184 = vmor %vm4182, %vm4183
        %v4185 = vsel %vm4184, %v4177, %v4181
        %v4186 = vand.u32 2147483647, %v4100
        %vm4187 = vcmp.eq.f32.partialorder %v4186, 8.507059e+37
        %v4188 = vand.u32 %v4100, 2147483648
        %v4189 = vor.u32 1.1754944e-38, %v4188
        %v4190 = vsel %vm4187, %v4189, %v4185
        %v4191 = vrcp.pop %v4103
        %v4192 = vmul.f32 %v4103, %v4191
        %v4193 = vsub.f32 1.0, %v4192
        %v4194 = vmul.f32 %v4191, %v4193
        %v4195 = vadd.f32 %v4191, %v4194
        %vm4196 = vweird.f32 %v4103
        %vm4197 = vweird.f32 %v4191
        %vm4198 = vmor %vm4196, %vm4197
        %v4199 = vsel %vm4198, %v4191, %v4195
        %v4200 = vand.u32 2147483647, %v4103
        %vm4201 = vcmp.eq.f32.partialorder %v4200, 8.507059e+37
        %v4202 = vand.u32 %v4103, 2147483648
        %v4203 = vor.u32 1.1754944e-38, %v4202
        %v4204 = vsel %vm4201, %v4203, %v4199
        %v4205 = vrcp.pop %v4106
        %v4206 = vmul.f32 %v4106, %v4205
        %v4207 = vsub.f32 1.0, %v4206
        %v4208 = vmul.f32 %v4205, %v4207
        %v4209 = vadd.f32 %v4205, %v4208
        %vm4210 = vweird.f32 %v4106
        %vm4211 = vweird.f32 %v4205
        %vm4212 = vmor %vm4210, %vm4211
        %v4213 = vsel %vm4212, %v4205, %v4209
        %v4214 = vand.u32 2147483647, %v4106
        %vm4215 = vcmp.eq.f32.partialorder %v4214, 8.507059e+37
        %v4216 = vand.u32 %v4106, 2147483648
        %v4217 = vor.u32 1.1754944e-38, %v4216
        %v4218 = vsel %vm4215, %v4217, %v4213
        %v4219 = vmul.f32 %v4068, %v4120
        %v4220 = vmul.f32 %v4070, %v4134
        %v4221 = vmul.f32 %v4072, %v4148
        %v4222 = vmul.f32 %v4074, %v4162
        %v4223 = vmul.f32 %v4076, %v4176
        %v4224 = vmul.f32 %v4078, %v4190
        %v4225 = vmul.f32 %v4080, %v4204
        %v4226 = vmul.f32 %v4082, %v4218
        %4227 = vrot.lane.b32.xlu0 %v922, 32
        %v4228 = vpop.permute.xlu0 %4227
        %4229 = vrot.lane.b32.xlu0 %v925, 32
        %v4230 = vpop.permute.xlu0 %4229
        %4231 = vrot.lane.b32.xlu0 %v928, 32
        %v4232 = vpop.permute.xlu0 %4231
        %4233 = vrot.lane.b32.xlu0 %v931, 32
        %v4234 = vpop.permute.xlu0 %4233
        %4235 = vrot.lane.b32.xlu0 %v934, 32
        %v4236 = vpop.permute.xlu0 %4235
        %4237 = vrot.lane.b32.xlu0 %v937, 32
        %v4238 = vpop.permute.xlu0 %4237
        %4239 = vrot.lane.b32.xlu0 %v940, 32
        %v4240 = vpop.permute.xlu0 %4239
        %4241 = vrot.lane.b32.xlu0 %v943, 32
        %v4242 = vpop.permute.xlu0 %4241
        %v4252 = vsel %vm1228, %v4219, 0
        %v4255 = vsel %vm1228, %v4220, 0
        %v4258 = vsel %vm1228, %v4221, 0
        %v4261 = vsel %vm1228, %v4222, 0
        %v4264 = vsel %vm1228, %v4223, 0
        %v4267 = vsel %vm1228, %v4224, 0
        %v4270 = vsel %vm1228, %v4225, 0
        %v4273 = vsel %vm1228, %v4226, 0
        %4275 = vmatpush.msra.mxu0 0.0
        %4276 = vmatpush.msra.mxu0 0.0
        %4277 = vmatpush.msra.mxu0 0.0
        %4278 = vmatpush.msra.mxu0 0.0
        %4279 = vmatpush.msra.mxu0 0.0
        %4280 = vmatpush.msra.mxu0 0.0
        %4281 = vmatpush.msra.mxu0 0.0
        %4282 = vmatpush.msra.mxu0 0.0
        %4283 = vmatpush.msra.mxu0 %v4242
        %4284 = vmatpush.msra.mxu0 %v4240
        %4285 = vmatpush.msra.mxu0 %v4238
        %4286 = vmatpush.msra.mxu0 %v4236
        %4287 = vmatpush.msra.mxu0 %v4234
        %4288 = vmatpush.msra.mxu0 %v4232
        %4289 = vmatpush.msra.mxu0 %v4230
        %4290 = vmatpush.msra.mxu0 %v4228
        %4291 = vmatmul.f32.gmra.mxu0 %v4252
        %v4292 = vpop.f32.mrf.mxu0
        %v4293 = vadd.f32 0.0, %v4292
        %4294 = vmatmul.f32.gmra.mxu0 %v4255
        %v4295 = vpop.f32.mrf.mxu0
        %v4296 = vadd.f32 0.0, %v4295
        %4297 = vmatmul.f32.gmra.mxu0 %v4258
        %v4298 = vpop.f32.mrf.mxu0
        %v4299 = vadd.f32 0.0, %v4298
        %4300 = vmatmul.f32.gmra.mxu0 %v4261
        %v4301 = vpop.f32.mrf.mxu0
        %v4302 = vadd.f32 0.0, %v4301
        %4303 = vmatmul.f32.gmra.mxu0 %v4264
        %v4304 = vpop.f32.mrf.mxu0
        %v4305 = vadd.f32 0.0, %v4304
        %4306 = vmatmul.f32.gmra.mxu0 %v4267
        %v4307 = vpop.f32.mrf.mxu0
        %v4308 = vadd.f32 0.0, %v4307
        %4309 = vmatmul.f32.gmra.mxu0 %v4270
        %v4310 = vpop.f32.mrf.mxu0
        %v4311 = vadd.f32 0.0, %v4310
        %4312 = vmatmul.f32.gmra.mxu0 %v4273
        %v4313 = vpop.f32.mrf.mxu0
        %v4314 = vadd.f32 0.0, %v4313
        %4315 = vdwg.mxu0
        %v4316 = vadd.f32 %v3906, %v4293
        %v4317 = vadd.f32 %v3907, %v4296
        %v4318 = vadd.f32 %v3908, %v4299
        %v4319 = vadd.f32 %v3909, %v4302
        %v4320 = vadd.f32 %v3910, %v4305
        %v4321 = vadd.f32 %v3911, %v4308
        %v4322 = vadd.f32 %v3912, %v4311
        %v4323 = vadd.f32 %v3913, %v4314
        %v4324 = vperm.slane %v415, 4
        %v4325 = vadd.f32 %v4316, %v4324
        %v4326 = vadd.f32 %v4317, %v4324
        %v4327 = vadd.f32 %v4318, %v4324
        %v4328 = vadd.f32 %v4319, %v4324
        %v4329 = vadd.f32 %v4320, %v4324
        %v4330 = vadd.f32 %v4321, %v4324
        %v4331 = vadd.f32 %v4322, %v4324
        %v4332 = vadd.f32 %v4323, %v4324
        %v4333 = vadd.f32 %v4325, %v639
        %v4334 = vadd.f32 %v4326, %v640
        %v4335 = vadd.f32 %v4327, %v641
        %v4336 = vadd.f32 %v4328, %v642
        %v4337 = vadd.f32 %v4329, %v643
        %v4338 = vadd.f32 %v4330, %v644
        %v4339 = vadd.f32 %v4331, %v645
        %v4340 = vadd.f32 %v4332, %v646
        %v4341 = vsel %vm445, %v4333, 0.0
        %4342 = vadd.xlane.f32.xlu0 %v4341
        %v4343 = vpop.xlane.xlu0 %4342
        %v4344 = vsel %vm445, %v4334, 0.0
        %4345 = vadd.xlane.f32.xlu0 %v4344
        %v4346 = vpop.xlane.xlu0 %4345
        %v4347 = vsel %vm445, %v4335, 0.0
        %4348 = vadd.xlane.f32.xlu0 %v4347
        %v4349 = vpop.xlane.xlu0 %4348
        %v4350 = vsel %vm445, %v4336, 0.0
        %4351 = vadd.xlane.f32.xlu0 %v4350
        %v4352 = vpop.xlane.xlu0 %4351
        %v4353 = vsel %vm445, %v4337, 0.0
        %4354 = vadd.xlane.f32.xlu0 %v4353
        %v4355 = vpop.xlane.xlu0 %4354
        %v4356 = vsel %vm445, %v4338, 0.0
        %4357 = vadd.xlane.f32.xlu0 %v4356
        %v4358 = vpop.xlane.xlu0 %4357
        %v4359 = vsel %vm445, %v4339, 0.0
        %4360 = vadd.xlane.f32.xlu0 %v4359
        %v4361 = vpop.xlane.xlu0 %4360
        %v4362 = vsel %vm445, %v4340, 0.0
        %4363 = vadd.xlane.f32.xlu0 %v4362
        %v4364 = vpop.xlane.xlu0 %4363
        %v4365 = vmul.f32 %v4343, %v476
        %v4366 = vmul.f32 %v4346, %v476
        %v4367 = vmul.f32 %v4349, %v476
        %v4368 = vmul.f32 %v4352, %v476
        %v4369 = vmul.f32 %v4355, %v476
        %v4370 = vmul.f32 %v4358, %v476
        %v4371 = vmul.f32 %v4361, %v476
        %v4372 = vmul.f32 %v4364, %v476
        %v4373 = vsub.f32 %v4333, %v4365
        %v4374 = vsub.f32 %v4334, %v4366
        %v4375 = vsub.f32 %v4335, %v4367
        %v4376 = vsub.f32 %v4336, %v4368
        %v4377 = vsub.f32 %v4337, %v4369
        %v4378 = vsub.f32 %v4338, %v4370
        %v4379 = vsub.f32 %v4339, %v4371
        %v4380 = vsub.f32 %v4340, %v4372
        %v4381 = vmul.f32 %v4373, %v4373
        %v4382 = vmul.f32 %v4374, %v4374
        %v4383 = vmul.f32 %v4375, %v4375
        %v4384 = vmul.f32 %v4376, %v4376
        %v4385 = vmul.f32 %v4377, %v4377
        %v4386 = vmul.f32 %v4378, %v4378
        %v4387 = vmul.f32 %v4379, %v4379
        %v4388 = vmul.f32 %v4380, %v4380
        %v4389 = vsel %vm445, %v4381, 0.0
        %4390 = vadd.xlane.f32.xlu0 %v4389
        %v4391 = vpop.xlane.xlu0 %4390
        %v4392 = vsel %vm445, %v4382, 0.0
        %4393 = vadd.xlane.f32.xlu0 %v4392
        %v4394 = vpop.xlane.xlu0 %4393
        %v4395 = vsel %vm445, %v4383, 0.0
        %4396 = vadd.xlane.f32.xlu0 %v4395
        %v4397 = vpop.xlane.xlu0 %4396
        %v4398 = vsel %vm445, %v4384, 0.0
        %4399 = vadd.xlane.f32.xlu0 %v4398
        %v4400 = vpop.xlane.xlu0 %4399
        %v4401 = vsel %vm445, %v4385, 0.0
        %4402 = vadd.xlane.f32.xlu0 %v4401
        %v4403 = vpop.xlane.xlu0 %4402
        %v4404 = vsel %vm445, %v4386, 0.0
        %4405 = vadd.xlane.f32.xlu0 %v4404
        %v4406 = vpop.xlane.xlu0 %4405
        %v4407 = vsel %vm445, %v4387, 0.0
        %4408 = vadd.xlane.f32.xlu0 %v4407
        %v4409 = vpop.xlane.xlu0 %4408
        %v4410 = vsel %vm445, %v4388, 0.0
        %4411 = vadd.xlane.f32.xlu0 %v4410
        %v4412 = vpop.xlane.xlu0 %4411
        %v4413 = vmul.f32 %v4391, %v476
        %v4414 = vmul.f32 %v4394, %v476
        %v4415 = vmul.f32 %v4397, %v476
        %v4416 = vmul.f32 %v4400, %v476
        %v4417 = vmul.f32 %v4403, %v476
        %v4418 = vmul.f32 %v4406, %v476
        %v4419 = vmul.f32 %v4409, %v476
        %v4420 = vmul.f32 %v4412, %v476
        %v4421 = vadd.f32 %v4413, 1e-05
        %v4422 = vadd.f32 %v4414, 1e-05
        %v4423 = vadd.f32 %v4415, 1e-05
        %v4424 = vadd.f32 %v4416, 1e-05
        %v4425 = vadd.f32 %v4417, 1e-05
        %v4426 = vadd.f32 %v4418, 1e-05
        %v4427 = vadd.f32 %v4419, 1e-05
        %v4428 = vadd.f32 %v4420, 1e-05
        %v4429 = vrsqrt.pop %v4421
        %v4430 = vmul.f32 %v4429, %v4421
        %v4431 = vmul.f32 %v4430, %v4429
        %v4432 = vmul.f32 0.5, %v4431
        %v4433 = vsub.f32 1.5, %v4432
        %v4434 = vmul.f32 %v4429, %v4433
        %vm4435 = vweird.f32 %v4421
        %vm4436 = vweird.f32 %v4429
        %vm4437 = vmor %vm4435, %vm4436
        %v4438 = vsel %vm4437, %v4429, %v4434
        %v4439 = vrsqrt.pop %v4422
        %v4440 = vmul.f32 %v4439, %v4422
        %v4441 = vmul.f32 %v4440, %v4439
        %v4442 = vmul.f32 0.5, %v4441
        %v4443 = vsub.f32 1.5, %v4442
        %v4444 = vmul.f32 %v4439, %v4443
        %vm4445 = vweird.f32 %v4422
        %vm4446 = vweird.f32 %v4439
        %vm4447 = vmor %vm4445, %vm4446
        %v4448 = vsel %vm4447, %v4439, %v4444
        %v4449 = vrsqrt.pop %v4423
        %v4450 = vmul.f32 %v4449, %v4423
        %v4451 = vmul.f32 %v4450, %v4449
        %v4452 = vmul.f32 0.5, %v4451
        %v4453 = vsub.f32 1.5, %v4452
        %v4454 = vmul.f32 %v4449, %v4453
        %vm4455 = vweird.f32 %v4423
        %vm4456 = vweird.f32 %v4449
        %vm4457 = vmor %vm4455, %vm4456
        %v4458 = vsel %vm4457, %v4449, %v4454
        %v4459 = vrsqrt.pop %v4424
        %v4460 = vmul.f32 %v4459, %v4424
        %v4461 = vmul.f32 %v4460, %v4459
        %v4462 = vmul.f32 0.5, %v4461
        %v4463 = vsub.f32 1.5, %v4462
        %v4464 = vmul.f32 %v4459, %v4463
        %vm4465 = vweird.f32 %v4424
        %vm4466 = vweird.f32 %v4459
        %vm4467 = vmor %vm4465, %vm4466
        %v4468 = vsel %vm4467, %v4459, %v4464
        %v4469 = vrsqrt.pop %v4425
        %v4470 = vmul.f32 %v4469, %v4425
        %v4471 = vmul.f32 %v4470, %v4469
        %v4472 = vmul.f32 0.5, %v4471
        %v4473 = vsub.f32 1.5, %v4472
        %v4474 = vmul.f32 %v4469, %v4473
        %vm4475 = vweird.f32 %v4425
        %vm4476 = vweird.f32 %v4469
        %vm4477 = vmor %vm4475, %vm4476
        %v4478 = vsel %vm4477, %v4469, %v4474
        %v4479 = vrsqrt.pop %v4426
        %v4480 = vmul.f32 %v4479, %v4426
        %v4481 = vmul.f32 %v4480, %v4479
        %v4482 = vmul.f32 0.5, %v4481
        %v4483 = vsub.f32 1.5, %v4482
        %v4484 = vmul.f32 %v4479, %v4483
        %vm4485 = vweird.f32 %v4426
        %vm4486 = vweird.f32 %v4479
        %vm4487 = vmor %vm4485, %vm4486
        %v4488 = vsel %vm4487, %v4479, %v4484
        %v4489 = vrsqrt.pop %v4427
        %v4490 = vmul.f32 %v4489, %v4427
        %v4491 = vmul.f32 %v4490, %v4489
        %v4492 = vmul.f32 0.5, %v4491
        %v4493 = vsub.f32 1.5, %v4492
        %v4494 = vmul.f32 %v4489, %v4493
        %vm4495 = vweird.f32 %v4427
        %vm4496 = vweird.f32 %v4489
        %vm4497 = vmor %vm4495, %vm4496
        %v4498 = vsel %vm4497, %v4489, %v4494
        %v4499 = vrsqrt.pop %v4428
        %v4500 = vmul.f32 %v4499, %v4428
        %v4501 = vmul.f32 %v4500, %v4499
        %v4502 = vmul.f32 0.5, %v4501
        %v4503 = vsub.f32 1.5, %v4502
        %v4504 = vmul.f32 %v4499, %v4503
        %vm4505 = vweird.f32 %v4428
        %vm4506 = vweird.f32 %v4499
        %vm4507 = vmor %vm4505, %vm4506
        %v4508 = vsel %vm4507, %v4499, %v4504
        %v4509 = vmul.f32 %v4373, %v4438
        %v4510 = vmul.f32 %v4374, %v4448
        %v4511 = vmul.f32 %v4375, %v4458
        %v4512 = vmul.f32 %v4376, %v4468
        %v4513 = vmul.f32 %v4377, %v4478
        %v4514 = vmul.f32 %v4378, %v4488
        %v4515 = vmul.f32 %v4379, %v4498
        %v4516 = vmul.f32 %v4380, %v4508
        %v4517 = vperm.slane %v415, 2
        %v4518 = vmul.f32 %v4509, %v4517
        %v4519 = vmul.f32 %v4510, %v4517
        %v4520 = vmul.f32 %v4511, %v4517
        %v4521 = vmul.f32 %v4512, %v4517
        %v4522 = vmul.f32 %v4513, %v4517
        %v4523 = vmul.f32 %v4514, %v4517
        %v4524 = vmul.f32 %v4515, %v4517
        %v4525 = vmul.f32 %v4516, %v4517
        %v4526 = vperm.slane %v415, 3
        %v4527 = vadd.f32 %v4518, %v4526
        %v4528 = vadd.f32 %v4519, %v4526
        %v4529 = vadd.f32 %v4520, %v4526
        %v4530 = vadd.f32 %v4521, %v4526
        %v4531 = vadd.f32 %v4522, %v4526
        %v4532 = vadd.f32 %v4523, %v4526
        %v4533 = vadd.f32 %v4524, %v4526
        %v4534 = vadd.f32 %v4525, %v4526
        %v4535 = vld [vmem:[%s399] sm:$0xff]
        %v4536 = vld [vmem:[%s399 + $0x8] sm:$0xff]
        %v4537 = vld [vmem:[%s399 + $0x10] sm:$0xff]
        %v4538 = vld [vmem:[%s399 + $0x18] sm:$0xff]
        %v4539 = vperm.slane %v415, 6
        %v4541 = vsel %vm445, %v4527, 0
        %v4544 = vsel %vm445, %v4528, 0
        %v4547 = vsel %vm445, %v4529, 0
        %v4550 = vsel %vm445, %v4530, 0
        %v4553 = vsel %vm445, %v4531, 0
        %v4556 = vsel %vm445, %v4532, 0
        %v4559 = vsel %vm445, %v4533, 0
        %v4562 = vsel %vm445, %v4534, 0
        %4564 = vmatpush.msra.mxu0 0.0
        %4565 = vmatpush.msra.mxu0 0.0
        %4566 = vmatpush.msra.mxu0 0.0
        %4567 = vmatpush.msra.mxu0 0.0
        %4568 = vmatpush.msra.mxu0 0.0
        %4569 = vmatpush.msra.mxu0 0.0
        %4570 = vmatpush.msra.mxu0 0.0
        %4571 = vmatpush.msra.mxu0 0.0
        %4572 = vmatpush.msra.mxu0 0.0
        %4573 = vmatpush.msra.mxu0 0.0
        %4574 = vmatpush.msra.mxu0 0.0
        %4575 = vmatpush.msra.mxu0 0.0
        %4576 = vmatpush.msra.mxu0 %v4538
        %4577 = vmatpush.msra.mxu0 %v4537
        %4578 = vmatpush.msra.mxu0 %v4536
        %4579 = vmatpush.msra.mxu0 %v4535
        %4580 = vmatmul.f32.gmra.mxu0 %v4541
        %v4581 = vpop.f32.mrf.mxu0
        %v4582 = vadd.f32 %v4539, %v4581
        %4583 = vmatmul.f32.gmra.mxu0 %v4544
        %v4584 = vpop.f32.mrf.mxu0
        %v4585 = vadd.f32 %v4539, %v4584
        %4586 = vmatmul.f32.gmra.mxu0 %v4547
        %v4587 = vpop.f32.mrf.mxu0
        %v4588 = vadd.f32 %v4539, %v4587
        %4589 = vmatmul.f32.gmra.mxu0 %v4550
        %v4590 = vpop.f32.mrf.mxu0
        %v4591 = vadd.f32 %v4539, %v4590
        %4592 = vmatmul.f32.gmra.mxu0 %v4553
        %v4593 = vpop.f32.mrf.mxu0
        %v4594 = vadd.f32 %v4539, %v4593
        %4595 = vmatmul.f32.gmra.mxu0 %v4556
        %v4596 = vpop.f32.mrf.mxu0
        %v4597 = vadd.f32 %v4539, %v4596
        %4598 = vmatmul.f32.gmra.mxu0 %v4559
        %v4599 = vpop.f32.mrf.mxu0
        %v4600 = vadd.f32 %v4539, %v4599
        %4601 = vmatmul.f32.gmra.mxu0 %v4562
        %v4602 = vpop.f32.mrf.mxu0
        %v4603 = vadd.f32 %v4539, %v4602
        %4604 = vdwg.mxu0
        %v4605 = vmul.f32 %v4582, 0.5
        %v4606 = vmul.f32 %v4585, 0.5
        %v4607 = vmul.f32 %v4588, 0.5
        %v4608 = vmul.f32 %v4591, 0.5
        %v4609 = vmul.f32 %v4594, 0.5
        %v4610 = vmul.f32 %v4597, 0.5
        %v4611 = vmul.f32 %v4600, 0.5
        %v4612 = vmul.f32 %v4603, 0.5
        %v4613 = vmul.f32 %v4582, 0.70710677
        %v4614 = vmul.f32 %v4585, 0.70710677
        %v4615 = vmul.f32 %v4588, 0.70710677
        %v4616 = vmul.f32 %v4591, 0.70710677
        %v4617 = vmul.f32 %v4594, 0.70710677
        %v4618 = vmul.f32 %v4597, 0.70710677
        %v4619 = vmul.f32 %v4600, 0.70710677
        %v4620 = vmul.f32 %v4603, 0.70710677
        %v4621 = vmul.f32 %v4613, %v4613
        %v4622 = vmin.f32 16.0, %v4621
        %v4623 = vmul.f32 %v4622, 2.1237322e-06
        %v4624 = vadd.f32 %v4623, 0.00028619796
        %v4625 = vmul.f32 %v4622, %v4624
        %v4626 = vadd.f32 %v4625, 0.0036580483
        %v4627 = vmul.f32 %v4622, %v4626
        %v4628 = vadd.f32 %v4627, 0.05243302
        %v4629 = vmul.f32 %v4622, %v4628
        %v4630 = vadd.f32 %v4629, 0.18741608
        %v4631 = vmul.f32 %v4622, %v4630
        %v4632 = vadd.f32 %v4631, 1.1283791
        %v4633 = vmul.f32 %v4613, %v4632
        %v4634 = vmul.f32 %v4622, 3.8918573e-05
        %v4635 = vadd.f32 %v4634, 0.001143296
        %v4636 = vmul.f32 %v4622, %v4635
        %v4637 = vadd.f32 %v4636, 0.014752088
        %v4638 = vmul.f32 %v4622, %v4637
        %v4639 = vadd.f32 %v4638, 0.112945676
        %v4640 = vmul.f32 %v4622, %v4639
        %v4641 = vadd.f32 %v4640, 0.4994258
        %v4642 = vmul.f32 %v4622, %v4641
        %v4643 = vadd.f32 %v4642, 1.0
        %v4644 = vrcp.pop %v4643
        %v4645 = vmul.f32 %v4643, %v4644
        %v4646 = vsub.f32 1.0, %v4645
        %v4647 = vmul.f32 %v4644, %v4646
        %v4648 = vadd.f32 %v4644, %v4647
        %vm4649 = vweird.f32 %v4643
        %vm4650 = vweird.f32 %v4644
        %vm4651 = vmor %vm4649, %vm4650
        %v4652 = vsel %vm4651, %v4644, %v4648
        %v4653 = vand.u32 2147483647, %v4643
        %vm4654 = vcmp.eq.f32.partialorder %v4653, 8.507059e+37
        %v4655 = vand.u32 %v4643, 2147483648
        %v4656 = vor.u32 1.1754944e-38, %v4655
        %v4657 = vsel %vm4654, %v4656, %v4652
        %v4658 = vmul.f32 %v4633, %v4657
        %v4659 = vmin.f32 %v4658, 1.0
        %v4660 = vmax.f32 %v4659, -1.0
        %v4661 = vmul.f32 %v4614, %v4614
        %v4662 = vmin.f32 16.0, %v4661
        %v4663 = vmul.f32 %v4662, 2.1237322e-06
        %v4664 = vadd.f32 %v4663, 0.00028619796
        %v4665 = vmul.f32 %v4662, %v4664
        %v4666 = vadd.f32 %v4665, 0.0036580483
        %v4667 = vmul.f32 %v4662, %v4666
        %v4668 = vadd.f32 %v4667, 0.05243302
        %v4669 = vmul.f32 %v4662, %v4668
        %v4670 = vadd.f32 %v4669, 0.18741608
        %v4671 = vmul.f32 %v4662, %v4670
        %v4672 = vadd.f32 %v4671, 1.1283791
        %v4673 = vmul.f32 %v4614, %v4672
        %v4674 = vmul.f32 %v4662, 3.8918573e-05
        %v4675 = vadd.f32 %v4674, 0.001143296
        %v4676 = vmul.f32 %v4662, %v4675
        %v4677 = vadd.f32 %v4676, 0.014752088
        %v4678 = vmul.f32 %v4662, %v4677
        %v4679 = vadd.f32 %v4678, 0.112945676
        %v4680 = vmul.f32 %v4662, %v4679
        %v4681 = vadd.f32 %v4680, 0.4994258
        %v4682 = vmul.f32 %v4662, %v4681
        %v4683 = vadd.f32 %v4682, 1.0
        %v4684 = vrcp.pop %v4683
        %v4685 = vmul.f32 %v4683, %v4684
        %v4686 = vsub.f32 1.0, %v4685
        %v4687 = vmul.f32 %v4684, %v4686
        %v4688 = vadd.f32 %v4684, %v4687
        %vm4689 = vweird.f32 %v4683
        %vm4690 = vweird.f32 %v4684
        %vm4691 = vmor %vm4689, %vm4690
        %v4692 = vsel %vm4691, %v4684, %v4688
        %v4693 = vand.u32 2147483647, %v4683
        %vm4694 = vcmp.eq.f32.partialorder %v4693, 8.507059e+37
        %v4695 = vand.u32 %v4683, 2147483648
        %v4696 = vor.u32 1.1754944e-38, %v4695
        %v4697 = vsel %vm4694, %v4696, %v4692
        %v4698 = vmul.f32 %v4673, %v4697
        %v4699 = vmin.f32 %v4698, 1.0
        %v4700 = vmax.f32 %v4699, -1.0
        %v4701 = vmul.f32 %v4615, %v4615
        %v4702 = vmin.f32 16.0, %v4701
        %v4703 = vmul.f32 %v4702, 2.1237322e-06
        %v4704 = vadd.f32 %v4703, 0.00028619796
        %v4705 = vmul.f32 %v4702, %v4704
        %v4706 = vadd.f32 %v4705, 0.0036580483
        %v4707 = vmul.f32 %v4702, %v4706
        %v4708 = vadd.f32 %v4707, 0.05243302
        %v4709 = vmul.f32 %v4702, %v4708
        %v4710 = vadd.f32 %v4709, 0.18741608
        %v4711 = vmul.f32 %v4702, %v4710
        %v4712 = vadd.f32 %v4711, 1.1283791
        %v4713 = vmul.f32 %v4615, %v4712
        %v4714 = vmul.f32 %v4702, 3.8918573e-05
        %v4715 = vadd.f32 %v4714, 0.001143296
        %v4716 = vmul.f32 %v4702, %v4715
        %v4717 = vadd.f32 %v4716, 0.014752088
        %v4718 = vmul.f32 %v4702, %v4717
        %v4719 = vadd.f32 %v4718, 0.112945676
        %v4720 = vmul.f32 %v4702, %v4719
        %v4721 = vadd.f32 %v4720, 0.4994258
        %v4722 = vmul.f32 %v4702, %v4721
        %v4723 = vadd.f32 %v4722, 1.0
        %v4724 = vrcp.pop %v4723
        %v4725 = vmul.f32 %v4723, %v4724
        %v4726 = vsub.f32 1.0, %v4725
        %v4727 = vmul.f32 %v4724, %v4726
        %v4728 = vadd.f32 %v4724, %v4727
        %vm4729 = vweird.f32 %v4723
        %vm4730 = vweird.f32 %v4724
        %vm4731 = vmor %vm4729, %vm4730
        %v4732 = vsel %vm4731, %v4724, %v4728
        %v4733 = vand.u32 2147483647, %v4723
        %vm4734 = vcmp.eq.f32.partialorder %v4733, 8.507059e+37
        %v4735 = vand.u32 %v4723, 2147483648
        %v4736 = vor.u32 1.1754944e-38, %v4735
        %v4737 = vsel %vm4734, %v4736, %v4732
        %v4738 = vmul.f32 %v4713, %v4737
        %v4739 = vmin.f32 %v4738, 1.0
        %v4740 = vmax.f32 %v4739, -1.0
        %v4741 = vmul.f32 %v4616, %v4616
        %v4742 = vmin.f32 16.0, %v4741
        %v4743 = vmul.f32 %v4742, 2.1237322e-06
        %v4744 = vadd.f32 %v4743, 0.00028619796
        %v4745 = vmul.f32 %v4742, %v4744
        %v4746 = vadd.f32 %v4745, 0.0036580483
        %v4747 = vmul.f32 %v4742, %v4746
        %v4748 = vadd.f32 %v4747, 0.05243302
        %v4749 = vmul.f32 %v4742, %v4748
        %v4750 = vadd.f32 %v4749, 0.18741608
        %v4751 = vmul.f32 %v4742, %v4750
        %v4752 = vadd.f32 %v4751, 1.1283791
        %v4753 = vmul.f32 %v4616, %v4752
        %v4754 = vmul.f32 %v4742, 3.8918573e-05
        %v4755 = vadd.f32 %v4754, 0.001143296
        %v4756 = vmul.f32 %v4742, %v4755
        %v4757 = vadd.f32 %v4756, 0.014752088
        %v4758 = vmul.f32 %v4742, %v4757
        %v4759 = vadd.f32 %v4758, 0.112945676
        %v4760 = vmul.f32 %v4742, %v4759
        %v4761 = vadd.f32 %v4760, 0.4994258
        %v4762 = vmul.f32 %v4742, %v4761
        %v4763 = vadd.f32 %v4762, 1.0
        %v4764 = vrcp.pop %v4763
        %v4765 = vmul.f32 %v4763, %v4764
        %v4766 = vsub.f32 1.0, %v4765
        %v4767 = vmul.f32 %v4764, %v4766
        %v4768 = vadd.f32 %v4764, %v4767
        %vm4769 = vweird.f32 %v4763
        %vm4770 = vweird.f32 %v4764
        %vm4771 = vmor %vm4769, %vm4770
        %v4772 = vsel %vm4771, %v4764, %v4768
        %v4773 = vand.u32 2147483647, %v4763
        %vm4774 = vcmp.eq.f32.partialorder %v4773, 8.507059e+37
        %v4775 = vand.u32 %v4763, 2147483648
        %v4776 = vor.u32 1.1754944e-38, %v4775
        %v4777 = vsel %vm4774, %v4776, %v4772
        %v4778 = vmul.f32 %v4753, %v4777
        %v4779 = vmin.f32 %v4778, 1.0
        %v4780 = vmax.f32 %v4779, -1.0
        %v4781 = vmul.f32 %v4617, %v4617
        %v4782 = vmin.f32 16.0, %v4781
        %v4783 = vmul.f32 %v4782, 2.1237322e-06
        %v4784 = vadd.f32 %v4783, 0.00028619796
        %v4785 = vmul.f32 %v4782, %v4784
        %v4786 = vadd.f32 %v4785, 0.0036580483
        %v4787 = vmul.f32 %v4782, %v4786
        %v4788 = vadd.f32 %v4787, 0.05243302
        %v4789 = vmul.f32 %v4782, %v4788
        %v4790 = vadd.f32 %v4789, 0.18741608
        %v4791 = vmul.f32 %v4782, %v4790
        %v4792 = vadd.f32 %v4791, 1.1283791
        %v4793 = vmul.f32 %v4617, %v4792
        %v4794 = vmul.f32 %v4782, 3.8918573e-05
        %v4795 = vadd.f32 %v4794, 0.001143296
        %v4796 = vmul.f32 %v4782, %v4795
        %v4797 = vadd.f32 %v4796, 0.014752088
        %v4798 = vmul.f32 %v4782, %v4797
        %v4799 = vadd.f32 %v4798, 0.112945676
        %v4800 = vmul.f32 %v4782, %v4799
        %v4801 = vadd.f32 %v4800, 0.4994258
        %v4802 = vmul.f32 %v4782, %v4801
        %v4803 = vadd.f32 %v4802, 1.0
        %v4804 = vrcp.pop %v4803
        %v4805 = vmul.f32 %v4803, %v4804
        %v4806 = vsub.f32 1.0, %v4805
        %v4807 = vmul.f32 %v4804, %v4806
        %v4808 = vadd.f32 %v4804, %v4807
        %vm4809 = vweird.f32 %v4803
        %vm4810 = vweird.f32 %v4804
        %vm4811 = vmor %vm4809, %vm4810
        %v4812 = vsel %vm4811, %v4804, %v4808
        %v4813 = vand.u32 2147483647, %v4803
        %vm4814 = vcmp.eq.f32.partialorder %v4813, 8.507059e+37
        %v4815 = vand.u32 %v4803, 2147483648
        %v4816 = vor.u32 1.1754944e-38, %v4815
        %v4817 = vsel %vm4814, %v4816, %v4812
        %v4818 = vmul.f32 %v4793, %v4817
        %v4819 = vmin.f32 %v4818, 1.0
        %v4820 = vmax.f32 %v4819, -1.0
        %v4821 = vmul.f32 %v4618, %v4618
        %v4822 = vmin.f32 16.0, %v4821
        %v4823 = vmul.f32 %v4822, 2.1237322e-06
        %v4824 = vadd.f32 %v4823, 0.00028619796
        %v4825 = vmul.f32 %v4822, %v4824
        %v4826 = vadd.f32 %v4825, 0.0036580483
        %v4827 = vmul.f32 %v4822, %v4826
        %v4828 = vadd.f32 %v4827, 0.05243302
        %v4829 = vmul.f32 %v4822, %v4828
        %v4830 = vadd.f32 %v4829, 0.18741608
        %v4831 = vmul.f32 %v4822, %v4830
        %v4832 = vadd.f32 %v4831, 1.1283791
        %v4833 = vmul.f32 %v4618, %v4832
        %v4834 = vmul.f32 %v4822, 3.8918573e-05
        %v4835 = vadd.f32 %v4834, 0.001143296
        %v4836 = vmul.f32 %v4822, %v4835
        %v4837 = vadd.f32 %v4836, 0.014752088
        %v4838 = vmul.f32 %v4822, %v4837
        %v4839 = vadd.f32 %v4838, 0.112945676
        %v4840 = vmul.f32 %v4822, %v4839
        %v4841 = vadd.f32 %v4840, 0.4994258
        %v4842 = vmul.f32 %v4822, %v4841
        %v4843 = vadd.f32 %v4842, 1.0
        %v4844 = vrcp.pop %v4843
        %v4845 = vmul.f32 %v4843, %v4844
        %v4846 = vsub.f32 1.0, %v4845
        %v4847 = vmul.f32 %v4844, %v4846
        %v4848 = vadd.f32 %v4844, %v4847
        %vm4849 = vweird.f32 %v4843
        %vm4850 = vweird.f32 %v4844
        %vm4851 = vmor %vm4849, %vm4850
        %v4852 = vsel %vm4851, %v4844, %v4848
        %v4853 = vand.u32 2147483647, %v4843
        %vm4854 = vcmp.eq.f32.partialorder %v4853, 8.507059e+37
        %v4855 = vand.u32 %v4843, 2147483648
        %v4856 = vor.u32 1.1754944e-38, %v4855
        %v4857 = vsel %vm4854, %v4856, %v4852
        %v4858 = vmul.f32 %v4833, %v4857
        %v4859 = vmin.f32 %v4858, 1.0
        %v4860 = vmax.f32 %v4859, -1.0
        %v4861 = vmul.f32 %v4619, %v4619
        %v4862 = vmin.f32 16.0, %v4861
        %v4863 = vmul.f32 %v4862, 2.1237322e-06
        %v4864 = vadd.f32 %v4863, 0.00028619796
        %v4865 = vmul.f32 %v4862, %v4864
        %v4866 = vadd.f32 %v4865, 0.0036580483
        %v4867 = vmul.f32 %v4862, %v4866
        %v4868 = vadd.f32 %v4867, 0.05243302
        %v4869 = vmul.f32 %v4862, %v4868
        %v4870 = vadd.f32 %v4869, 0.18741608
        %v4871 = vmul.f32 %v4862, %v4870
        %v4872 = vadd.f32 %v4871, 1.1283791
        %v4873 = vmul.f32 %v4619, %v4872
        %v4874 = vmul.f32 %v4862, 3.8918573e-05
        %v4875 = vadd.f32 %v4874, 0.001143296
        %v4876 = vmul.f32 %v4862, %v4875
        %v4877 = vadd.f32 %v4876, 0.014752088
        %v4878 = vmul.f32 %v4862, %v4877
        %v4879 = vadd.f32 %v4878, 0.112945676
        %v4880 = vmul.f32 %v4862, %v4879
        %v4881 = vadd.f32 %v4880, 0.4994258
        %v4882 = vmul.f32 %v4862, %v4881
        %v4883 = vadd.f32 %v4882, 1.0
        %v4884 = vrcp.pop %v4883
        %v4885 = vmul.f32 %v4883, %v4884
        %v4886 = vsub.f32 1.0, %v4885
        %v4887 = vmul.f32 %v4884, %v4886
        %v4888 = vadd.f32 %v4884, %v4887
        %vm4889 = vweird.f32 %v4883
        %vm4890 = vweird.f32 %v4884
        %vm4891 = vmor %vm4889, %vm4890
        %v4892 = vsel %vm4891, %v4884, %v4888
        %v4893 = vand.u32 2147483647, %v4883
        %vm4894 = vcmp.eq.f32.partialorder %v4893, 8.507059e+37
        %v4895 = vand.u32 %v4883, 2147483648
        %v4896 = vor.u32 1.1754944e-38, %v4895
        %v4897 = vsel %vm4894, %v4896, %v4892
        %v4898 = vmul.f32 %v4873, %v4897
        %v4899 = vmin.f32 %v4898, 1.0
        %v4900 = vmax.f32 %v4899, -1.0
        %v4901 = vmul.f32 %v4620, %v4620
        %v4902 = vmin.f32 16.0, %v4901
        %v4903 = vmul.f32 %v4902, 2.1237322e-06
        %v4904 = vadd.f32 %v4903, 0.00028619796
        %v4905 = vmul.f32 %v4902, %v4904
        %v4906 = vadd.f32 %v4905, 0.0036580483
        %v4907 = vmul.f32 %v4902, %v4906
        %v4908 = vadd.f32 %v4907, 0.05243302
        %v4909 = vmul.f32 %v4902, %v4908
        %v4910 = vadd.f32 %v4909, 0.18741608
        %v4911 = vmul.f32 %v4902, %v4910
        %v4912 = vadd.f32 %v4911, 1.1283791
        %v4913 = vmul.f32 %v4620, %v4912
        %v4914 = vmul.f32 %v4902, 3.8918573e-05
        %v4915 = vadd.f32 %v4914, 0.001143296
        %v4916 = vmul.f32 %v4902, %v4915
        %v4917 = vadd.f32 %v4916, 0.014752088
        %v4918 = vmul.f32 %v4902, %v4917
        %v4919 = vadd.f32 %v4918, 0.112945676
        %v4920 = vmul.f32 %v4902, %v4919
        %v4921 = vadd.f32 %v4920, 0.4994258
        %v4922 = vmul.f32 %v4902, %v4921
        %v4923 = vadd.f32 %v4922, 1.0
        %v4924 = vrcp.pop %v4923
        %v4925 = vmul.f32 %v4923, %v4924
        %v4926 = vsub.f32 1.0, %v4925
        %v4927 = vmul.f32 %v4924, %v4926
        %v4928 = vadd.f32 %v4924, %v4927
        %vm4929 = vweird.f32 %v4923
        %vm4930 = vweird.f32 %v4924
        %vm4931 = vmor %vm4929, %vm4930
        %v4932 = vsel %vm4931, %v4924, %v4928
        %v4933 = vand.u32 2147483647, %v4923
        %vm4934 = vcmp.eq.f32.partialorder %v4933, 8.507059e+37
        %v4935 = vand.u32 %v4923, 2147483648
        %v4936 = vor.u32 1.1754944e-38, %v4935
        %v4937 = vsel %vm4934, %v4936, %v4932
        %v4938 = vmul.f32 %v4913, %v4937
        %v4939 = vmin.f32 %v4938, 1.0
        %v4940 = vmax.f32 %v4939, -1.0
        %v4941 = vadd.f32 %v4660, 1.0
        %v4942 = vadd.f32 %v4700, 1.0
        %v4943 = vadd.f32 %v4740, 1.0
        %v4944 = vadd.f32 %v4780, 1.0
        %v4945 = vadd.f32 %v4820, 1.0
        %v4946 = vadd.f32 %v4860, 1.0
        %v4947 = vadd.f32 %v4900, 1.0
        %v4948 = vadd.f32 %v4940, 1.0
        %v4949 = vmul.f32 %v4605, %v4941
        %v4950 = vmul.f32 %v4606, %v4942
        %v4951 = vmul.f32 %v4607, %v4943
        %v4952 = vmul.f32 %v4608, %v4944
        %v4953 = vmul.f32 %v4609, %v4945
        %v4954 = vmul.f32 %v4610, %v4946
        %v4955 = vmul.f32 %v4611, %v4947
        %v4956 = vmul.f32 %v4612, %v4948
        %v4957 = vld [vmem:[%s404] sm:$0xff]
        %v4958 = vld [vmem:[%s404 + $0x8] sm:$0xff]
        %v4959 = vld [vmem:[%s404 + $0x10] sm:$0xff]
        %v4960 = vld [vmem:[%s404 + $0x18] sm:$0xff]
        %v4961 = vld [vmem:[%s404 + $0x20] sm:$0xff]
        %v4962 = vld [vmem:[%s404 + $0x28] sm:$0xff]
        %v4963 = vld [vmem:[%s404 + $0x30] sm:$0xff]
        %v4964 = vld [vmem:[%s404 + $0x38] sm:$0xff]
        %v4965 = vperm.slane %v415, 5
        %v4967 = vsel %vm1228, %v4949, 0
        %v4970 = vsel %vm1228, %v4950, 0
        %v4973 = vsel %vm1228, %v4951, 0
        %v4976 = vsel %vm1228, %v4952, 0
        %v4979 = vsel %vm1228, %v4953, 0
        %v4982 = vsel %vm1228, %v4954, 0
        %v4985 = vsel %vm1228, %v4955, 0
        %v4988 = vsel %vm1228, %v4956, 0
        %4990 = vmatpush.msra.mxu0 0.0
        %4991 = vmatpush.msra.mxu0 0.0
        %4992 = vmatpush.msra.mxu0 0.0
        %4993 = vmatpush.msra.mxu0 0.0
        %4994 = vmatpush.msra.mxu0 0.0
        %4995 = vmatpush.msra.mxu0 0.0
        %4996 = vmatpush.msra.mxu0 0.0
        %4997 = vmatpush.msra.mxu0 0.0
        %4998 = vmatpush.msra.mxu0 %v4964
        %4999 = vmatpush.msra.mxu0 %v4963
        %5000 = vmatpush.msra.mxu0 %v4962
        %5001 = vmatpush.msra.mxu0 %v4961
        %5002 = vmatpush.msra.mxu0 %v4960
        %5003 = vmatpush.msra.mxu0 %v4959
        %5004 = vmatpush.msra.mxu0 %v4958
        %5005 = vmatpush.msra.mxu0 %v4957
        %5006 = vmatmul.f32.gmra.mxu0 %v4967
        %v5007 = vpop.f32.mrf.mxu0
        %v5008 = vadd.f32 %v4965, %v5007
        %5009 = vmatmul.f32.gmra.mxu0 %v4970
        %v5010 = vpop.f32.mrf.mxu0
        %v5011 = vadd.f32 %v4965, %v5010
        %5012 = vmatmul.f32.gmra.mxu0 %v4973
        %v5013 = vpop.f32.mrf.mxu0
        %v5014 = vadd.f32 %v4965, %v5013
        %5015 = vmatmul.f32.gmra.mxu0 %v4976
        %v5016 = vpop.f32.mrf.mxu0
        %v5017 = vadd.f32 %v4965, %v5016
        %5018 = vmatmul.f32.gmra.mxu0 %v4979
        %v5019 = vpop.f32.mrf.mxu0
        %v5020 = vadd.f32 %v4965, %v5019
        %5021 = vmatmul.f32.gmra.mxu0 %v4982
        %v5022 = vpop.f32.mrf.mxu0
        %v5023 = vadd.f32 %v4965, %v5022
        %5024 = vmatmul.f32.gmra.mxu0 %v4985
        %v5025 = vpop.f32.mrf.mxu0
        %v5026 = vadd.f32 %v4965, %v5025
        %5027 = vmatmul.f32.gmra.mxu0 %v4988
        %v5028 = vpop.f32.mrf.mxu0
        %v5029 = vadd.f32 %v4965, %v5028
        %5030 = vdwg.mxu0
        %v5031 = vadd.f32 %v5008, %v4527
        %v5032 = vadd.f32 %v5011, %v4528
        %v5033 = vadd.f32 %v5014, %v4529
        %v5034 = vadd.f32 %v5017, %v4530
        %v5035 = vadd.f32 %v5020, %v4531
        %v5036 = vadd.f32 %v5023, %v4532
        %v5037 = vadd.f32 %v5026, %v4533
        %v5038 = vadd.f32 %v5029, %v4534
        %5039 = vst.msk [vmem:[#allocation2] sm:$0xff] %vm445, %v5031
        %5040 = vst.msk [vmem:[#allocation2 + $0x8] sm:$0xff] %vm445, %v5032
        %5041 = vst.msk [vmem:[#allocation2 + $0x10] sm:$0xff] %vm445, %v5033
        %5042 = vst.msk [vmem:[#allocation2 + $0x18] sm:$0xff] %vm445, %v5034
        %5043 = vst.msk [vmem:[#allocation2 + $0x20] sm:$0xff] %vm445, %v5035
        %5044 = vst.msk [vmem:[#allocation2 + $0x28] sm:$0xff] %vm445, %v5036
        %5045 = vst.msk [vmem:[#allocation2 + $0x30] sm:$0xff] %vm445, %v5037
        %5046 = vst.msk [vmem:[#allocation2 + $0x38] sm:$0xff] %vm445, %v5038
        %p5047 = scmp.eq.s32.totalorder %s26, 4
        // Predicated region
        $region57: #{tpu_custom_call.1} parent=47 // pred_check
          %p5048 = pneg %p5047
        $region58: #{tpu_custom_call.1} parent=47 // pred_check_branch
          %5050 = sbr.rel (%p5048) target = $region60
        $region59: #{tpu_custom_call.1} parent=47 // pred_region
          %5051 = vst.msk [vmem:[%s413] sm:$0xff] %vm445, %v5031
          %5052 = vst.msk [vmem:[%s413 + $0x8] sm:$0xff] %vm445, %v5032
          %5053 = vst.msk [vmem:[%s413 + $0x10] sm:$0xff] %vm445, %v5033
          %5054 = vst.msk [vmem:[%s413 + $0x18] sm:$0xff] %vm445, %v5034
          %5055 = vst.msk [vmem:[%s413 + $0x20] sm:$0xff] %vm445, %v5035
          %5056 = vst.msk [vmem:[%s413 + $0x28] sm:$0xff] %vm445, %v5036
          %5057 = vst.msk [vmem:[%s413 + $0x30] sm:$0xff] %vm445, %v5037
          %5058 = vst.msk [vmem:[%s413 + $0x38] sm:$0xff] %vm445, %v5038
        $region60: #{tpu_custom_call.1} parent=47 // pred_fallthru
          _
        %s5059 = smul.u32 8, %s25
        %p5060 = scmp.lt.s32.totalorder %s5059, 31
        %s5061 = scalar_select %p5060, %s5059, 31
        %s5062 = smul.addr %s5061, 8
        %s5063 = scalar_lea.vmem %s7, %s5062
        // Predicated region
        $region61: #{tpu_custom_call.1} parent=47 // pred_check
          %p5064 = pneg %p228
        $region62: #{tpu_custom_call.1} parent=47 // pred_check_branch
          %5066 = sbr.rel (%p5064) target = $region64
        $region63: #{tpu_custom_call.1} parent=47 // pred_region
          %s5067 = smul.u32 8, %s25
        $region64: #{tpu_custom_call.1} parent=47 // pred_fallthru
          _
      $region48: #{tpu_custom_call.1} parent=5 // pred_fallthru
        _
      %p5068 = scmp.le.s32.totalorder 2, %s16
      // Predicated region
      $region65: #{tpu_custom_call.1} parent=5 // pred_check
        %p5069 = pneg %p5068
      $region66: #{tpu_custom_call.1} parent=5 // pred_check_branch
        %5071 = sbr.rel (%p5069) target = $region68
      $region67: #{tpu_custom_call.1} parent=5 // pred_region
        %s5072 = ssub.s32 %s16, 2
        // Predicated region
        $region69: #{tpu_custom_call.1} parent=67 // pred_check
          %p5073 = pneg %p234
        $region70: #{tpu_custom_call.1} parent=67 // pred_check_branch
          %5075 = sbr.rel (%p5073) target = $region72
        $region71: #{tpu_custom_call.1} parent=67 // pred_region
          %s5076 = smul.u32 8, %s27
          %p5077 = scmp.lt.s32.totalorder %s5076, 31
          %s5078 = scalar_select %p5077, %s5076, 31
          %s5079 = smul.addr %s5078, 8
          %s5080 = scalar_lea.vmem %s7, %s5079
        $region72: #{tpu_custom_call.1} parent=67 // pred_fallthru
          _
      $region68: #{tpu_custom_call.1} parent=5 // pred_fallthru
        _
    $region6: #{tpu_custom_call.1} parent=1 // loop_footer
      %s20 = sadd.s32 1, %s16
    $region7: #{tpu_custom_call.1} parent=1 // loop_footer_branch
      %15 = sbr.rel target = $region3
    $region8: #{tpu_custom_call.1} parent=1 // loop_exit
      _
    %5081 = vsyncpa [#allocation4], 1
    %s5082 = scalar_lea.sflag [#allocation4], 1
    %5083 = vsyncpa %s5082, 1

</llo_original>
